<compile_context>
chip_gen: v7x
topology: tpu7x:2x2x1
jax: 0.10.0
libtpu: 0.0.40
codegen_flags: <defaults>
</compile_context>

<pallas_src>
import functools
import math

import jax
import jax.numpy as jnp
from jax import lax
from jax.experimental import pallas as pl
from jax.experimental.pallas import tpu as pltpu


def _ru(x, m):
    return (x + m - 1) // m * m


# ---------------------------------------------------------------------------
# fused kernel: expand(1x1) -> depthwise(3x3) -> project(1x1) [+ residual]
# ---------------------------------------------------------------------------
def _inv_res_kernel(*refs, P, Hs, Ws, Ho, Wo, taps, has_expand, use_res):
    if has_expand:
        (x_ref, we_ref, be_ref, wd_ref, bd_ref, wp_ref, bp_ref,
         o_ref, pbuf) = refs
    else:
        (x_ref, wd_ref, bd_ref, wp_ref, bp_ref, o_ref, pbuf) = refs

    x2d = x_ref[0]                                    # (P*Hs*Ws, Cin_p) f32

    # ---- expand: 1x1 conv + bias + ReLU6 (MXU, bf16 in, f32 acc) -----------
    if has_expand:
        h = jnp.dot(x2d.astype(jnp.bfloat16), we_ref[...],
                    preferred_element_type=jnp.float32)
        h = jnp.clip(h + be_ref[...], 0.0, 6.0)       # (P*Hs*Ws, Hid_p)
    else:
        h = x2d                                       # hidden_dim == inp
    hid = h.shape[-1]

    # ---- depthwise 3x3 + bias + ReLU6 (VPU tap-accumulate, f32) ------------
    # pbuf is a zero-haloed VMEM buffer; every tap below is a unit-stride
    # static slice (stride-2 was already turned into even/odd phases by the
    # wrapper, so no strided/sublane-gather reads are needed here).
    pbuf[...] = jnp.zeros_like(pbuf)
    h4 = h.reshape(P, Hs, Ws, hid)
    for p in range(P):
        pbuf[p, 1:Hs + 1, 1:Ws + 1, :] = h4[p]
    wd = wd_ref[...]                                  # (9, 1, Hid_p)
    acc = jnp.zeros((Ho, Wo, hid), jnp.float32)
    for t, (p, a, b) in enumerate(taps):
        acc = acc + pbuf[p, a:a + Ho, b:b + Wo, :] * wd[t]
    acc = jnp.clip(acc + bd_ref[...], 0.0, 6.0)

    # ---- project: 1x1 conv + bias (no activation), fused residual add ------
    y = jnp.dot(acc.reshape(Ho * Wo, hid).astype(jnp.bfloat16), wp_ref[...],
                preferred_element_type=jnp.float32)
    y = y + bp_ref[...]
    if use_res:                    # stride == 1 and inp == oup => shapes match
        y = y + x2d
    o_ref[0] = y.astype(o_ref.dtype)


# ---------------------------------------------------------------------------
# wrapper: phase decomposition (for stride 2), BlockSpecs, pallas_call
# ---------------------------------------------------------------------------
def inverted_residual_forward(x, packed, meta):
    """Fused InvertedResidual forward.

    x:       (N, H, W, cin_p) NHWC float32, channels zero-padded to cin_p.
    returns: (N, Ho, Wo, oup_p) NHWC float32, channels zero-padded to oup_p
             (padded lanes are exactly zero, so blocks chain without re-padding).
    """
    N, H, W, cin_p = x.shape
    assert cin_p == meta["cin_p"]
    stride = meta["stride"]
    has_expand = meta["expand_ratio"] != 1
    use_res = meta["use_res"]
    hid_p, oup_p = meta["hid_p"], meta["oup_p"]

    if stride == 1:
        P, Hs, Ws = 1, H, W
        Ho, Wo = H, W
        xph = x[:, None]                              # (N, 1, H, W, cin_p)
        taps = tuple((0, di, dj) for di in range(3) for dj in range(3))
    else:
        Ho, Wo = (H - 1) // 2 + 1, (W - 1) // 2 + 1
        P, Hs, Ws = 4, Ho, Wo
        # even/odd phase split of the (cheap, pre-expansion) input so the
        # in-kernel stride-2 depthwise only needs unit-stride slices.
        phases = []
        for rp in (0, 1):
            for cp in (0, 1):
                ph = x[:, rp::2, cp::2, :]
                ph = jnp.pad(ph, ((0, 0), (0, Ho - ph.shape[1]),
                                  (0, Wo - ph.shape[2]), (0, 0)))
                phases.append(ph)
        xph = jnp.stack(phases, axis=1)               # (N, 4, Ho, Wo, cin_p)
        taps = tuple((2 * (0 if di == 1 else 1) + (0 if dj == 1 else 1),
                      int(di >= 1), int(dj >= 1))
                     for di in range(3) for dj in range(3))

    m_in, m_out = P * Hs * Ws, Ho * Wo
    xflat = xph.reshape(N, m_in, cin_p)

    kernel = functools.partial(
        _inv_res_kernel, P=P, Hs=Hs, Ws=Ws, Ho=Ho, Wo=Wo, taps=taps,
        has_expand=has_expand, use_res=use_res)

    def const_spec(a):
        nd = a.ndim
        return pl.BlockSpec(a.shape, lambda n, nd=nd: (0,) * nd)

    inputs = [xflat]
    in_specs = [pl.BlockSpec((1, m_in, cin_p), lambda n: (n, 0, 0))]
    if has_expand:
        inputs += [packed["we"], packed["be"]]
    inputs += [packed["wd"], packed["bd"], packed["wp"], packed["bp"]]
    in_specs += [const_spec(a) for a in inputs[1:]]

    flops = 2 * N * m_out * 9 * hid_p + 2 * N * m_out * hid_p * oup_p
    if has_expand:
        flops += 2 * N * m_in * cin_p * hid_p
    bytes_accessed = sum(a.size * a.dtype.itemsize for a in inputs)
    bytes_accessed += N * m_out * oup_p * 4

    y = pl.pallas_call(
        kernel,
        grid=(N,),
        in_specs=in_specs,
        out_specs=pl.BlockSpec((1, m_out, oup_p), lambda n: (n, 0, 0)),
        out_shape=jax.ShapeDtypeStruct((N, m_out, oup_p), jnp.float32),
        scratch_shapes=[pltpu.VMEM((P, Hs + 2, Ws + 2, hid_p), jnp.float32)],
        compiler_params=pltpu.CompilerParams(
            dimension_semantics=("parallel",),
            vmem_limit_bytes=64 * 1024 * 1024),
        cost_estimate=pl.CostEstimate(flops=int(flops), transcendentals=0,
                                      bytes_accessed=int(bytes_accessed)),
    )(*inputs)
    # TODO(synk): for very large feature maps, add a second grid axis over
    # output-row tiles with manual halo DMA instead of whole-image blocks.
    return y.reshape(N, Ho, Wo, oup_p)


# ---------------------------------------------------------------------------
# parameters: PyTorch-layout raw tensors + pre-packed kernel operands
# ---------------------------------------------------------------------------
def init_inverted_residual(key, inp, oup, stride, expand_ratio):
    """Weights/biases matching PyTorch InvertedResidual with args.norm='none'
    (every conv has a bias, norm is Identity).  Weight repacking (transpose,
    pad to 128-lane multiples, bf16 cast for MXU operands) happens once here,
    never inside the forward pass."""
    assert stride in (1, 2)
    hidden = int(round(inp * expand_ratio))
    ks = jax.random.split(key, 6)

    def conv_w(k, cout, cin, ksz):
        fan_out = cout * ksz * ksz
        return jax.random.normal(k, (cout, cin, ksz, ksz),
                                 jnp.float32) * math.sqrt(2.0 / fan_out)

    raw = {}
    if expand_ratio != 1:
        raw["we"] = conv_w(ks[0], hidden, inp, 1)
        raw["be"] = 0.05 * jax.random.normal(ks[1], (hidden,), jnp.float32)
    raw["wd"] = conv_w(ks[2], hidden, 1, 3)
    raw["bd"] = 0.05 * jax.random.normal(ks[3], (hidden,), jnp.float32)
    raw["wp"] = conv_w(ks[4], oup, hidden, 1)
    raw["bp"] = 0.05 * jax.random.normal(ks[5], (oup,), jnp.float32)

    cin_p, hid_p, oup_p = _ru(inp, 128), _ru(hidden, 128), _ru(oup, 128)

    def pad2(a, r, c):
        return jnp.pad(a, ((0, r - a.shape[0]), (0, c - a.shape[1])))

    packed = {}
    if expand_ratio != 1:
        packed["we"] = pad2(raw["we"][:, :, 0, 0].T, cin_p, hid_p).astype(jnp.bfloat16)
        packed["be"] = pad2(raw["be"][None, :], 1, hid_p)
    wd = jnp.transpose(raw["wd"][:, 0], (1, 2, 0)).reshape(9, hidden)
    packed["wd"] = pad2(wd, 9, hid_p)[:, None, :]          # (9, 1, hid_p) f32 (VPU)
    packed["bd"] = pad2(raw["bd"][None, :], 1, hid_p)
    packed["wp"] = pad2(raw["wp"][:, :, 0, 0].T, hid_p, oup_p).astype(jnp.bfloat16)
    packed["bp"] = pad2(raw["bp"][None, :], 1, oup_p)

    meta = dict(inp=inp, oup=oup, stride=stride, expand_ratio=expand_ratio,
                hidden=hidden, cin_p=cin_p, hid_p=hid_p, oup_p=oup_p,
                use_res=(stride == 1 and inp == oup))
    return raw, packed, meta


# ---------------------------------------------------------------------------
# pure-JAX f32 reference (PyTorch InvertedResidual semantics, NHWC)
# ---------------------------------------------------------------------------
def inverted_residual_reference(x, raw, meta):
    stride, hidden = meta["stride"], meta["hidden"]
    h = x
    if meta["expand_ratio"] != 1:
        h = jnp.einsum("nhwc,oc->nhwo", x, raw["we"][:, :, 0, 0]) + raw["be"]
        h = jnp.clip(h, 0.0, 6.0)
    wd = jnp.transpose(raw["wd"][:, 0], (1, 2, 0))[:, :, None, :]  # (3,3,1,hid)
    h = lax.conv_general_dilated(
        h, wd, window_strides=(stride, stride), padding=((1, 1), (1, 1)),
        dimension_numbers=("NHWC", "HWIO", "NHWC"), feature_group_count=hidden)
    h = jnp.clip(h + raw["bd"], 0.0, 6.0)
    y = jnp.einsum("nhwc,oc->nhwo", h, raw["wp"][:, :, 0, 0]) + raw["bp"]
    if meta["use_res"]:
        y = y + x
    return y


# ---------------------------------------------------------------------------
if __name__ == "__main__":
    key = jax.random.PRNGKey(0)
    kx, kp = jax.random.split(key)

    N, H, W = 2, 16, 16
    configs = [
        dict(inp=32, oup=32, stride=1, expand_ratio=6),   # expand + residual add
        dict(inp=32, oup=64, stride=2, expand_ratio=6),   # expand + stride-2 dw
        dict(inp=32, oup=24, stride=1, expand_ratio=1),   # expand_ratio == 1 path
    ]

    ok = True
    for cfg, pk in zip(configs, jax.random.split(kp, len(configs))):
        raw, packed, meta = init_inverted_residual(pk, **cfg)
        x = jax.random.normal(kx, (N, H, W, cfg["inp"]), jnp.float32)
        # channel-pad once at the boundary; padded lanes stay zero end-to-end.
        xp = jnp.pad(x, ((0, 0), (0, 0), (0, 0), (0, meta["cin_p"] - cfg["inp"])))

        fwd = jax.jit(functools.partial(inverted_residual_forward, meta=meta))
        out_p = jax.block_until_ready(fwd(xp, packed))

        ref = inverted_residual_reference(x, raw, meta)
        out = out_p[..., :cfg["oup"]]
        finite = bool(jnp.all(jnp.isfinite(out_p)))
        pad_zero = (meta["oup_p"] == cfg["oup"]) or \
            float(jnp.max(jnp.abs(out_p[..., cfg["oup"]:]))) == 0.0
        err = float(jnp.max(jnp.abs(out - ref)))
        tol = 0.05 * (float(jnp.max(jnp.abs(ref))) + 1.0)   # bf16-MXU tolerance
        ok = ok and finite and pad_zero and (out.shape == ref.shape) and (err <= tol)

    if not ok:
        raise SystemExit("numerical check failed")
    print("KERNEL_OK")
</pallas_src>

<mosaic_0001>
module attributes {stable_mosaic.version = 11 : i64} {
  func.func @_inv_res_kernel(%arg0: i32, %arg1: memref<1x256x128xf32, #tpu.memory_space<vmem>>, %arg2: memref<128x256xbf16, #tpu.memory_space<vmem>>, %arg3: memref<1x256xf32, #tpu.memory_space<vmem>>, %arg4: memref<9x1x256xf32, #tpu.memory_space<vmem>>, %arg5: memref<1x256xf32, #tpu.memory_space<vmem>>, %arg6: memref<256x128xbf16, #tpu.memory_space<vmem>>, %arg7: memref<1x128xf32, #tpu.memory_space<vmem>>, %arg8: memref<1x256x128xf32, #tpu.memory_space<vmem>>, %arg9: memref<1x18x18x256xf32, #tpu.memory_space<vmem>>) attributes {dimension_semantics = [#tpu.dimension_semantics<parallel>], iteration_bounds = array<i64: 2>, scalar_prefetch = 0 : i64, scratch_operands = 1 : i64, tpu.core_type = #tpu.core_type<tc>, window_params = [{transform_indices = @transform_0, window_bounds = array<i64: 1, 256, 128>}, {pipeline_mode = #tpu.pipeline_mode<synchronous>, transform_indices = @transform_1, window_bounds = array<i64: 128, 256>}, {pipeline_mode = #tpu.pipeline_mode<synchronous>, transform_indices = @transform_2, window_bounds = array<i64: 1, 256>}, {pipeline_mode = #tpu.pipeline_mode<synchronous>, transform_indices = @transform_3, window_bounds = array<i64: 9, 1, 256>}, {pipeline_mode = #tpu.pipeline_mode<synchronous>, transform_indices = @transform_4, window_bounds = array<i64: 1, 256>}, {pipeline_mode = #tpu.pipeline_mode<synchronous>, transform_indices = @transform_5, window_bounds = array<i64: 256, 128>}, {pipeline_mode = #tpu.pipeline_mode<synchronous>, transform_indices = @transform_6, window_bounds = array<i64: 1, 128>}, {transform_indices = @transform_7, window_bounds = array<i64: 1, 256, 128>}]} {
    %c0 = arith.constant 0 : index
    %c0_0 = arith.constant 0 : index
    %c0_1 = arith.constant 0 : index
    %0 = vector.load %arg1[%c0, %c0_0, %c0_1] : memref<1x256x128xf32, #tpu.memory_space<vmem>>, vector<1x256x128xf32>
    %1 = vector.shape_cast %0 : vector<1x256x128xf32> to vector<256x128xf32>
    %2 = arith.truncf %1 : vector<256x128xf32> to vector<256x128xbf16>
    %c0_2 = arith.constant 0 : index
    %c0_3 = arith.constant 0 : index
    %3 = vector.load %arg2[%c0_2, %c0_3] : memref<128x256xbf16, #tpu.memory_space<vmem>>, vector<128x256xbf16>
    %cst = arith.constant dense<0.000000e+00> : vector<256x256xf32>
    %4 = tpu.matmul %2, %3, %cst {dimension_numbers = #tpu.dot_dimension_numbers<[1], [0], [0], [1], [0, 0, 1, 1], [], []>} : vector<256x128xbf16>, vector<128x256xbf16>, vector<256x256xf32> -> vector<256x256xf32>
    %c0_4 = arith.constant 0 : index
    %c0_5 = arith.constant 0 : index
    %5 = vector.load %arg3[%c0_4, %c0_5] : memref<1x256xf32, #tpu.memory_space<vmem>>, vector<1x256xf32>
    %6 = vector.broadcast %5 : vector<1x256xf32> to vector<256x256xf32>
    %7 = arith.addf %4, %6 : vector<256x256xf32>
    %cst_6 = arith.constant 0.000000e+00 : f32
    %cst_7 = arith.constant 6.000000e+00 : f32
    %8 = vector.broadcast %cst_6 : f32 to vector<256x256xf32>
    %9 = arith.maximumf %8, %7 : vector<256x256xf32>
    %10 = vector.broadcast %cst_7 : f32 to vector<256x256xf32>
    %11 = arith.minimumf %10, %9 : vector<256x256xf32>
    %cst_8 = arith.constant 0.000000e+00 : f32
    %12 = vector.broadcast %cst_8 : f32 to vector<1x18x18x256xf32>
    %c0_9 = arith.constant 0 : index
    %c0_10 = arith.constant 0 : index
    %c0_11 = arith.constant 0 : index
    %c0_12 = arith.constant 0 : index
    %13 = vector.load %arg9[%c0_9, %c0_10, %c0_11, %c0_12] : memref<1x18x18x256xf32, #tpu.memory_space<vmem>>, vector<1x18x18x256xf32>
    tpu.vector_store %arg9[%c0_9, %c0_10, %c0_11, %c0_12], %12 {strides = array<i32>} : memref<1x18x18x256xf32, #tpu.memory_space<vmem>>, vector<1x18x18x256xf32>,
    %14 = vector.shape_cast %11 : vector<256x256xf32> to vector<1x16x16x256xf32>
    %15 = vector.shape_cast %14 : vector<1x16x16x256xf32> to vector<16x16x256xf32>
    %c0_13 = arith.constant 0 : index
    %c1 = arith.constant 1 : index
    %c1_14 = arith.constant 1 : index
    %c0_15 = arith.constant 0 : index
    %16 = vector.load %arg9[%c0_13, %c1, %c1_14, %c0_15] : memref<1x18x18x256xf32, #tpu.memory_space<vmem>>, vector<1x16x16x256xf32>
    %17 = vector.shape_cast %16 : vector<1x16x16x256xf32> to vector<16x16x256xf32>
    %18 = vector.shape_cast %15 : vector<16x16x256xf32> to vector<1x16x16x256xf32>
    tpu.vector_store %arg9[%c0_13, %c1, %c1_14, %c0_15], %18 {strides = array<i32>} : memref<1x18x18x256xf32, #tpu.memory_space<vmem>>, vector<1x16x16x256xf32>,
    %c0_16 = arith.constant 0 : index
    %c0_17 = arith.constant 0 : index
    %c0_18 = arith.constant 0 : index
    %19 = vector.load %arg4[%c0_16, %c0_17, %c0_18] : memref<9x1x256xf32, #tpu.memory_space<vmem>>, vector<9x1x256xf32>
    %cst_19 = arith.constant 0.000000e+00 : f32
    %20 = vector.broadcast %cst_19 : f32 to vector<16x16x256xf32>
    %c0_20 = arith.constant 0 : index
    %c0_21 = arith.constant 0 : index
    %c0_22 = arith.constant 0 : index
    %c0_23 = arith.constant 0 : index
    %21 = vector.load %arg9[%c0_20, %c0_21, %c0_22, %c0_23] : memref<1x18x18x256xf32, #tpu.memory_space<vmem>>, vector<1x16x16x256xf32>
    %22 = vector.shape_cast %21 : vector<1x16x16x256xf32> to vector<16x16x256xf32>
    %23 = vector.extract_strided_slice %19 {offsets = [0, 0, 0], sizes = [1, 1, 256], strides = [1, 1, 1]} : vector<9x1x256xf32> to vector<1x1x256xf32>
    %24 = vector.shape_cast %23 : vector<1x1x256xf32> to vector<1x256xf32>
    %25 = vector.shape_cast %24 : vector<1x256xf32> to vector<1x1x256xf32>
    %26 = vector.broadcast %25 : vector<1x1x256xf32> to vector<16x16x256xf32>
    %27 = arith.mulf %22, %26 : vector<16x16x256xf32>
    %28 = arith.addf %20, %27 : vector<16x16x256xf32>
    %c0_24 = arith.constant 0 : index
    %c0_25 = arith.constant 0 : index
    %c1_26 = arith.constant 1 : index
    %c0_27 = arith.constant 0 : index
    %29 = vector.load %arg9[%c0_24, %c0_25, %c1_26, %c0_27] : memref<1x18x18x256xf32, #tpu.memory_space<vmem>>, vector<1x16x16x256xf32>
    %30 = vector.shape_cast %29 : vector<1x16x16x256xf32> to vector<16x16x256xf32>
    %31 = vector.extract_strided_slice %19 {offsets = [1, 0, 0], sizes = [1, 1, 256], strides = [1, 1, 1]} : vector<9x1x256xf32> to vector<1x1x256xf32>
    %32 = vector.shape_cast %31 : vector<1x1x256xf32> to vector<1x256xf32>
    %33 = vector.shape_cast %32 : vector<1x256xf32> to vector<1x1x256xf32>
    %34 = vector.broadcast %33 : vector<1x1x256xf32> to vector<16x16x256xf32>
    %35 = arith.mulf %30, %34 : vector<16x16x256xf32>
    %36 = arith.addf %28, %35 : vector<16x16x256xf32>
    %c0_28 = arith.constant 0 : index
    %c0_29 = arith.constant 0 : index
    %c2 = arith.constant 2 : index
    %c0_30 = arith.constant 0 : index
    %37 = vector.load %arg9[%c0_28, %c0_29, %c2, %c0_30] : memref<1x18x18x256xf32, #tpu.memory_space<vmem>>, vector<1x16x16x256xf32>
    %38 = vector.shape_cast %37 : vector<1x16x16x256xf32> to vector<16x16x256xf32>
    %39 = vector.extract_strided_slice %19 {offsets = [2, 0, 0], sizes = [1, 1, 256], strides = [1, 1, 1]} : vector<9x1x256xf32> to vector<1x1x256xf32>
    %40 = vector.shape_cast %39 : vector<1x1x256xf32> to vector<1x256xf32>
    %41 = vector.shape_cast %40 : vector<1x256xf32> to vector<1x1x256xf32>
    %42 = vector.broadcast %41 : vector<1x1x256xf32> to vector<16x16x256xf32>
    %43 = arith.mulf %38, %42 : vector<16x16x256xf32>
    %44 = arith.addf %36, %43 : vector<16x16x256xf32>
    %c0_31 = arith.constant 0 : index
    %c1_32 = arith.constant 1 : index
    %c0_33 = arith.constant 0 : index
    %c0_34 = arith.constant 0 : index
    %45 = vector.load %arg9[%c0_31, %c1_32, %c0_33, %c0_34] : memref<1x18x18x256xf32, #tpu.memory_space<vmem>>, vector<1x16x16x256xf32>
    %46 = vector.shape_cast %45 : vector<1x16x16x256xf32> to vector<16x16x256xf32>
    %47 = vector.extract_strided_slice %19 {offsets = [3, 0, 0], sizes = [1, 1, 256], strides = [1, 1, 1]} : vector<9x1x256xf32> to vector<1x1x256xf32>
    %48 = vector.shape_cast %47 : vector<1x1x256xf32> to vector<1x256xf32>
    %49 = vector.shape_cast %48 : vector<1x256xf32> to vector<1x1x256xf32>
    %50 = vector.broadcast %49 : vector<1x1x256xf32> to vector<16x16x256xf32>
    %51 = arith.mulf %46, %50 : vector<16x16x256xf32>
    %52 = arith.addf %44, %51 : vector<16x16x256xf32>
    %c0_35 = arith.constant 0 : index
    %c1_36 = arith.constant 1 : index
    %c1_37 = arith.constant 1 : index
    %c0_38 = arith.constant 0 : index
    %53 = vector.load %arg9[%c0_35, %c1_36, %c1_37, %c0_38] : memref<1x18x18x256xf32, #tpu.memory_space<vmem>>, vector<1x16x16x256xf32>
    %54 = vector.shape_cast %53 : vector<1x16x16x256xf32> to vector<16x16x256xf32>
    %55 = vector.extract_strided_slice %19 {offsets = [4, 0, 0], sizes = [1, 1, 256], strides = [1, 1, 1]} : vector<9x1x256xf32> to vector<1x1x256xf32>
    %56 = vector.shape_cast %55 : vector<1x1x256xf32> to vector<1x256xf32>
    %57 = vector.shape_cast %56 : vector<1x256xf32> to vector<1x1x256xf32>
    %58 = vector.broadcast %57 : vector<1x1x256xf32> to vector<16x16x256xf32>
    %59 = arith.mulf %54, %58 : vector<16x16x256xf32>
    %60 = arith.addf %52, %59 : vector<16x16x256xf32>
    %c0_39 = arith.constant 0 : index
    %c1_40 = arith.constant 1 : index
    %c2_41 = arith.constant 2 : index
    %c0_42 = arith.constant 0 : index
    %61 = vector.load %arg9[%c0_39, %c1_40, %c2_41, %c0_42] : memref<1x18x18x256xf32, #tpu.memory_space<vmem>>, vector<1x16x16x256xf32>
    %62 = vector.shape_cast %61 : vector<1x16x16x256xf32> to vector<16x16x256xf32>
    %63 = vector.extract_strided_slice %19 {offsets = [5, 0, 0], sizes = [1, 1, 256], strides = [1, 1, 1]} : vector<9x1x256xf32> to vector<1x1x256xf32>
    %64 = vector.shape_cast %63 : vector<1x1x256xf32> to vector<1x256xf32>
    %65 = vector.shape_cast %64 : vector<1x256xf32> to vector<1x1x256xf32>
    %66 = vector.broadcast %65 : vector<1x1x256xf32> to vector<16x16x256xf32>
    %67 = arith.mulf %62, %66 : vector<16x16x256xf32>
    %68 = arith.addf %60, %67 : vector<16x16x256xf32>
    %c0_43 = arith.constant 0 : index
    %c2_44 = arith.constant 2 : index
    %c0_45 = arith.constant 0 : index
    %c0_46 = arith.constant 0 : index
    %69 = vector.load %arg9[%c0_43, %c2_44, %c0_45, %c0_46] : memref<1x18x18x256xf32, #tpu.memory_space<vmem>>, vector<1x16x16x256xf32>
    %70 = vector.shape_cast %69 : vector<1x16x16x256xf32> to vector<16x16x256xf32>
    %71 = vector.extract_strided_slice %19 {offsets = [6, 0, 0], sizes = [1, 1, 256], strides = [1, 1, 1]} : vector<9x1x256xf32> to vector<1x1x256xf32>
    %72 = vector.shape_cast %71 : vector<1x1x256xf32> to vector<1x256xf32>
    %73 = vector.shape_cast %72 : vector<1x256xf32> to vector<1x1x256xf32>
    %74 = vector.broadcast %73 : vector<1x1x256xf32> to vector<16x16x256xf32>
    %75 = arith.mulf %70, %74 : vector<16x16x256xf32>
    %76 = arith.addf %68, %75 : vector<16x16x256xf32>
    %c0_47 = arith.constant 0 : index
    %c2_48 = arith.constant 2 : index
    %c1_49 = arith.constant 1 : index
    %c0_50 = arith.constant 0 : index
    %77 = vector.load %arg9[%c0_47, %c2_48, %c1_49, %c0_50] : memref<1x18x18x256xf32, #tpu.memory_space<vmem>>, vector<1x16x16x256xf32>
    %78 = vector.shape_cast %77 : vector<1x16x16x256xf32> to vector<16x16x256xf32>
    %79 = vector.extract_strided_slice %19 {offsets = [7, 0, 0], sizes = [1, 1, 256], strides = [1, 1, 1]} : vector<9x1x256xf32> to vector<1x1x256xf32>
    %80 = vector.shape_cast %79 : vector<1x1x256xf32> to vector<1x256xf32>
    %81 = vector.shape_cast %80 : vector<1x256xf32> to vector<1x1x256xf32>
    %82 = vector.broadcast %81 : vector<1x1x256xf32> to vector<16x16x256xf32>
    %83 = arith.mulf %78, %82 : vector<16x16x256xf32>
    %84 = arith.addf %76, %83 : vector<16x16x256xf32>
    %c0_51 = arith.constant 0 : index
    %c2_52 = arith.constant 2 : index
    %c2_53 = arith.constant 2 : index
    %c0_54 = arith.constant 0 : index
    %85 = vector.load %arg9[%c0_51, %c2_52, %c2_53, %c0_54] : memref<1x18x18x256xf32, #tpu.memory_space<vmem>>, vector<1x16x16x256xf32>
    %86 = vector.shape_cast %85 : vector<1x16x16x256xf32> to vector<16x16x256xf32>
    %87 = vector.extract_strided_slice %19 {offsets = [8, 0, 0], sizes = [1, 1, 256], strides = [1, 1, 1]} : vector<9x1x256xf32> to vector<1x1x256xf32>
    %88 = vector.shape_cast %87 : vector<1x1x256xf32> to vector<1x256xf32>
    %89 = vector.shape_cast %88 : vector<1x256xf32> to vector<1x1x256xf32>
    %90 = vector.broadcast %89 : vector<1x1x256xf32> to vector<16x16x256xf32>
    %91 = arith.mulf %86, %90 : vector<16x16x256xf32>
    %92 = arith.addf %84, %91 : vector<16x16x256xf32>
    %c0_55 = arith.constant 0 : index
    %c0_56 = arith.constant 0 : index
    %93 = vector.load %arg5[%c0_55, %c0_56] : memref<1x256xf32, #tpu.memory_space<vmem>>, vector<1x256xf32>
    %94 = vector.shape_cast %93 : vector<1x256xf32> to vector<1x1x256xf32>
    %95 = vector.broadcast %94 : vector<1x1x256xf32> to vector<16x16x256xf32>
    %96 = arith.addf %92, %95 : vector<16x16x256xf32>
    %cst_57 = arith.constant 0.000000e+00 : f32
    %cst_58 = arith.constant 6.000000e+00 : f32
    %97 = vector.broadcast %cst_57 : f32 to vector<16x16x256xf32>
    %98 = arith.maximumf %97, %96 : vector<16x16x256xf32>
    %99 = vector.broadcast %cst_58 : f32 to vector<16x16x256xf32>
    %100 = arith.minimumf %99, %98 : vector<16x16x256xf32>
    %101 = vector.shape_cast %100 : vector<16x16x256xf32> to vector<256x256xf32>
    %102 = arith.truncf %101 : vector<256x256xf32> to vector<256x256xbf16>
    %c0_59 = arith.constant 0 : index
    %c0_60 = arith.constant 0 : index
    %103 = vector.load %arg6[%c0_59, %c0_60] : memref<256x128xbf16, #tpu.memory_space<vmem>>, vector<256x128xbf16>
    %cst_61 = arith.constant dense<0.000000e+00> : vector<256x128xf32>
    %104 = tpu.matmul %102, %103, %cst_61 {dimension_numbers = #tpu.dot_dimension_numbers<[1], [0], [0], [1], [0, 0, 1, 1], [], []>} : vector<256x256xbf16>, vector<256x128xbf16>, vector<256x128xf32> -> vector<256x128xf32>
    %c0_62 = arith.constant 0 : index
    %c0_63 = arith.constant 0 : index
    %105 = vector.load %arg7[%c0_62, %c0_63] : memref<1x128xf32, #tpu.memory_space<vmem>>, vector<1x128xf32>
    %106 = vector.broadcast %105 : vector<1x128xf32> to vector<256x128xf32>
    %107 = arith.addf %104, %106 : vector<256x128xf32>
    %108 = arith.addf %107, %1 : vector<256x128xf32>
    %c0_64 = arith.constant 0 : index
    %c0_65 = arith.constant 0 : index
    %c0_66 = arith.constant 0 : index
    %109 = vector.load %arg8[%c0_64, %c0_65, %c0_66] : memref<1x256x128xf32, #tpu.memory_space<vmem>>, vector<1x256x128xf32>
    %110 = vector.shape_cast %109 : vector<1x256x128xf32> to vector<256x128xf32>
    %111 = vector.shape_cast %108 : vector<256x128xf32> to vector<1x256x128xf32>
    tpu.vector_store %arg8[%c0_64, %c0_65, %c0_66], %111 {strides = array<i32>} : memref<1x256x128xf32, #tpu.memory_space<vmem>>, vector<1x256x128xf32>,
    return
  }
  func.func @transform_0(%arg0: i32) -> (i32, i32, i32) {
    %c0_i32 = arith.constant 0 : i32
    %c0_i32_0 = arith.constant 0 : i32
    %c0_i32_1 = arith.constant 0 : i32
    return %arg0, %c0_i32, %c0_i32_0 : i32, i32, i32
  }
  func.func @transform_1(%arg0: i32) -> (i32, i32) {
    %c0_i32 = arith.constant 0 : i32
    %c0_i32_0 = arith.constant 0 : i32
    %c0_i32_1 = arith.constant 0 : i32
    return %c0_i32, %c0_i32_0 : i32, i32
  }
  func.func @transform_2(%arg0: i32) -> (i32, i32) {
    %c0_i32 = arith.constant 0 : i32
    %c0_i32_0 = arith.constant 0 : i32
    %c0_i32_1 = arith.constant 0 : i32
    return %c0_i32, %c0_i32_0 : i32, i32
  }
  func.func @transform_3(%arg0: i32) -> (i32, i32, i32) {
    %c0_i32 = arith.constant 0 : i32
    %c0_i32_0 = arith.constant 0 : i32
    %c0_i32_1 = arith.constant 0 : i32
    %c0_i32_2 = arith.constant 0 : i32
    return %c0_i32, %c0_i32_0, %c0_i32_1 : i32, i32, i32
  }
  func.func @transform_4(%arg0: i32) -> (i32, i32) {
    %c0_i32 = arith.constant 0 : i32
    %c0_i32_0 = arith.constant 0 : i32
    %c0_i32_1 = arith.constant 0 : i32
    return %c0_i32, %c0_i32_0 : i32, i32
  }
  func.func @transform_5(%arg0: i32) -> (i32, i32) {
    %c0_i32 = arith.constant 0 : i32
    %c0_i32_0 = arith.constant 0 : i32
    %c0_i32_1 = arith.constant 0 : i32
    return %c0_i32, %c0_i32_0 : i32, i32
  }
  func.func @transform_6(%arg0: i32) -> (i32, i32) {
    %c0_i32 = arith.constant 0 : i32
    %c0_i32_0 = arith.constant 0 : i32
    %c0_i32_1 = arith.constant 0 : i32
    return %c0_i32, %c0_i32_0 : i32, i32
  }
  func.func @transform_7(%arg0: i32) -> (i32, i32, i32) {
    %c0_i32 = arith.constant 0 : i32
    %c0_i32_0 = arith.constant 0 : i32
    %c0_i32_1 = arith.constant 0 : i32
    return %arg0, %c0_i32, %c0_i32_0 : i32, i32, i32
  }
}

</mosaic_0001>

<llo_original>
// kernel: inverted_residual_forward.1
$region0: #{inverted_residual_forward.1}
  #allocation0 [shape = 'u32[]', space=smem, size = 0x4, offset = 0x4, fixed_abs, tag = 'smem constant byte address 0x4 - core index']
  #allocation1 [shape = 'u32[144,128]{1,0:T(1,128)}', space=vmem, size = 0x12000, scoped, tag = 'internal scratch']
  #allocation2 [shape = 'f32[1,18,18,256]{3,2,1,0:T(8,128)}', space=vmem, size = 0x6c000, scoped, tag = 'scratch operand']
  %s0 = inlined_call_operand.hbm [shape: f32[2,256,128], index: 0, kind: input, shape index: {}]
  %s1 = inlined_call_operand.hbm [shape: bf16[128,256], index: 1, kind: input, shape index: {}]
  %s2 = inlined_call_operand.hbm [shape: f32[1,256], index: 2, kind: input, shape index: {}]
  %s3 = inlined_call_operand.hbm [shape: f32[9,1,256], index: 3, kind: input, shape index: {}]
  %s4 = inlined_call_operand.hbm [shape: f32[1,256], index: 4, kind: input, shape index: {}]
  %s5 = inlined_call_operand.hbm [shape: bf16[256,128], index: 5, kind: input, shape index: {}]
  %s6 = inlined_call_operand.hbm [shape: f32[1,128], index: 6, kind: input, shape index: {}]
  %s7 = inlined_call_operand.hbm [shape: f32[2,256,128], index: 7, kind: output, shape index: {}]
  %s8 = sld [smem:[#allocation0]]
  $region89: #{inverted_residual_forward.1} parent=0
    _
  %s10 = ssub.s32 1, %s8
  %s11 = scalar_select 0, %s10, %s8
  $region1: #{inverted_residual_forward.1} parent=0
    #allocation3 [shape = 'u8[262144]{0}', space=vmem, size = 0x40000, scoped, tag = 'input window, operand 0']
    #allocation4 [shape = 's32[2]{0}', space=sflag, size = 0x8, scoped, tag = 'scoped memory for inverted_residual_forward.1']
    #allocation5 [shape = 's32[2]{0}', space=sflag, size = 0x8, scoped, tag = 'scoped memory for inverted_residual_forward.1']
    #allocation6 [shape = 'u8[65536]{0}', space=vmem, size = 0x10000, scoped, tag = 'input window, operand 1, single buffered']
    #allocation7 [shape = 's32[1]{0}', space=sflag, size = 0x4, scoped, tag = 'scoped memory for inverted_residual_forward.1']
    #allocation8 [shape = 'u8[1024]{0}', space=vmem, size = 0x400, scoped, tag = 'input window, operand 2, single buffered']
    #allocation9 [shape = 'u8[9216]{0}', space=vmem, size = 0x2400, scoped, tag = 'input window, operand 3, single buffered']
    #allocation10 [shape = 's32[1]{0}', space=sflag, size = 0x4, scoped, tag = 'scoped memory for inverted_residual_forward.1']
    #allocation11 [shape = 'u8[1024]{0}', space=vmem, size = 0x400, scoped, tag = 'input window, operand 4, single buffered']
    #allocation12 [shape = 'u8[65536]{0}', space=vmem, size = 0x10000, scoped, tag = 'input window, operand 5, single buffered']
    #allocation13 [shape = 's32[1]{0}', space=sflag, size = 0x4, scoped, tag = 'scoped memory for inverted_residual_forward.1']
    #allocation14 [shape = 'u8[512]{0}', space=vmem, size = 0x400, scoped, tag = 'input window, operand 6, single buffered']
    #allocation15 [shape = 'u8[262144]{0}', space=vmem, size = 0x40000, scoped, tag = 'output window, operand 0']
    %12 = vsyncpa [#allocation4], 0
    %s13 = scalar_lea.sflag [#allocation4], 1
    %14 = vsyncpa %s13, 0
    %15 = vsyncpa [#allocation7], 0
    %16 = vsyncpa [#allocation10], 0
    %17 = vsyncpa [#allocation13], 0
    %18 = vsyncpa [#allocation5], 0
    %s19 = scalar_lea.sflag [#allocation5], 1
    %20 = vsyncpa %s19, 0
    loop: start=0, step=1, limit=4
    $region2: #{inverted_residual_forward.1} parent=1 // loop_pre_header
      _
    $region3: #{inverted_residual_forward.1} parent=1 // loop_header
      %s22 = sphi 0, %s26
      %p23 = scmp.ge.s32.totalorder %s22, 4
      %s32 = sphi 0, %s34
      %s35 = sphi 0, %s32
      %s36 = sphi 0, %s35
      %s52 = sphi 0, %s36
      %s56 = sphi 0, %s56
      %s58 = sphi 0, %s56
      %s59 = sphi 0, %s58
      %s73 = sphi 0, %s59
      %s77 = sphi 0, %s77
      %s79 = sphi 0, %s77
      %s80 = sphi 0, %s79
      %s94 = sphi 0, %s80
      %s98 = sphi 0, %s98
      %s100 = sphi 0, %s98
      %s101 = sphi 0, %s100
      %s115 = sphi 0, %s101
      %s119 = sphi 0, %s119
      %s121 = sphi 0, %s119
      %s122 = sphi 0, %s121
      %s136 = sphi 0, %s122
      %s140 = sphi 0, %s140
      %s142 = sphi 0, %s140
      %s143 = sphi 0, %s142
      %s157 = sphi 0, %s143
      %s161 = sphi 0, %s161
      %s163 = sphi 0, %s161
      %s164 = sphi 0, %s163
      %s178 = sphi 0, %s164
      %s184 = sphi 0, %s186
      %s187 = sphi 0, %s184
      %s188 = sphi 0, %s187
      %s204 = sphi 0, %s188
    $region4: #{inverted_residual_forward.1} parent=1 // loop_header_branch
      %25 = sbr.rel (%p23) target = $region8
    $region5: #{inverted_residual_forward.1} parent=1 // loop_body
      %s27 = ssub.s32 %s22, 1
      %s28 = ssub.s32 %s22, 2
      %s29 = sadd.s32 %s22, 1
      %s30 = ssub.s32 %s22, %s29
      %p31 = scmp.eq.s32.totalorder %s30, 0
      %s33 = sadd.s32 %s32, 1
      %s34 = scalar_select %p31, %s32, %s33
      %p37 = pneg %p31
      %p38 = scmp.eq.s32.totalorder %s22, 1
      %p39 = por %p37, %p38
      %p40 = scmp.ne.s32.totalorder %s32, %s35
      %p41 = scmp.eq.s32.totalorder %s22, 0
      %p42 = por %p40, %p41
      %p43 = scmp.ne.s32.totalorder %s32, %s35
      %p44 = scmp.eq.s32.totalorder %s27, 1
      %p45 = por %p43, %p44
      %p46 = scmp.ne.s32.totalorder %s35, %s36
      %p47 = scmp.eq.s32.totalorder %s27, 0
      %p48 = por %p46, %p47
      %p49 = scmp.ne.s32.totalorder %s35, %s36
      %p50 = scmp.eq.s32.totalorder %s28, 1
      %p51 = por %p49, %p50
      %p53 = scmp.ne.s32.totalorder %s36, %s52
      %p54 = scmp.eq.s32.totalorder %s28, 0
      %p55 = por %p53, %p54
      %s57 = sadd.s32 %s56, 1
      %p60 = scmp.eq.s32.totalorder %s22, 1
      %p61 = scmp.ne.s32.totalorder %s56, %s58
      %p62 = scmp.eq.s32.totalorder %s22, 0
      %p63 = por %p61, %p62
      %p64 = scmp.ne.s32.totalorder %s56, %s58
      %p65 = scmp.eq.s32.totalorder %s27, 1
      %p66 = por %p64, %p65
      %p67 = scmp.ne.s32.totalorder %s58, %s59
      %p68 = scmp.eq.s32.totalorder %s27, 0
      %p69 = por %p67, %p68
      %p70 = scmp.ne.s32.totalorder %s58, %s59
      %p71 = scmp.eq.s32.totalorder %s28, 1
      %p72 = por %p70, %p71
      %p74 = scmp.ne.s32.totalorder %s59, %s73
      %p75 = scmp.eq.s32.totalorder %s28, 0
      %p76 = por %p74, %p75
      %s78 = sadd.s32 %s77, 1
      %p81 = scmp.eq.s32.totalorder %s22, 1
      %p82 = scmp.ne.s32.totalorder %s77, %s79
      %p83 = scmp.eq.s32.totalorder %s22, 0
      %p84 = por %p82, %p83
      %p85 = scmp.ne.s32.totalorder %s77, %s79
      %p86 = scmp.eq.s32.totalorder %s27, 1
      %p87 = por %p85, %p86
      %p88 = scmp.ne.s32.totalorder %s79, %s80
      %p89 = scmp.eq.s32.totalorder %s27, 0
      %p90 = por %p88, %p89
      %p91 = scmp.ne.s32.totalorder %s79, %s80
      %p92 = scmp.eq.s32.totalorder %s28, 1
      %p93 = por %p91, %p92
      %p95 = scmp.ne.s32.totalorder %s80, %s94
      %p96 = scmp.eq.s32.totalorder %s28, 0
      %p97 = por %p95, %p96
      %s99 = sadd.s32 %s98, 1
      %p102 = scmp.eq.s32.totalorder %s22, 1
      %p103 = scmp.ne.s32.totalorder %s98, %s100
      %p104 = scmp.eq.s32.totalorder %s22, 0
      %p105 = por %p103, %p104
      %p106 = scmp.ne.s32.totalorder %s98, %s100
      %p107 = scmp.eq.s32.totalorder %s27, 1
      %p108 = por %p106, %p107
      %p109 = scmp.ne.s32.totalorder %s100, %s101
      %p110 = scmp.eq.s32.totalorder %s27, 0
      %p111 = por %p109, %p110
      %p112 = scmp.ne.s32.totalorder %s100, %s101
      %p113 = scmp.eq.s32.totalorder %s28, 1
      %p114 = por %p112, %p113
      %p116 = scmp.ne.s32.totalorder %s101, %s115
      %p117 = scmp.eq.s32.totalorder %s28, 0
      %p118 = por %p116, %p117
      %s120 = sadd.s32 %s119, 1
      %p123 = scmp.eq.s32.totalorder %s22, 1
      %p124 = scmp.ne.s32.totalorder %s119, %s121
      %p125 = scmp.eq.s32.totalorder %s22, 0
      %p126 = por %p124, %p125
      %p127 = scmp.ne.s32.totalorder %s119, %s121
      %p128 = scmp.eq.s32.totalorder %s27, 1
      %p129 = por %p127, %p128
      %p130 = scmp.ne.s32.totalorder %s121, %s122
      %p131 = scmp.eq.s32.totalorder %s27, 0
      %p132 = por %p130, %p131
      %p133 = scmp.ne.s32.totalorder %s121, %s122
      %p134 = scmp.eq.s32.totalorder %s28, 1
      %p135 = por %p133, %p134
      %p137 = scmp.ne.s32.totalorder %s122, %s136
      %p138 = scmp.eq.s32.totalorder %s28, 0
      %p139 = por %p137, %p138
      %s141 = sadd.s32 %s140, 1
      %p144 = scmp.eq.s32.totalorder %s22, 1
      %p145 = scmp.ne.s32.totalorder %s140, %s142
      %p146 = scmp.eq.s32.totalorder %s22, 0
      %p147 = por %p145, %p146
      %p148 = scmp.ne.s32.totalorder %s140, %s142
      %p149 = scmp.eq.s32.totalorder %s27, 1
      %p150 = por %p148, %p149
      %p151 = scmp.ne.s32.totalorder %s142, %s143
      %p152 = scmp.eq.s32.totalorder %s27, 0
      %p153 = por %p151, %p152
      %p154 = scmp.ne.s32.totalorder %s142, %s143
      %p155 = scmp.eq.s32.totalorder %s28, 1
      %p156 = por %p154, %p155
      %p158 = scmp.ne.s32.totalorder %s143, %s157
      %p159 = scmp.eq.s32.totalorder %s28, 0
      %p160 = por %p158, %p159
      %s162 = sadd.s32 %s161, 1
      %p165 = scmp.eq.s32.totalorder %s22, 1
      %p166 = scmp.ne.s32.totalorder %s161, %s163
      %p167 = scmp.eq.s32.totalorder %s22, 0
      %p168 = por %p166, %p167
      %p169 = scmp.ne.s32.totalorder %s161, %s163
      %p170 = scmp.eq.s32.totalorder %s27, 1
      %p171 = por %p169, %p170
      %p172 = scmp.ne.s32.totalorder %s163, %s164
      %p173 = scmp.eq.s32.totalorder %s27, 0
      %p174 = por %p172, %p173
      %p175 = scmp.ne.s32.totalorder %s163, %s164
      %p176 = scmp.eq.s32.totalorder %s28, 1
      %p177 = por %p175, %p176
      %p179 = scmp.ne.s32.totalorder %s164, %s178
      %p180 = scmp.eq.s32.totalorder %s28, 0
      %p181 = por %p179, %p180
      %s182 = ssub.s32 %s22, %s29
      %p183 = scmp.eq.s32.totalorder %s182, 0
      %s185 = sadd.s32 %s184, 1
      %s186 = scalar_select %p183, %s184, %s185
      %p189 = pneg %p183
      %p190 = scmp.eq.s32.totalorder %s22, 1
      %p191 = por %p189, %p190
      %p192 = scmp.ne.s32.totalorder %s184, %s187
      %p193 = scmp.eq.s32.totalorder %s22, 0
      %p194 = por %p192, %p193
      %p195 = scmp.ne.s32.totalorder %s184, %s187
      %p196 = scmp.eq.s32.totalorder %s27, 1
      %p197 = por %p195, %p196
      %p198 = scmp.ne.s32.totalorder %s187, %s188
      %p199 = scmp.eq.s32.totalorder %s27, 0
      %p200 = por %p198, %p199
      %p201 = scmp.ne.s32.totalorder %s187, %s188
      %p202 = scmp.eq.s32.totalorder %s28, 1
      %p203 = por %p201, %p202
      %p205 = scmp.ne.s32.totalorder %s188, %s204
      %p206 = scmp.eq.s32.totalorder %s28, 0
      %p207 = por %p205, %p206
      %p208 = scmp.le.s32.totalorder 1, %s22
      %p209 = scmp.lt.s32.totalorder %s22, 3
      %p210 = pnand %p208, %p209
      %p211 = pneg %p210
      // Predicated region
      $region9: #{inverted_residual_forward.1} parent=5 // pred_check
        _
      $region10: #{inverted_residual_forward.1} parent=5 // pred_check_branch
        %213 = sbr.rel (%p210) target = $region12
      $region11: #{inverted_residual_forward.1} parent=5 // pred_region
        %s214 = ssub.s32 %s22, 1
        // Predicated region
        $region13: #{inverted_residual_forward.1} parent=11 // pred_check
          %p215 = pneg %p69
        $region14: #{inverted_residual_forward.1} parent=11 // pred_check_branch
          %217 = sbr.rel (%p215) target = $region16
        $region15: #{inverted_residual_forward.1} parent=11 // pred_region
          %s219 = ssub.s32 2048, 2048
          %220 = vsyncadd [#allocation7], %s219
          %s221 = sshll.u32 [#allocation6], 4
          %s222 = int_to_ptr.vmem [resolvable:$true] %s221
          %227 = dma.hbm_to_vmem [thread:$0]  %s1, 2048, %s222, [#allocation7], 128, 128, 8
        $region16: #{inverted_residual_forward.1} parent=11 // pred_fallthru
          _
        // Predicated region
        $region17: #{inverted_residual_forward.1} parent=11 // pred_check
          %p228 = pneg %p90
        $region18: #{inverted_residual_forward.1} parent=11 // pred_check_branch
          %230 = sbr.rel (%p228) target = $region20
        $region19: #{inverted_residual_forward.1} parent=11 // pred_region
          %s232 = ssub.s32 32, 32
          %233 = vsyncadd [#allocation7], %s232
          %s235 = sshll.u32 [#allocation8], 4
          %s236 = int_to_ptr.vmem [resolvable:$true] %s235
          %238 = dma.hbm_to_vmem [thread:$0]  %s2, 32, %s236, [#allocation7]
        $region20: #{inverted_residual_forward.1} parent=11 // pred_fallthru
          _
        // Predicated region
        $region21: #{inverted_residual_forward.1} parent=11 // pred_check
          %p239 = pneg %p111
        $region22: #{inverted_residual_forward.1} parent=11 // pred_check_branch
          %241 = sbr.rel (%p239) target = $region24
        $region23: #{inverted_residual_forward.1} parent=11 // pred_region
          %s243 = ssub.s32 288, 288
          %244 = vsyncadd [#allocation10], %s243
          %s245 = sshll.u32 [#allocation9], 4
          %s246 = int_to_ptr.vmem [resolvable:$true] %s245
          %251 = dma.hbm_to_vmem [thread:$0]  %s3, 288, %s246, [#allocation10], 32, 32, 2
        $region24: #{inverted_residual_forward.1} parent=11 // pred_fallthru
          _
        // Predicated region
        $region25: #{inverted_residual_forward.1} parent=11 // pred_check
          %p252 = pneg %p132
        $region26: #{inverted_residual_forward.1} parent=11 // pred_check_branch
          %254 = sbr.rel (%p252) target = $region28
        $region27: #{inverted_residual_forward.1} parent=11 // pred_region
          %s256 = ssub.s32 32, 32
          %257 = vsyncadd [#allocation10], %s256
          %s259 = sshll.u32 [#allocation11], 4
          %s260 = int_to_ptr.vmem [resolvable:$true] %s259
          %262 = dma.hbm_to_vmem [thread:$0]  %s4, 32, %s260, [#allocation10]
        $region28: #{inverted_residual_forward.1} parent=11 // pred_fallthru
          _
        // Predicated region
        $region29: #{inverted_residual_forward.1} parent=11 // pred_check
          %p263 = pneg %p153
        $region30: #{inverted_residual_forward.1} parent=11 // pred_check_branch
          %265 = sbr.rel (%p263) target = $region32
        $region31: #{inverted_residual_forward.1} parent=11 // pred_region
          %s267 = ssub.s32 2048, 2048
          %268 = vsyncadd [#allocation13], %s267
          %s269 = sshll.u32 [#allocation12], 4
          %s270 = int_to_ptr.vmem [resolvable:$true] %s269
          %275 = dma.hbm_to_vmem [thread:$0]  %s5, 2048, %s270, [#allocation13], 64, 64, 4
        $region32: #{inverted_residual_forward.1} parent=11 // pred_fallthru
          _
        // Predicated region
        $region33: #{inverted_residual_forward.1} parent=11 // pred_check
          %p276 = pneg %p174
        $region34: #{inverted_residual_forward.1} parent=11 // pred_check_branch
          %278 = sbr.rel (%p276) target = $region36
        $region35: #{inverted_residual_forward.1} parent=11 // pred_region
          %s280 = ssub.s32 16, 16
          %281 = vsyncadd [#allocation13], %s280
          %s283 = sshll.u32 [#allocation14], 4
          %s284 = int_to_ptr.vmem [resolvable:$true] %s283
          %286 = dma.hbm_to_vmem [thread:$0]  %s6, 16, %s284, [#allocation13]
        $region36: #{inverted_residual_forward.1} parent=11 // pred_fallthru
          _
      $region12: #{inverted_residual_forward.1} parent=5 // pred_fallthru
        _
      %p287 = scmp.lt.s32.totalorder %s22, 2
      // Predicated region
      $region37: #{inverted_residual_forward.1} parent=5 // pred_check
        %p288 = pneg %p287
      $region38: #{inverted_residual_forward.1} parent=5 // pred_check_branch
        %290 = sbr.rel (%p288) target = $region40
      $region39: #{inverted_residual_forward.1} parent=5 // pred_region
        // Predicated region
        $region41: #{inverted_residual_forward.1} parent=39 // pred_check
          %p291 = pneg %p42
        $region42: #{inverted_residual_forward.1} parent=39 // pred_check_branch
          %293 = sbr.rel (%p291) target = $region44
        $region43: #{inverted_residual_forward.1} parent=39 // pred_region
          %s294 = sand.u32 %s32, 1
          %s295 = scalar_lea.sflag [#allocation4], %s294
          %s296 = sand.u32 %s32, 1
          %s297 = smul.addr %s296, 256
          %s298 = scalar_lea.vmem [#allocation3], %s297
          %s300 = ssub.s32 4096, 4096
          %301 = vsyncadd %s295, %s300
          %s302 = smul.addr %s22, 32
          %s303 = smul.addr %s302, 128
          %s304 = scalar_lea.hbm %s0, %s303
          %s305 = sshll.u32 %s298, 4
          %s306 = int_to_ptr.vmem [resolvable:$true] %s305
          %311 = dma.hbm_to_vmem [thread:$0]  %s304, 4096, %s306, %s295, 128, 128, 8
        $region44: #{inverted_residual_forward.1} parent=39 // pred_fallthru
          _
      $region40: #{inverted_residual_forward.1} parent=5 // pred_fallthru
        _
      %p312 = scmp.le.s32.totalorder 1, %s22
      %p313 = scmp.lt.s32.totalorder %s22, 3
      %p314 = pnand %p312, %p313
      %p315 = pneg %p314
      // Predicated region
      $region45: #{inverted_residual_forward.1} parent=5 // pred_check
        _
      $region46: #{inverted_residual_forward.1} parent=5 // pred_check_branch
        %317 = sbr.rel (%p314) target = $region48
      $region47: #{inverted_residual_forward.1} parent=5 // pred_region
        %s318 = ssub.s32 %s22, 1
        %s319 = sand.u32 %s35, 1
        %s320 = scalar_lea.sflag [#allocation4], %s319
        %s321 = sand.u32 %s35, 1
        %s322 = smul.addr %s321, 256
        %s323 = scalar_lea.vmem [#allocation3], %s322
        // Predicated region
        $region49: #{inverted_residual_forward.1} parent=47 // pred_check
          %p324 = pneg %p48
        $region50: #{inverted_residual_forward.1} parent=47 // pred_check_branch
          %326 = sbr.rel (%p324) target = $region52
        $region51: #{inverted_residual_forward.1} parent=47 // pred_region
          %327 = dma.done %s320, 4096
        $region52: #{inverted_residual_forward.1} parent=47 // pred_fallthru
          _
        // Predicated region
        $region53: #{inverted_residual_forward.1} parent=47 // pred_check
          %p328 = pneg %p69
        $region54: #{inverted_residual_forward.1} parent=47 // pred_check_branch
          %330 = sbr.rel (%p328) target = $region56
        $region55: #{inverted_residual_forward.1} parent=47 // pred_region
          %331 = dma.done [#allocation7], 2048
        $region56: #{inverted_residual_forward.1} parent=47 // pred_fallthru
          _
        // Predicated region
        $region57: #{inverted_residual_forward.1} parent=47 // pred_check
          %p332 = pneg %p90
        $region58: #{inverted_residual_forward.1} parent=47 // pred_check_branch
          %334 = sbr.rel (%p332) target = $region60
        $region59: #{inverted_residual_forward.1} parent=47 // pred_region
          %335 = dma.done [#allocation7], 32
        $region60: #{inverted_residual_forward.1} parent=47 // pred_fallthru
          _
        // Predicated region
        $region61: #{inverted_residual_forward.1} parent=47 // pred_check
          %p336 = pneg %p111
        $region62: #{inverted_residual_forward.1} parent=47 // pred_check_branch
          %338 = sbr.rel (%p336) target = $region64
        $region63: #{inverted_residual_forward.1} parent=47 // pred_region
          %339 = dma.done [#allocation10], 288
        $region64: #{inverted_residual_forward.1} parent=47 // pred_fallthru
          _
        // Predicated region
        $region65: #{inverted_residual_forward.1} parent=47 // pred_check
          %p340 = pneg %p132
        $region66: #{inverted_residual_forward.1} parent=47 // pred_check_branch
          %342 = sbr.rel (%p340) target = $region68
        $region67: #{inverted_residual_forward.1} parent=47 // pred_region
          %343 = dma.done [#allocation10], 32
        $region68: #{inverted_residual_forward.1} parent=47 // pred_fallthru
          _
        // Predicated region
        $region69: #{inverted_residual_forward.1} parent=47 // pred_check
          %p344 = pneg %p153
        $region70: #{inverted_residual_forward.1} parent=47 // pred_check_branch
          %346 = sbr.rel (%p344) target = $region72
        $region71: #{inverted_residual_forward.1} parent=47 // pred_region
          %347 = dma.done [#allocation13], 2048
        $region72: #{inverted_residual_forward.1} parent=47 // pred_fallthru
          _
        // Predicated region
        $region73: #{inverted_residual_forward.1} parent=47 // pred_check
          %p348 = pneg %p174
        $region74: #{inverted_residual_forward.1} parent=47 // pred_check_branch
          %350 = sbr.rel (%p348) target = $region76
        $region75: #{inverted_residual_forward.1} parent=47 // pred_region
          %351 = dma.done [#allocation13], 16
        $region76: #{inverted_residual_forward.1} parent=47 // pred_fallthru
          _
        %s352 = sand.u32 %s35, 1
        %s353 = scalar_lea.sflag [#allocation4], %s352
        %s354 = sand.u32 %s35, 1
        %s355 = smul.addr %s354, 256
        %s356 = scalar_lea.vmem [#allocation3], %s355
        %p357 = pneg %p48
        %p358 = pneg %p45
        %p359 = pneg %p69
        %p360 = pneg %p66
        %p361 = pneg %p90
        %p362 = pneg %p87
        %p363 = pneg %p111
        %p364 = pneg %p108
        %p365 = pneg %p132
        %p366 = pneg %p129
        %p367 = pneg %p153
        %p368 = pneg %p150
        %p369 = pneg %p174
        %p370 = pneg %p171
        %p371 = pneg %p200
        %p372 = pneg %p197
        %s373 = sand.u32 %s187, 1
        %s374 = scalar_lea.sflag [#allocation5], %s373
        %s375 = sand.u32 %s187, 1
        %s376 = smul.addr %s375, 256
        %s377 = scalar_lea.vmem [#allocation15], %s376
        %v379 = vld [vmem:[%s323] sm:$0xff]
        %v380 = vld [vmem:[%s323 + $0x8] sm:$0xff]
        %v381 = vld [vmem:[%s323 + $0x10] sm:$0xff]
        %v382 = vld [vmem:[%s323 + $0x18] sm:$0xff]
        %v383 = vld [vmem:[%s323 + $0x20] sm:$0xff]
        %v384 = vld [vmem:[%s323 + $0x28] sm:$0xff]
        %v385 = vld [vmem:[%s323 + $0x30] sm:$0xff]
        %v386 = vld [vmem:[%s323 + $0x38] sm:$0xff]
        %v387 = vld [vmem:[%s323 + $0x40] sm:$0xff]
        %v388 = vld [vmem:[%s323 + $0x48] sm:$0xff]
        %v389 = vld [vmem:[%s323 + $0x50] sm:$0xff]
        %v390 = vld [vmem:[%s323 + $0x58] sm:$0xff]
        %v391 = vld [vmem:[%s323 + $0x60] sm:$0xff]
        %v392 = vld [vmem:[%s323 + $0x68] sm:$0xff]
        %v393 = vld [vmem:[%s323 + $0x70] sm:$0xff]
        %v394 = vld [vmem:[%s323 + $0x78] sm:$0xff]
        %v395 = vld [vmem:[%s323 + $0x80] sm:$0xff]
        %v396 = vld [vmem:[%s323 + $0x88] sm:$0xff]
        %v397 = vld [vmem:[%s323 + $0x90] sm:$0xff]
        %v398 = vld [vmem:[%s323 + $0x98] sm:$0xff]
        %v399 = vld [vmem:[%s323 + $0xa0] sm:$0xff]
        %v400 = vld [vmem:[%s323 + $0xa8] sm:$0xff]
        %v401 = vld [vmem:[%s323 + $0xb0] sm:$0xff]
        %v402 = vld [vmem:[%s323 + $0xb8] sm:$0xff]
        %v403 = vld [vmem:[%s323 + $0xc0] sm:$0xff]
        %v404 = vld [vmem:[%s323 + $0xc8] sm:$0xff]
        %v405 = vld [vmem:[%s323 + $0xd0] sm:$0xff]
        %v406 = vld [vmem:[%s323 + $0xd8] sm:$0xff]
        %v407 = vld [vmem:[%s323 + $0xe0] sm:$0xff]
        %v408 = vld [vmem:[%s323 + $0xe8] sm:$0xff]
        %v409 = vld [vmem:[%s323 + $0xf0] sm:$0xff]
        %v410 = vld [vmem:[%s323 + $0xf8] sm:$0xff]
        %v411 = vpack.c.bf16 %v380, %v379
        %v412 = vpack.c.bf16 %v382, %v381
        %v413 = vpack.c.bf16 %v384, %v383
        %v414 = vpack.c.bf16 %v386, %v385
        %v415 = vpack.c.bf16 %v388, %v387
        %v416 = vpack.c.bf16 %v390, %v389
        %v417 = vpack.c.bf16 %v392, %v391
        %v418 = vpack.c.bf16 %v394, %v393
        %v419 = vpack.c.bf16 %v396, %v395
        %v420 = vpack.c.bf16 %v398, %v397
        %v421 = vpack.c.bf16 %v400, %v399
        %v422 = vpack.c.bf16 %v402, %v401
        %v423 = vpack.c.bf16 %v404, %v403
        %v424 = vpack.c.bf16 %v406, %v405
        %v425 = vpack.c.bf16 %v408, %v407
        %v426 = vpack.c.bf16 %v410, %v409
        %v427 = vld [vmem:[#allocation6] sm:$0xff]
        %v428 = vld [vmem:[#allocation6 + $0x8] sm:$0xff]
        %v429 = vld [vmem:[#allocation6 + $0x10] sm:$0xff]
        %v430 = vld [vmem:[#allocation6 + $0x18] sm:$0xff]
        %v431 = vld [vmem:[#allocation6 + $0x20] sm:$0xff]
        %v432 = vld [vmem:[#allocation6 + $0x28] sm:$0xff]
        %v433 = vld [vmem:[#allocation6 + $0x30] sm:$0xff]
        %v434 = vld [vmem:[#allocation6 + $0x38] sm:$0xff]
        %v435 = vld [vmem:[#allocation6 + $0x40] sm:$0xff]
        %v436 = vld [vmem:[#allocation6 + $0x48] sm:$0xff]
        %v437 = vld [vmem:[#allocation6 + $0x50] sm:$0xff]
        %v438 = vld [vmem:[#allocation6 + $0x58] sm:$0xff]
        %v439 = vld [vmem:[#allocation6 + $0x60] sm:$0xff]
        %v440 = vld [vmem:[#allocation6 + $0x68] sm:$0xff]
        %v441 = vld [vmem:[#allocation6 + $0x70] sm:$0xff]
        %v442 = vld [vmem:[#allocation6 + $0x78] sm:$0xff]
        %v443 = vld [vmem:[#allocation8] sm:$0x3]
        %v445 = vlaneseq
        %v446 = vshrl.u32 %v445, 7
        %v447 = vsub.s32 0, %v446
        %v448 = vrot.slane %v443, %v447
        %v449 = vlaneseq
        %v450 = vshrl.u32 %v449, 7
        %v451 = vsub.s32 1, %v450
        %v452 = vrot.slane %v443, %v451
        %v471 = vunpack.c.l.b16 %v427
        %v472 = vunpack.c.h.b16 %v427
        %v473 = vunpack.c.l.b16 %v428
        %v474 = vunpack.c.h.b16 %v428
        %v475 = vunpack.c.l.b16 %v429
        %v476 = vunpack.c.h.b16 %v429
        %v477 = vunpack.c.l.b16 %v430
        %v478 = vunpack.c.h.b16 %v430
        %v479 = vunpack.c.l.b16 %v431
        %v480 = vunpack.c.h.b16 %v431
        %v481 = vunpack.c.l.b16 %v432
        %v482 = vunpack.c.h.b16 %v432
        %v483 = vunpack.c.l.b16 %v433
        %v484 = vunpack.c.h.b16 %v433
        %v485 = vunpack.c.l.b16 %v434
        %v486 = vunpack.c.h.b16 %v434
        %v487 = vunpack.c.l.b16 %v435
        %v488 = vunpack.c.h.b16 %v435
        %v489 = vunpack.c.l.b16 %v436
        %v490 = vunpack.c.h.b16 %v436
        %v491 = vunpack.c.l.b16 %v437
        %v492 = vunpack.c.h.b16 %v437
        %v493 = vunpack.c.l.b16 %v438
        %v494 = vunpack.c.h.b16 %v438
        %v495 = vunpack.c.l.b16 %v439
        %v496 = vunpack.c.h.b16 %v439
        %v497 = vunpack.c.l.b16 %v440
        %v498 = vunpack.c.h.b16 %v440
        %v499 = vunpack.c.l.b16 %v441
        %v500 = vunpack.c.h.b16 %v441
        %v501 = vunpack.c.l.b16 %v442
        %v502 = vunpack.c.h.b16 %v442
        %v503 = vpack.c.b16 %v473, %v471
        %v504 = vpack.c.b16 %v474, %v472
        %v505 = vpack.c.b16 %v477, %v475
        %v506 = vpack.c.b16 %v478, %v476
        %v507 = vpack.c.b16 %v481, %v479
        %v508 = vpack.c.b16 %v482, %v480
        %v509 = vpack.c.b16 %v485, %v483
        %v510 = vpack.c.b16 %v486, %v484
        %v511 = vpack.c.b16 %v489, %v487
        %v512 = vpack.c.b16 %v490, %v488
        %v513 = vpack.c.b16 %v493, %v491
        %v514 = vpack.c.b16 %v494, %v492
        %v515 = vpack.c.b16 %v497, %v495
        %v516 = vpack.c.b16 %v498, %v496
        %v517 = vpack.c.b16 %v501, %v499
        %v518 = vpack.c.b16 %v502, %v500
        %535 = vmatprep.subr.bf16.mxu0 %v504
        %536 = vmatpush1.bf16.msra.mxu0 %v503
        %537 = vmatprep.subr.bf16.mxu0 %v506
        %538 = vmatpush1.bf16.msra.mxu0 %v505
        %539 = vmatprep.subr.bf16.mxu0 %v508
        %540 = vmatpush1.bf16.msra.mxu0 %v507
        %541 = vmatprep.subr.bf16.mxu0 %v510
        %542 = vmatpush1.bf16.msra.mxu0 %v509
        %543 = vmatprep.subr.bf16.mxu0 %v512
        %544 = vmatpush1.bf16.msra.mxu0 %v511
        %545 = vmatprep.subr.bf16.mxu0 %v514
        %546 = vmatpush1.bf16.msra.mxu0 %v513
        %547 = vmatprep.subr.bf16.mxu0 %v516
        %548 = vmatpush1.bf16.msra.mxu0 %v515
        %549 = vmatprep.subr.bf16.mxu0 %v518
        %550 = vmatpush1.bf16.msra.mxu0 %v517
        %551 = vmatprep.subr.bf16.mxu0 0
        %552 = vmatpush1.bf16.msra.mxu0 0
        %553 = vmatprep.subr.bf16.mxu0 0
        %554 = vmatpush1.bf16.msra.mxu0 0
        %555 = vmatprep.subr.bf16.mxu0 0
        %556 = vmatpush1.bf16.msra.mxu0 0
        %557 = vmatprep.subr.bf16.mxu0 0
        %558 = vmatpush1.bf16.msra.mxu0 0
        %559 = vmatprep.subr.bf16.mxu0 0
        %560 = vmatpush1.bf16.msra.mxu0 0
        %561 = vmatprep.subr.bf16.mxu0 0
        %562 = vmatpush1.bf16.msra.mxu0 0
        %563 = vmatprep.subr.bf16.mxu0 0
        %564 = vmatpush1.bf16.msra.mxu0 0
        %565 = vmatprep.subr.bf16.mxu0 0
        %566 = vmatpush1.bf16.msra.mxu0 0
        %567 = vmatprep.mubr.bf16.mxu0 0
        %568 = vmatmul.mubr.bf16.gmra.mrb[0].mxu0 %v411
        %v569 = vpop.f32.mrb[0].mxu0
        %v570 = vadd.f32 %v448, %v569
        %v571 = vpop.f32.mrb[0].mxu0
        %v572 = vadd.f32 %v452, %v571
        %v573 = vpop.f32.mrb[0].mxu0
        %v574 = vadd.f32 %v448, %v573
        %v575 = vpop.f32.mrb[0].mxu0
        %v576 = vadd.f32 %v452, %v575
        %577 = vmatprep.mubr.bf16.mxu0 0
        %578 = vmatmul.mubr.bf16.gmra.mrb[0].mxu0 %v412
        %v579 = vpop.f32.mrb[0].mxu0
        %v580 = vadd.f32 %v448, %v579
        %v581 = vpop.f32.mrb[0].mxu0
        %v582 = vadd.f32 %v452, %v581
        %v583 = vpop.f32.mrb[0].mxu0
        %v584 = vadd.f32 %v448, %v583
        %v585 = vpop.f32.mrb[0].mxu0
        %v586 = vadd.f32 %v452, %v585
        %587 = vmatprep.mubr.bf16.mxu0 0
        %588 = vmatmul.mubr.bf16.gmra.mrb[0].mxu0 %v413
        %v589 = vpop.f32.mrb[0].mxu0
        %v590 = vadd.f32 %v448, %v589
        %v591 = vpop.f32.mrb[0].mxu0
        %v592 = vadd.f32 %v452, %v591
        %v593 = vpop.f32.mrb[0].mxu0
        %v594 = vadd.f32 %v448, %v593
        %v595 = vpop.f32.mrb[0].mxu0
        %v596 = vadd.f32 %v452, %v595
        %597 = vmatprep.mubr.bf16.mxu0 0
        %598 = vmatmul.mubr.bf16.gmra.mrb[0].mxu0 %v414
        %v599 = vpop.f32.mrb[0].mxu0
        %v600 = vadd.f32 %v448, %v599
        %v601 = vpop.f32.mrb[0].mxu0
        %v602 = vadd.f32 %v452, %v601
        %v603 = vpop.f32.mrb[0].mxu0
        %v604 = vadd.f32 %v448, %v603
        %v605 = vpop.f32.mrb[0].mxu0
        %v606 = vadd.f32 %v452, %v605
        %607 = vmatprep.mubr.bf16.mxu0 0
        %608 = vmatmul.mubr.bf16.gmra.mrb[0].mxu0 %v415
        %v609 = vpop.f32.mrb[0].mxu0
        %v610 = vadd.f32 %v448, %v609
        %v611 = vpop.f32.mrb[0].mxu0
        %v612 = vadd.f32 %v452, %v611
        %v613 = vpop.f32.mrb[0].mxu0
        %v614 = vadd.f32 %v448, %v613
        %v615 = vpop.f32.mrb[0].mxu0
        %v616 = vadd.f32 %v452, %v615
        %617 = vmatprep.mubr.bf16.mxu0 0
        %618 = vmatmul.mubr.bf16.gmra.mrb[0].mxu0 %v416
        %v619 = vpop.f32.mrb[0].mxu0
        %v620 = vadd.f32 %v448, %v619
        %v621 = vpop.f32.mrb[0].mxu0
        %v622 = vadd.f32 %v452, %v621
        %v623 = vpop.f32.mrb[0].mxu0
        %v624 = vadd.f32 %v448, %v623
        %v625 = vpop.f32.mrb[0].mxu0
        %v626 = vadd.f32 %v452, %v625
        %627 = vmatprep.mubr.bf16.mxu0 0
        %628 = vmatmul.mubr.bf16.gmra.mrb[0].mxu0 %v417
        %v629 = vpop.f32.mrb[0].mxu0
        %v630 = vadd.f32 %v448, %v629
        %v631 = vpop.f32.mrb[0].mxu0
        %v632 = vadd.f32 %v452, %v631
        %v633 = vpop.f32.mrb[0].mxu0
        %v634 = vadd.f32 %v448, %v633
        %v635 = vpop.f32.mrb[0].mxu0
        %v636 = vadd.f32 %v452, %v635
        %637 = vmatprep.mubr.bf16.mxu0 0
        %638 = vmatmul.mubr.bf16.gmra.mrb[0].mxu0 %v418
        %v639 = vpop.f32.mrb[0].mxu0
        %v640 = vadd.f32 %v448, %v639
        %v641 = vpop.f32.mrb[0].mxu0
        %v642 = vadd.f32 %v452, %v641
        %v643 = vpop.f32.mrb[0].mxu0
        %v644 = vadd.f32 %v448, %v643
        %v645 = vpop.f32.mrb[0].mxu0
        %v646 = vadd.f32 %v452, %v645
        %647 = vmatprep.mubr.bf16.mxu0 0
        %648 = vmatmul.mubr.bf16.gmra.mrb[0].mxu0 %v419
        %v649 = vpop.f32.mrb[0].mxu0
        %v650 = vadd.f32 %v448, %v649
        %v651 = vpop.f32.mrb[0].mxu0
        %v652 = vadd.f32 %v452, %v651
        %v653 = vpop.f32.mrb[0].mxu0
        %v654 = vadd.f32 %v448, %v653
        %v655 = vpop.f32.mrb[0].mxu0
        %v656 = vadd.f32 %v452, %v655
        %657 = vmatprep.mubr.bf16.mxu0 0
        %658 = vmatmul.mubr.bf16.gmra.mrb[0].mxu0 %v420
        %v659 = vpop.f32.mrb[0].mxu0
        %v660 = vadd.f32 %v448, %v659
        %v661 = vpop.f32.mrb[0].mxu0
        %v662 = vadd.f32 %v452, %v661
        %v663 = vpop.f32.mrb[0].mxu0
        %v664 = vadd.f32 %v448, %v663
        %v665 = vpop.f32.mrb[0].mxu0
        %v666 = vadd.f32 %v452, %v665
        %667 = vmatprep.mubr.bf16.mxu0 0
        %668 = vmatmul.mubr.bf16.gmra.mrb[0].mxu0 %v421
        %v669 = vpop.f32.mrb[0].mxu0
        %v670 = vadd.f32 %v448, %v669
        %v671 = vpop.f32.mrb[0].mxu0
        %v672 = vadd.f32 %v452, %v671
        %v673 = vpop.f32.mrb[0].mxu0
        %v674 = vadd.f32 %v448, %v673
        %v675 = vpop.f32.mrb[0].mxu0
        %v676 = vadd.f32 %v452, %v675
        %677 = vmatprep.mubr.bf16.mxu0 0
        %678 = vmatmul.mubr.bf16.gmra.mrb[0].mxu0 %v422
        %v679 = vpop.f32.mrb[0].mxu0
        %v680 = vadd.f32 %v448, %v679
        %v681 = vpop.f32.mrb[0].mxu0
        %v682 = vadd.f32 %v452, %v681
        %v683 = vpop.f32.mrb[0].mxu0
        %v684 = vadd.f32 %v448, %v683
        %v685 = vpop.f32.mrb[0].mxu0
        %v686 = vadd.f32 %v452, %v685
        %687 = vmatprep.mubr.bf16.mxu0 0
        %688 = vmatmul.mubr.bf16.gmra.mrb[0].mxu0 %v423
        %v689 = vpop.f32.mrb[0].mxu0
        %v690 = vadd.f32 %v448, %v689
        %v691 = vpop.f32.mrb[0].mxu0
        %v692 = vadd.f32 %v452, %v691
        %v693 = vpop.f32.mrb[0].mxu0
        %v694 = vadd.f32 %v448, %v693
        %v695 = vpop.f32.mrb[0].mxu0
        %v696 = vadd.f32 %v452, %v695
        %697 = vmatprep.mubr.bf16.mxu0 0
        %698 = vmatmul.mubr.bf16.gmra.mrb[0].mxu0 %v424
        %v699 = vpop.f32.mrb[0].mxu0
        %v700 = vadd.f32 %v448, %v699
        %v701 = vpop.f32.mrb[0].mxu0
        %v702 = vadd.f32 %v452, %v701
        %v703 = vpop.f32.mrb[0].mxu0
        %v704 = vadd.f32 %v448, %v703
        %v705 = vpop.f32.mrb[0].mxu0
        %v706 = vadd.f32 %v452, %v705
        %707 = vmatprep.mubr.bf16.mxu0 0
        %708 = vmatmul.mubr.bf16.gmra.mrb[0].mxu0 %v425
        %v709 = vpop.f32.mrb[0].mxu0
        %v710 = vadd.f32 %v448, %v709
        %v711 = vpop.f32.mrb[0].mxu0
        %v712 = vadd.f32 %v452, %v711
        %v713 = vpop.f32.mrb[0].mxu0
        %v714 = vadd.f32 %v448, %v713
        %v715 = vpop.f32.mrb[0].mxu0
        %v716 = vadd.f32 %v452, %v715
        %717 = vmatprep.mubr.bf16.mxu0 0
        %718 = vmatmul.mubr.bf16.gmra.mrb[0].mxu0 %v426
        %v719 = vpop.f32.mrb[0].mxu0
        %v720 = vadd.f32 %v448, %v719
        %v721 = vpop.f32.mrb[0].mxu0
        %v722 = vadd.f32 %v452, %v721
        %v723 = vpop.f32.mrb[0].mxu0
        %v724 = vadd.f32 %v448, %v723
        %v725 = vpop.f32.mrb[0].mxu0
        %v726 = vadd.f32 %v452, %v725
        %727 = vdwg.mxu0
        %v728 = vmax.f32 %v570, 0.0
        %v729 = vmax.f32 %v572, 0.0
        %v730 = vmax.f32 %v574, 0.0
        %v731 = vmax.f32 %v576, 0.0
        %v732 = vmax.f32 %v580, 0.0
        %v733 = vmax.f32 %v582, 0.0
        %v734 = vmax.f32 %v584, 0.0
        %v735 = vmax.f32 %v586, 0.0
        %v736 = vmax.f32 %v590, 0.0
        %v737 = vmax.f32 %v592, 0.0
        %v738 = vmax.f32 %v594, 0.0
        %v739 = vmax.f32 %v596, 0.0
        %v740 = vmax.f32 %v600, 0.0
        %v741 = vmax.f32 %v602, 0.0
        %v742 = vmax.f32 %v604, 0.0
        %v743 = vmax.f32 %v606, 0.0
        %v744 = vmax.f32 %v610, 0.0
        %v745 = vmax.f32 %v612, 0.0
        %v746 = vmax.f32 %v614, 0.0
        %v747 = vmax.f32 %v616, 0.0
        %v748 = vmax.f32 %v620, 0.0
        %v749 = vmax.f32 %v622, 0.0
        %v750 = vmax.f32 %v624, 0.0
        %v751 = vmax.f32 %v626, 0.0
        %v752 = vmax.f32 %v630, 0.0
        %v753 = vmax.f32 %v632, 0.0
        %v754 = vmax.f32 %v634, 0.0
        %v755 = vmax.f32 %v636, 0.0
        %v756 = vmax.f32 %v640, 0.0
        %v757 = vmax.f32 %v642, 0.0
        %v758 = vmax.f32 %v644, 0.0
        %v759 = vmax.f32 %v646, 0.0
        %v760 = vmax.f32 %v650, 0.0
        %v761 = vmax.f32 %v652, 0.0
        %v762 = vmax.f32 %v654, 0.0
        %v763 = vmax.f32 %v656, 0.0
        %v764 = vmax.f32 %v660, 0.0
        %v765 = vmax.f32 %v662, 0.0
        %v766 = vmax.f32 %v664, 0.0
        %v767 = vmax.f32 %v666, 0.0
        %v768 = vmax.f32 %v670, 0.0
        %v769 = vmax.f32 %v672, 0.0
        %v770 = vmax.f32 %v674, 0.0
        %v771 = vmax.f32 %v676, 0.0
        %v772 = vmax.f32 %v680, 0.0
        %v773 = vmax.f32 %v682, 0.0
        %v774 = vmax.f32 %v684, 0.0
        %v775 = vmax.f32 %v686, 0.0
        %v776 = vmax.f32 %v690, 0.0
        %v777 = vmax.f32 %v692, 0.0
        %v778 = vmax.f32 %v694, 0.0
        %v779 = vmax.f32 %v696, 0.0
        %v780 = vmax.f32 %v700, 0.0
        %v781 = vmax.f32 %v702, 0.0
        %v782 = vmax.f32 %v704, 0.0
        %v783 = vmax.f32 %v706, 0.0
        %v784 = vmax.f32 %v710, 0.0
        %v785 = vmax.f32 %v712, 0.0
        %v786 = vmax.f32 %v714, 0.0
        %v787 = vmax.f32 %v716, 0.0
        %v788 = vmax.f32 %v720, 0.0
        %v789 = vmax.f32 %v722, 0.0
        %v790 = vmax.f32 %v724, 0.0
        %v791 = vmax.f32 %v726, 0.0
        %v792 = vmin.f32 %v728, 6.0
        %v793 = vmin.f32 %v729, 6.0
        %v794 = vmin.f32 %v730, 6.0
        %v795 = vmin.f32 %v731, 6.0
        %v796 = vmin.f32 %v732, 6.0
        %v797 = vmin.f32 %v733, 6.0
        %v798 = vmin.f32 %v734, 6.0
        %v799 = vmin.f32 %v735, 6.0
        %v800 = vmin.f32 %v736, 6.0
        %v801 = vmin.f32 %v737, 6.0
        %v802 = vmin.f32 %v738, 6.0
        %v803 = vmin.f32 %v739, 6.0
        %v804 = vmin.f32 %v740, 6.0
        %v805 = vmin.f32 %v741, 6.0
        %v806 = vmin.f32 %v742, 6.0
        %v807 = vmin.f32 %v743, 6.0
        %v808 = vmin.f32 %v744, 6.0
        %v809 = vmin.f32 %v745, 6.0
        %v810 = vmin.f32 %v746, 6.0
        %v811 = vmin.f32 %v747, 6.0
        %v812 = vmin.f32 %v748, 6.0
        %v813 = vmin.f32 %v749, 6.0
        %v814 = vmin.f32 %v750, 6.0
        %v815 = vmin.f32 %v751, 6.0
        %v816 = vmin.f32 %v752, 6.0
        %v817 = vmin.f32 %v753, 6.0
        %v818 = vmin.f32 %v754, 6.0
        %v819 = vmin.f32 %v755, 6.0
        %v820 = vmin.f32 %v756, 6.0
        %v821 = vmin.f32 %v757, 6.0
        %v822 = vmin.f32 %v758, 6.0
        %v823 = vmin.f32 %v759, 6.0
        %v824 = vmin.f32 %v760, 6.0
        %v825 = vmin.f32 %v761, 6.0
        %v826 = vmin.f32 %v762, 6.0
        %v827 = vmin.f32 %v763, 6.0
        %v828 = vmin.f32 %v764, 6.0
        %v829 = vmin.f32 %v765, 6.0
        %v830 = vmin.f32 %v766, 6.0
        %v831 = vmin.f32 %v767, 6.0
        %v832 = vmin.f32 %v768, 6.0
        %v833 = vmin.f32 %v769, 6.0
        %v834 = vmin.f32 %v770, 6.0
        %v835 = vmin.f32 %v771, 6.0
        %v836 = vmin.f32 %v772, 6.0
        %v837 = vmin.f32 %v773, 6.0
        %v838 = vmin.f32 %v774, 6.0
        %v839 = vmin.f32 %v775, 6.0
        %v840 = vmin.f32 %v776, 6.0
        %v841 = vmin.f32 %v777, 6.0
        %v842 = vmin.f32 %v778, 6.0
        %v843 = vmin.f32 %v779, 6.0
        %v844 = vmin.f32 %v780, 6.0
        %v845 = vmin.f32 %v781, 6.0
        %v846 = vmin.f32 %v782, 6.0
        %v847 = vmin.f32 %v783, 6.0
        %v848 = vmin.f32 %v784, 6.0
        %v849 = vmin.f32 %v785, 6.0
        %v850 = vmin.f32 %v786, 6.0
        %v851 = vmin.f32 %v787, 6.0
        %v852 = vmin.f32 %v788, 6.0
        %v853 = vmin.f32 %v789, 6.0
        %v854 = vmin.f32 %v790, 6.0
        %v855 = vmin.f32 %v791, 6.0
        %856 = vst [vmem:[#allocation2] sm:$0xff] 0.0
        %857 = vst [vmem:[#allocation2 + $0x8] sm:$0xff] 0.0
        %858 = vst [vmem:[#allocation2 + $0x10] sm:$0xff] 0.0
        %859 = vst [vmem:[#allocation2 + $0x18] sm:$0xff] 0.0
        %860 = vst [vmem:[#allocation2 + $0x20] sm:$0x3] 0.0
        %861 = vst [vmem:[#allocation2 + $0x28] sm:$0x3] 0.0
        %862 = vst [vmem:[#allocation2 + $0x30] sm:$0xff] 0.0
        %863 = vst [vmem:[#allocation2 + $0x38] sm:$0xff] 0.0
        %864 = vst [vmem:[#allocation2 + $0x40] sm:$0xff] 0.0
        %865 = vst [vmem:[#allocation2 + $0x48] sm:$0xff] 0.0
        %866 = vst [vmem:[#allocation2 + $0x50] sm:$0x3] 0.0
        %867 = vst [vmem:[#allocation2 + $0x58] sm:$0x3] 0.0
        %868 = vst [vmem:[#allocation2 + $0x60] sm:$0xff] 0.0
        %869 = vst [vmem:[#allocation2 + $0x68] sm:$0xff] 0.0
        %870 = vst [vmem:[#allocation2 + $0x70] sm:$0xff] 0.0
        %871 = vst [vmem:[#allocation2 + $0x78] sm:$0xff] 0.0
        %872 = vst [vmem:[#allocation2 + $0x80] sm:$0x3] 0.0
        %873 = vst [vmem:[#allocation2 + $0x88] sm:$0x3] 0.0
        %874 = vst [vmem:[#allocation2 + $0x90] sm:$0xff] 0.0
        %875 = vst [vmem:[#allocation2 + $0x98] sm:$0xff] 0.0
        %876 = vst [vmem:[#allocation2 + $0xa0] sm:$0xff] 0.0
        %877 = vst [vmem:[#allocation2 + $0xa8] sm:$0xff] 0.0
        %878 = vst [vmem:[#allocation2 + $0xb0] sm:$0x3] 0.0
        %879 = vst [vmem:[#allocation2 + $0xb8] sm:$0x3] 0.0
        %880 = vst [vmem:[#allocation2 + $0xc0] sm:$0xff] 0.0
        %881 = vst [vmem:[#allocation2 + $0xc8] sm:$0xff] 0.0
        %882 = vst [vmem:[#allocation2 + $0xd0] sm:$0xff] 0.0
        %883 = vst [vmem:[#allocation2 + $0xd8] sm:$0xff] 0.0
        %884 = vst [vmem:[#allocation2 + $0xe0] sm:$0x3] 0.0
        %885 = vst [vmem:[#allocation2 + $0xe8] sm:$0x3] 0.0
        %886 = vst [vmem:[#allocation2 + $0xf0] sm:$0xff] 0.0
        %887 = vst [vmem:[#allocation2 + $0xf8] sm:$0xff] 0.0
        %888 = vst [vmem:[#allocation2 + $0x100] sm:$0xff] 0.0
        %889 = vst [vmem:[#allocation2 + $0x108] sm:$0xff] 0.0
        %890 = vst [vmem:[#allocation2 + $0x110] sm:$0x3] 0.0
        %891 = vst [vmem:[#allocation2 + $0x118] sm:$0x3] 0.0
        %892 = vst [vmem:[#allocation2 + $0x120] sm:$0xff] 0.0
        %893 = vst [vmem:[#allocation2 + $0x128] sm:$0xff] 0.0
        %894 = vst [vmem:[#allocation2 + $0x130] sm:$0xff] 0.0
        %895 = vst [vmem:[#allocation2 + $0x138] sm:$0xff] 0.0
        %896 = vst [vmem:[#allocation2 + $0x140] sm:$0x3] 0.0
        %897 = vst [vmem:[#allocation2 + $0x148] sm:$0x3] 0.0
        %898 = vst [vmem:[#allocation2 + $0x150] sm:$0xff] 0.0
        %899 = vst [vmem:[#allocation2 + $0x158] sm:$0xff] 0.0
        %900 = vst [vmem:[#allocation2 + $0x160] sm:$0xff] 0.0
        %901 = vst [vmem:[#allocation2 + $0x168] sm:$0xff] 0.0
        %902 = vst [vmem:[#allocation2 + $0x170] sm:$0x3] 0.0
        %903 = vst [vmem:[#allocation2 + $0x178] sm:$0x3] 0.0
        %904 = vst [vmem:[#allocation2 + $0x180] sm:$0xff] 0.0
        %905 = vst [vmem:[#allocation2 + $0x188] sm:$0xff] 0.0
        %906 = vst [vmem:[#allocation2 + $0x190] sm:$0xff] 0.0
        %907 = vst [vmem:[#allocation2 + $0x198] sm:$0xff] 0.0
        %908 = vst [vmem:[#allocation2 + $0x1a0] sm:$0x3] 0.0
        %909 = vst [vmem:[#allocation2 + $0x1a8] sm:$0x3] 0.0
        %910 = vst [vmem:[#allocation2 + $0x1b0] sm:$0xff] 0.0
        %911 = vst [vmem:[#allocation2 + $0x1b8] sm:$0xff] 0.0
        %912 = vst [vmem:[#allocation2 + $0x1c0] sm:$0xff] 0.0
        %913 = vst [vmem:[#allocation2 + $0x1c8] sm:$0xff] 0.0
        %914 = vst [vmem:[#allocation2 + $0x1d0] sm:$0x3] 0.0
        %915 = vst [vmem:[#allocation2 + $0x1d8] sm:$0x3] 0.0
        %916 = vst [vmem:[#allocation2 + $0x1e0] sm:$0xff] 0.0
        %917 = vst [vmem:[#allocation2 + $0x1e8] sm:$0xff] 0.0
        %918 = vst [vmem:[#allocation2 + $0x1f0] sm:$0xff] 0.0
        %919 = vst [vmem:[#allocation2 + $0x1f8] sm:$0xff] 0.0
        %920 = vst [vmem:[#allocation2 + $0x200] sm:$0x3] 0.0
        %921 = vst [vmem:[#allocation2 + $0x208] sm:$0x3] 0.0
        %922 = vst [vmem:[#allocation2 + $0x210] sm:$0xff] 0.0
        %923 = vst [vmem:[#allocation2 + $0x218] sm:$0xff] 0.0
        %924 = vst [vmem:[#allocation2 + $0x220] sm:$0xff] 0.0
        %925 = vst [vmem:[#allocation2 + $0x228] sm:$0xff] 0.0
        %926 = vst [vmem:[#allocation2 + $0x230] sm:$0x3] 0.0
        %927 = vst [vmem:[#allocation2 + $0x238] sm:$0x3] 0.0
        %928 = vst [vmem:[#allocation2 + $0x240] sm:$0xff] 0.0
        %929 = vst [vmem:[#allocation2 + $0x248] sm:$0xff] 0.0
        %930 = vst [vmem:[#allocation2 + $0x250] sm:$0xff] 0.0
        %931 = vst [vmem:[#allocation2 + $0x258] sm:$0xff] 0.0
        %932 = vst [vmem:[#allocation2 + $0x260] sm:$0x3] 0.0
        %933 = vst [vmem:[#allocation2 + $0x268] sm:$0x3] 0.0
        %934 = vst [vmem:[#allocation2 + $0x270] sm:$0xff] 0.0
        %935 = vst [vmem:[#allocation2 + $0x278] sm:$0xff] 0.0
        %936 = vst [vmem:[#allocation2 + $0x280] sm:$0xff] 0.0
        %937 = vst [vmem:[#allocation2 + $0x288] sm:$0xff] 0.0
        %938 = vst [vmem:[#allocation2 + $0x290] sm:$0x3] 0.0
        %939 = vst [vmem:[#allocation2 + $0x298] sm:$0x3] 0.0
        %940 = vst [vmem:[#allocation2 + $0x2a0] sm:$0xff] 0.0
        %941 = vst [vmem:[#allocation2 + $0x2a8] sm:$0xff] 0.0
        %942 = vst [vmem:[#allocation2 + $0x2b0] sm:$0xff] 0.0
        %943 = vst [vmem:[#allocation2 + $0x2b8] sm:$0xff] 0.0
        %944 = vst [vmem:[#allocation2 + $0x2c0] sm:$0x3] 0.0
        %945 = vst [vmem:[#allocation2 + $0x2c8] sm:$0x3] 0.0
        %946 = vst [vmem:[#allocation2 + $0x2d0] sm:$0xff] 0.0
        %947 = vst [vmem:[#allocation2 + $0x2d8] sm:$0xff] 0.0
        %948 = vst [vmem:[#allocation2 + $0x2e0] sm:$0xff] 0.0
        %949 = vst [vmem:[#allocation2 + $0x2e8] sm:$0xff] 0.0
        %950 = vst [vmem:[#allocation2 + $0x2f0] sm:$0x3] 0.0
        %951 = vst [vmem:[#allocation2 + $0x2f8] sm:$0x3] 0.0
        %952 = vst [vmem:[#allocation2 + $0x300] sm:$0xff] 0.0
        %953 = vst [vmem:[#allocation2 + $0x308] sm:$0xff] 0.0
        %954 = vst [vmem:[#allocation2 + $0x310] sm:$0xff] 0.0
        %955 = vst [vmem:[#allocation2 + $0x318] sm:$0xff] 0.0
        %956 = vst [vmem:[#allocation2 + $0x320] sm:$0x3] 0.0
        %957 = vst [vmem:[#allocation2 + $0x328] sm:$0x3] 0.0
        %958 = vst [vmem:[#allocation2 + $0x330] sm:$0xff] 0.0
        %959 = vst [vmem:[#allocation2 + $0x338] sm:$0xff] 0.0
        %960 = vst [vmem:[#allocation2 + $0x340] sm:$0xff] 0.0
        %961 = vst [vmem:[#allocation2 + $0x348] sm:$0xff] 0.0
        %962 = vst [vmem:[#allocation2 + $0x350] sm:$0x3] 0.0
        %963 = vst [vmem:[#allocation2 + $0x358] sm:$0x3] 0.0
        %vm1028 = vcmask 1040384
        %v1029 = vrot.slane %v792, 7
        %v1030 = vrot.slane %v793, 7
        %v1031 = vrot.slane %v794, 7
        %v1032 = vsel %vm1028, %v1029, %v1031
        %v1033 = vrot.slane %v795, 7
        %v1034 = vsel %vm1028, %v1030, %v1033
        %v1035 = vrot.slane %v796, 7
        %v1036 = vrot.slane %v797, 7
        %v1037 = vrot.slane %v798, 7
        %v1038 = vsel %vm1028, %v1035, %v1037
        %v1039 = vrot.slane %v799, 7
        %v1040 = vsel %vm1028, %v1036, %v1039
        %v1041 = vrot.slane %v800, 7
        %v1042 = vrot.slane %v801, 7
        %v1043 = vrot.slane %v802, 7
        %v1044 = vsel %vm1028, %v1041, %v1043
        %v1045 = vrot.slane %v803, 7
        %v1046 = vsel %vm1028, %v1042, %v1045
        %v1047 = vrot.slane %v804, 7
        %v1048 = vrot.slane %v805, 7
        %v1049 = vrot.slane %v806, 7
        %v1050 = vsel %vm1028, %v1047, %v1049
        %v1051 = vrot.slane %v807, 7
        %v1052 = vsel %vm1028, %v1048, %v1051
        %v1053 = vrot.slane %v808, 7
        %v1054 = vrot.slane %v809, 7
        %v1055 = vrot.slane %v810, 7
        %v1056 = vsel %vm1028, %v1053, %v1055
        %v1057 = vrot.slane %v811, 7
        %v1058 = vsel %vm1028, %v1054, %v1057
        %v1059 = vrot.slane %v812, 7
        %v1060 = vrot.slane %v813, 7
        %v1061 = vrot.slane %v814, 7
        %v1062 = vsel %vm1028, %v1059, %v1061
        %v1063 = vrot.slane %v815, 7
        %v1064 = vsel %vm1028, %v1060, %v1063
        %v1065 = vrot.slane %v816, 7
        %v1066 = vrot.slane %v817, 7
        %v1067 = vrot.slane %v818, 7
        %v1068 = vsel %vm1028, %v1065, %v1067
        %v1069 = vrot.slane %v819, 7
        %v1070 = vsel %vm1028, %v1066, %v1069
        %v1071 = vrot.slane %v820, 7
        %v1072 = vrot.slane %v821, 7
        %v1073 = vrot.slane %v822, 7
        %v1074 = vsel %vm1028, %v1071, %v1073
        %v1075 = vrot.slane %v823, 7
        %v1076 = vsel %vm1028, %v1072, %v1075
        %v1077 = vrot.slane %v824, 7
        %v1078 = vrot.slane %v825, 7
        %v1079 = vrot.slane %v826, 7
        %v1080 = vsel %vm1028, %v1077, %v1079
        %v1081 = vrot.slane %v827, 7
        %v1082 = vsel %vm1028, %v1078, %v1081
        %v1083 = vrot.slane %v828, 7
        %v1084 = vrot.slane %v829, 7
        %v1085 = vrot.slane %v830, 7
        %v1086 = vsel %vm1028, %v1083, %v1085
        %v1087 = vrot.slane %v831, 7
        %v1088 = vsel %vm1028, %v1084, %v1087
        %v1089 = vrot.slane %v832, 7
        %v1090 = vrot.slane %v833, 7
        %v1091 = vrot.slane %v834, 7
        %v1092 = vsel %vm1028, %v1089, %v1091
        %v1093 = vrot.slane %v835, 7
        %v1094 = vsel %vm1028, %v1090, %v1093
        %v1095 = vrot.slane %v836, 7
        %v1096 = vrot.slane %v837, 7
        %v1097 = vrot.slane %v838, 7
        %v1098 = vsel %vm1028, %v1095, %v1097
        %v1099 = vrot.slane %v839, 7
        %v1100 = vsel %vm1028, %v1096, %v1099
        %v1101 = vrot.slane %v840, 7
        %v1102 = vrot.slane %v841, 7
        %v1103 = vrot.slane %v842, 7
        %v1104 = vsel %vm1028, %v1101, %v1103
        %v1105 = vrot.slane %v843, 7
        %v1106 = vsel %vm1028, %v1102, %v1105
        %v1107 = vrot.slane %v844, 7
        %v1108 = vrot.slane %v845, 7
        %v1109 = vrot.slane %v846, 7
        %v1110 = vsel %vm1028, %v1107, %v1109
        %v1111 = vrot.slane %v847, 7
        %v1112 = vsel %vm1028, %v1108, %v1111
        %v1113 = vrot.slane %v848, 7
        %v1114 = vrot.slane %v849, 7
        %v1115 = vrot.slane %v850, 7
        %v1116 = vsel %vm1028, %v1113, %v1115
        %v1117 = vrot.slane %v851, 7
        %v1118 = vsel %vm1028, %v1114, %v1117
        %v1119 = vrot.slane %v852, 7
        %v1120 = vrot.slane %v853, 7
        %v1121 = vrot.slane %v854, 7
        %v1122 = vsel %vm1028, %v1119, %v1121
        %v1123 = vrot.slane %v855, 7
        %v1124 = vsel %vm1028, %v1120, %v1123
        %s1221 = scalar_lea.vmem [#allocation2], 48
        %1222 = vst [vmem:[%s1221] sm:$0xfe] %v1029
        %1223 = vst [vmem:[%s1221 + $0x8] sm:$0xfe] %v1030
        %1224 = vst [vmem:[%s1221 + $0x10] sm:$0xff] %v1032
        %1225 = vst [vmem:[%s1221 + $0x18] sm:$0xff] %v1034
        %1226 = vst [vmem:[%s1221 + $0x20] sm:$0x1] %v1031
        %1227 = vst [vmem:[%s1221 + $0x28] sm:$0x1] %v1033
        %1228 = vst [vmem:[%s1221 + $0x30] sm:$0xfe] %v1035
        %1229 = vst [vmem:[%s1221 + $0x38] sm:$0xfe] %v1036
        %1230 = vst [vmem:[%s1221 + $0x40] sm:$0xff] %v1038
        %1231 = vst [vmem:[%s1221 + $0x48] sm:$0xff] %v1040
        %1232 = vst [vmem:[%s1221 + $0x50] sm:$0x1] %v1037
        %1233 = vst [vmem:[%s1221 + $0x58] sm:$0x1] %v1039
        %1234 = vst [vmem:[%s1221 + $0x60] sm:$0xfe] %v1041
        %1235 = vst [vmem:[%s1221 + $0x68] sm:$0xfe] %v1042
        %1236 = vst [vmem:[%s1221 + $0x70] sm:$0xff] %v1044
        %1237 = vst [vmem:[%s1221 + $0x78] sm:$0xff] %v1046
        %1238 = vst [vmem:[%s1221 + $0x80] sm:$0x1] %v1043
        %1239 = vst [vmem:[%s1221 + $0x88] sm:$0x1] %v1045
        %1240 = vst [vmem:[%s1221 + $0x90] sm:$0xfe] %v1047
        %1241 = vst [vmem:[%s1221 + $0x98] sm:$0xfe] %v1048
        %1242 = vst [vmem:[%s1221 + $0xa0] sm:$0xff] %v1050
        %1243 = vst [vmem:[%s1221 + $0xa8] sm:$0xff] %v1052
        %1244 = vst [vmem:[%s1221 + $0xb0] sm:$0x1] %v1049
        %1245 = vst [vmem:[%s1221 + $0xb8] sm:$0x1] %v1051
        %1246 = vst [vmem:[%s1221 + $0xc0] sm:$0xfe] %v1053
        %1247 = vst [vmem:[%s1221 + $0xc8] sm:$0xfe] %v1054
        %1248 = vst [vmem:[%s1221 + $0xd0] sm:$0xff] %v1056
        %1249 = vst [vmem:[%s1221 + $0xd8] sm:$0xff] %v1058
        %1250 = vst [vmem:[%s1221 + $0xe0] sm:$0x1] %v1055
        %1251 = vst [vmem:[%s1221 + $0xe8] sm:$0x1] %v1057
        %1252 = vst [vmem:[%s1221 + $0xf0] sm:$0xfe] %v1059
        %1253 = vst [vmem:[%s1221 + $0xf8] sm:$0xfe] %v1060
        %1254 = vst [vmem:[%s1221 + $0x100] sm:$0xff] %v1062
        %1255 = vst [vmem:[%s1221 + $0x108] sm:$0xff] %v1064
        %1256 = vst [vmem:[%s1221 + $0x110] sm:$0x1] %v1061
        %1257 = vst [vmem:[%s1221 + $0x118] sm:$0x1] %v1063
        %1258 = vst [vmem:[%s1221 + $0x120] sm:$0xfe] %v1065
        %1259 = vst [vmem:[%s1221 + $0x128] sm:$0xfe] %v1066
        %1260 = vst [vmem:[%s1221 + $0x130] sm:$0xff] %v1068
        %1261 = vst [vmem:[%s1221 + $0x138] sm:$0xff] %v1070
        %1262 = vst [vmem:[%s1221 + $0x140] sm:$0x1] %v1067
        %1263 = vst [vmem:[%s1221 + $0x148] sm:$0x1] %v1069
        %1264 = vst [vmem:[%s1221 + $0x150] sm:$0xfe] %v1071
        %1265 = vst [vmem:[%s1221 + $0x158] sm:$0xfe] %v1072
        %1266 = vst [vmem:[%s1221 + $0x160] sm:$0xff] %v1074
        %1267 = vst [vmem:[%s1221 + $0x168] sm:$0xff] %v1076
        %1268 = vst [vmem:[%s1221 + $0x170] sm:$0x1] %v1073
        %1269 = vst [vmem:[%s1221 + $0x178] sm:$0x1] %v1075
        %1270 = vst [vmem:[%s1221 + $0x180] sm:$0xfe] %v1077
        %1271 = vst [vmem:[%s1221 + $0x188] sm:$0xfe] %v1078
        %1272 = vst [vmem:[%s1221 + $0x190] sm:$0xff] %v1080
        %1273 = vst [vmem:[%s1221 + $0x198] sm:$0xff] %v1082
        %1274 = vst [vmem:[%s1221 + $0x1a0] sm:$0x1] %v1079
        %1275 = vst [vmem:[%s1221 + $0x1a8] sm:$0x1] %v1081
        %1276 = vst [vmem:[%s1221 + $0x1b0] sm:$0xfe] %v1083
        %1277 = vst [vmem:[%s1221 + $0x1b8] sm:$0xfe] %v1084
        %1278 = vst [vmem:[%s1221 + $0x1c0] sm:$0xff] %v1086
        %1279 = vst [vmem:[%s1221 + $0x1c8] sm:$0xff] %v1088
        %1280 = vst [vmem:[%s1221 + $0x1d0] sm:$0x1] %v1085
        %1281 = vst [vmem:[%s1221 + $0x1d8] sm:$0x1] %v1087
        %1282 = vst [vmem:[%s1221 + $0x1e0] sm:$0xfe] %v1089
        %1283 = vst [vmem:[%s1221 + $0x1e8] sm:$0xfe] %v1090
        %1284 = vst [vmem:[%s1221 + $0x1f0] sm:$0xff] %v1092
        %1285 = vst [vmem:[%s1221 + $0x1f8] sm:$0xff] %v1094
        %1286 = vst [vmem:[%s1221 + $0x200] sm:$0x1] %v1091
        %1287 = vst [vmem:[%s1221 + $0x208] sm:$0x1] %v1093
        %1288 = vst [vmem:[%s1221 + $0x210] sm:$0xfe] %v1095
        %1289 = vst [vmem:[%s1221 + $0x218] sm:$0xfe] %v1096
        %1290 = vst [vmem:[%s1221 + $0x220] sm:$0xff] %v1098
        %1291 = vst [vmem:[%s1221 + $0x228] sm:$0xff] %v1100
        %1292 = vst [vmem:[%s1221 + $0x230] sm:$0x1] %v1097
        %1293 = vst [vmem:[%s1221 + $0x238] sm:$0x1] %v1099
        %1294 = vst [vmem:[%s1221 + $0x240] sm:$0xfe] %v1101
        %1295 = vst [vmem:[%s1221 + $0x248] sm:$0xfe] %v1102
        %1296 = vst [vmem:[%s1221 + $0x250] sm:$0xff] %v1104
        %1297 = vst [vmem:[%s1221 + $0x258] sm:$0xff] %v1106
        %1298 = vst [vmem:[%s1221 + $0x260] sm:$0x1] %v1103
        %1299 = vst [vmem:[%s1221 + $0x268] sm:$0x1] %v1105
        %1300 = vst [vmem:[%s1221 + $0x270] sm:$0xfe] %v1107
        %1301 = vst [vmem:[%s1221 + $0x278] sm:$0xfe] %v1108
        %1302 = vst [vmem:[%s1221 + $0x280] sm:$0xff] %v1110
        %1303 = vst [vmem:[%s1221 + $0x288] sm:$0xff] %v1112
        %1304 = vst [vmem:[%s1221 + $0x290] sm:$0x1] %v1109
        %1305 = vst [vmem:[%s1221 + $0x298] sm:$0x1] %v1111
        %1306 = vst [vmem:[%s1221 + $0x2a0] sm:$0xfe] %v1113
        %1307 = vst [vmem:[%s1221 + $0x2a8] sm:$0xfe] %v1114
        %1308 = vst [vmem:[%s1221 + $0x2b0] sm:$0xff] %v1116
        %1309 = vst [vmem:[%s1221 + $0x2b8] sm:$0xff] %v1118
        %1310 = vst [vmem:[%s1221 + $0x2c0] sm:$0x1] %v1115
        %1311 = vst [vmem:[%s1221 + $0x2c8] sm:$0x1] %v1117
        %1312 = vst [vmem:[%s1221 + $0x2d0] sm:$0xfe] %v1119
        %1313 = vst [vmem:[%s1221 + $0x2d8] sm:$0xfe] %v1120
        %1314 = vst [vmem:[%s1221 + $0x2e0] sm:$0xff] %v1122
        %1315 = vst [vmem:[%s1221 + $0x2e8] sm:$0xff] %v1124
        %1316 = vst [vmem:[%s1221 + $0x2f0] sm:$0x1] %v1121
        %1317 = vst [vmem:[%s1221 + $0x2f8] sm:$0x1] %v1123
        %v1318 = vld [vmem:[#allocation9] sm:$0x3]
        %v1319 = vld [vmem:[#allocation9 + $0x2] sm:$0x3]
        %v1320 = vld [vmem:[#allocation9 + $0x4] sm:$0x3]
        %v1321 = vld [vmem:[#allocation9 + $0x6] sm:$0x3]
        %v1322 = vld [vmem:[#allocation9 + $0x8] sm:$0x3]
        %v1323 = vld [vmem:[#allocation9 + $0xa] sm:$0x3]
        %v1324 = vld [vmem:[#allocation9 + $0xc] sm:$0x3]
        %v1325 = vld [vmem:[#allocation9 + $0xe] sm:$0x3]
        %v1326 = vld [vmem:[#allocation9 + $0x10] sm:$0x3]
        %v1327 = vld [vmem:[#allocation2] sm:$0xff]
        %v1328 = vld [vmem:[#allocation2 + $0x8] sm:$0xff]
        %v1329 = vld [vmem:[#allocation2 + $0x10] sm:$0xff]
        %v1330 = vld [vmem:[#allocation2 + $0x18] sm:$0xff]
        %v1331 = vld [vmem:[#allocation2 + $0x30] sm:$0xff]
        %v1332 = vld [vmem:[#allocation2 + $0x38] sm:$0xff]
        %v1333 = vld [vmem:[#allocation2 + $0x40] sm:$0xff]
        %v1334 = vld [vmem:[#allocation2 + $0x48] sm:$0xff]
        %v1335 = vld [vmem:[#allocation2 + $0x60] sm:$0xff]
        %v1336 = vld [vmem:[#allocation2 + $0x68] sm:$0xff]
        %v1337 = vld [vmem:[#allocation2 + $0x70] sm:$0xff]
        %v1338 = vld [vmem:[#allocation2 + $0x78] sm:$0xff]
        %v1339 = vld [vmem:[#allocation2 + $0x90] sm:$0xff]
        %v1340 = vld [vmem:[#allocation2 + $0x98] sm:$0xff]
        %v1341 = vld [vmem:[#allocation2 + $0xa0] sm:$0xff]
        %v1342 = vld [vmem:[#allocation2 + $0xa8] sm:$0xff]
        %v1343 = vld [vmem:[#allocation2 + $0xc0] sm:$0xff]
        %v1344 = vld [vmem:[#allocation2 + $0xc8] sm:$0xff]
        %v1345 = vld [vmem:[#allocation2 + $0xd0] sm:$0xff]
        %v1346 = vld [vmem:[#allocation2 + $0xd8] sm:$0xff]
        %v1347 = vld [vmem:[#allocation2 + $0xf0] sm:$0xff]
        %v1348 = vld [vmem:[#allocation2 + $0xf8] sm:$0xff]
        %v1349 = vld [vmem:[#allocation2 + $0x100] sm:$0xff]
        %v1350 = vld [vmem:[#allocation2 + $0x108] sm:$0xff]
        %v1351 = vld [vmem:[#allocation2 + $0x120] sm:$0xff]
        %v1352 = vld [vmem:[#allocation2 + $0x128] sm:$0xff]
        %v1353 = vld [vmem:[#allocation2 + $0x130] sm:$0xff]
        %v1354 = vld [vmem:[#allocation2 + $0x138] sm:$0xff]
        %v1355 = vld [vmem:[#allocation2 + $0x150] sm:$0xff]
        %v1356 = vld [vmem:[#allocation2 + $0x158] sm:$0xff]
        %v1357 = vld [vmem:[#allocation2 + $0x160] sm:$0xff]
        %v1358 = vld [vmem:[#allocation2 + $0x168] sm:$0xff]
        %v1359 = vld [vmem:[#allocation2 + $0x180] sm:$0xff]
        %v1360 = vld [vmem:[#allocation2 + $0x188] sm:$0xff]
        %v1361 = vld [vmem:[#allocation2 + $0x190] sm:$0xff]
        %v1362 = vld [vmem:[#allocation2 + $0x198] sm:$0xff]
        %v1363 = vld [vmem:[#allocation2 + $0x1b0] sm:$0xff]
        %v1364 = vld [vmem:[#allocation2 + $0x1b8] sm:$0xff]
        %v1365 = vld [vmem:[#allocation2 + $0x1c0] sm:$0xff]
        %v1366 = vld [vmem:[#allocation2 + $0x1c8] sm:$0xff]
        %v1367 = vld [vmem:[#allocation2 + $0x1e0] sm:$0xff]
        %v1368 = vld [vmem:[#allocation2 + $0x1e8] sm:$0xff]
        %v1369 = vld [vmem:[#allocation2 + $0x1f0] sm:$0xff]
        %v1370 = vld [vmem:[#allocation2 + $0x1f8] sm:$0xff]
        %v1371 = vld [vmem:[#allocation2 + $0x210] sm:$0xff]
        %v1372 = vld [vmem:[#allocation2 + $0x218] sm:$0xff]
        %v1373 = vld [vmem:[#allocation2 + $0x220] sm:$0xff]
        %v1374 = vld [vmem:[#allocation2 + $0x228] sm:$0xff]
        %v1375 = vld [vmem:[#allocation2 + $0x240] sm:$0xff]
        %v1376 = vld [vmem:[#allocation2 + $0x248] sm:$0xff]
        %v1377 = vld [vmem:[#allocation2 + $0x250] sm:$0xff]
        %v1378 = vld [vmem:[#allocation2 + $0x258] sm:$0xff]
        %v1379 = vld [vmem:[#allocation2 + $0x270] sm:$0xff]
        %v1380 = vld [vmem:[#allocation2 + $0x278] sm:$0xff]
        %v1381 = vld [vmem:[#allocation2 + $0x280] sm:$0xff]
        %v1382 = vld [vmem:[#allocation2 + $0x288] sm:$0xff]
        %v1383 = vld [vmem:[#allocation2 + $0x2a0] sm:$0xff]
        %v1384 = vld [vmem:[#allocation2 + $0x2a8] sm:$0xff]
        %v1385 = vld [vmem:[#allocation2 + $0x2b0] sm:$0xff]
        %v1386 = vld [vmem:[#allocation2 + $0x2b8] sm:$0xff]
        %v1387 = vld [vmem:[#allocation2 + $0x2d0] sm:$0xff]
        %v1388 = vld [vmem:[#allocation2 + $0x2d8] sm:$0xff]
        %v1389 = vld [vmem:[#allocation2 + $0x2e0] sm:$0xff]
        %v1390 = vld [vmem:[#allocation2 + $0x2e8] sm:$0xff]
        %v1392 = vlaneseq
        %v1393 = vshrl.u32 %v1392, 7
        %v1394 = vsub.s32 0, %v1393
        %v1395 = vrot.slane %v1318, %v1394
        %v1396 = vlaneseq
        %v1397 = vshrl.u32 %v1396, 7
        %v1398 = vsub.s32 1, %v1397
        %v1399 = vrot.slane %v1318, %v1398
        %v1402 = vmul.f32 %v1327, %v1395
        %v1403 = vmul.f32 %v1328, %v1399
        %v1404 = vmul.f32 %v1329, %v1395
        %v1405 = vmul.f32 %v1330, %v1399
        %v1406 = vmul.f32 %v1331, %v1395
        %v1407 = vmul.f32 %v1332, %v1399
        %v1408 = vmul.f32 %v1333, %v1395
        %v1409 = vmul.f32 %v1334, %v1399
        %v1410 = vmul.f32 %v1335, %v1395
        %v1411 = vmul.f32 %v1336, %v1399
        %v1412 = vmul.f32 %v1337, %v1395
        %v1413 = vmul.f32 %v1338, %v1399
        %v1414 = vmul.f32 %v1339, %v1395
        %v1415 = vmul.f32 %v1340, %v1399
        %v1416 = vmul.f32 %v1341, %v1395
        %v1417 = vmul.f32 %v1342, %v1399
        %v1418 = vmul.f32 %v1343, %v1395
        %v1419 = vmul.f32 %v1344, %v1399
        %v1420 = vmul.f32 %v1345, %v1395
        %v1421 = vmul.f32 %v1346, %v1399
        %v1422 = vmul.f32 %v1347, %v1395
        %v1423 = vmul.f32 %v1348, %v1399
        %v1424 = vmul.f32 %v1349, %v1395
        %v1425 = vmul.f32 %v1350, %v1399
        %v1426 = vmul.f32 %v1351, %v1395
        %v1427 = vmul.f32 %v1352, %v1399
        %v1428 = vmul.f32 %v1353, %v1395
        %v1429 = vmul.f32 %v1354, %v1399
        %v1430 = vmul.f32 %v1355, %v1395
        %v1431 = vmul.f32 %v1356, %v1399
        %v1432 = vmul.f32 %v1357, %v1395
        %v1433 = vmul.f32 %v1358, %v1399
        %v1434 = vmul.f32 %v1359, %v1395
        %v1435 = vmul.f32 %v1360, %v1399
        %v1436 = vmul.f32 %v1361, %v1395
        %v1437 = vmul.f32 %v1362, %v1399
        %v1438 = vmul.f32 %v1363, %v1395
        %v1439 = vmul.f32 %v1364, %v1399
        %v1440 = vmul.f32 %v1365, %v1395
        %v1441 = vmul.f32 %v1366, %v1399
        %v1442 = vmul.f32 %v1367, %v1395
        %v1443 = vmul.f32 %v1368, %v1399
        %v1444 = vmul.f32 %v1369, %v1395
        %v1445 = vmul.f32 %v1370, %v1399
        %v1446 = vmul.f32 %v1371, %v1395
        %v1447 = vmul.f32 %v1372, %v1399
        %v1448 = vmul.f32 %v1373, %v1395
        %v1449 = vmul.f32 %v1374, %v1399
        %v1450 = vmul.f32 %v1375, %v1395
        %v1451 = vmul.f32 %v1376, %v1399
        %v1452 = vmul.f32 %v1377, %v1395
        %v1453 = vmul.f32 %v1378, %v1399
        %v1454 = vmul.f32 %v1379, %v1395
        %v1455 = vmul.f32 %v1380, %v1399
        %v1456 = vmul.f32 %v1381, %v1395
        %v1457 = vmul.f32 %v1382, %v1399
        %v1458 = vmul.f32 %v1383, %v1395
        %v1459 = vmul.f32 %v1384, %v1399
        %v1460 = vmul.f32 %v1385, %v1395
        %v1461 = vmul.f32 %v1386, %v1399
        %v1462 = vmul.f32 %v1387, %v1395
        %v1463 = vmul.f32 %v1388, %v1399
        %v1464 = vmul.f32 %v1389, %v1395
        %v1465 = vmul.f32 %v1390, %v1399
        %v1466 = vadd.f32 %v1402, 0.0
        %v1467 = vadd.f32 %v1403, 0.0
        %v1468 = vadd.f32 %v1404, 0.0
        %v1469 = vadd.f32 %v1405, 0.0
        %v1470 = vadd.f32 %v1406, 0.0
        %v1471 = vadd.f32 %v1407, 0.0
        %v1472 = vadd.f32 %v1408, 0.0
        %v1473 = vadd.f32 %v1409, 0.0
        %v1474 = vadd.f32 %v1410, 0.0
        %v1475 = vadd.f32 %v1411, 0.0
        %v1476 = vadd.f32 %v1412, 0.0
        %v1477 = vadd.f32 %v1413, 0.0
        %v1478 = vadd.f32 %v1414, 0.0
        %v1479 = vadd.f32 %v1415, 0.0
        %v1480 = vadd.f32 %v1416, 0.0
        %v1481 = vadd.f32 %v1417, 0.0
        %v1482 = vadd.f32 %v1418, 0.0
        %v1483 = vadd.f32 %v1419, 0.0
        %v1484 = vadd.f32 %v1420, 0.0
        %v1485 = vadd.f32 %v1421, 0.0
        %v1486 = vadd.f32 %v1422, 0.0
        %v1487 = vadd.f32 %v1423, 0.0
        %v1488 = vadd.f32 %v1424, 0.0
        %v1489 = vadd.f32 %v1425, 0.0
        %v1490 = vadd.f32 %v1426, 0.0
        %v1491 = vadd.f32 %v1427, 0.0
        %v1492 = vadd.f32 %v1428, 0.0
        %v1493 = vadd.f32 %v1429, 0.0
        %v1494 = vadd.f32 %v1430, 0.0
        %v1495 = vadd.f32 %v1431, 0.0
        %v1496 = vadd.f32 %v1432, 0.0
        %v1497 = vadd.f32 %v1433, 0.0
        %v1498 = vadd.f32 %v1434, 0.0
        %v1499 = vadd.f32 %v1435, 0.0
        %v1500 = vadd.f32 %v1436, 0.0
        %v1501 = vadd.f32 %v1437, 0.0
        %v1502 = vadd.f32 %v1438, 0.0
        %v1503 = vadd.f32 %v1439, 0.0
        %v1504 = vadd.f32 %v1440, 0.0
        %v1505 = vadd.f32 %v1441, 0.0
        %v1506 = vadd.f32 %v1442, 0.0
        %v1507 = vadd.f32 %v1443, 0.0
        %v1508 = vadd.f32 %v1444, 0.0
        %v1509 = vadd.f32 %v1445, 0.0
        %v1510 = vadd.f32 %v1446, 0.0
        %v1511 = vadd.f32 %v1447, 0.0
        %v1512 = vadd.f32 %v1448, 0.0
        %v1513 = vadd.f32 %v1449, 0.0
        %v1514 = vadd.f32 %v1450, 0.0
        %v1515 = vadd.f32 %v1451, 0.0
        %v1516 = vadd.f32 %v1452, 0.0
        %v1517 = vadd.f32 %v1453, 0.0
        %v1518 = vadd.f32 %v1454, 0.0
        %v1519 = vadd.f32 %v1455, 0.0
        %v1520 = vadd.f32 %v1456, 0.0
        %v1521 = vadd.f32 %v1457, 0.0
        %v1522 = vadd.f32 %v1458, 0.0
        %v1523 = vadd.f32 %v1459, 0.0
        %v1524 = vadd.f32 %v1460, 0.0
        %v1525 = vadd.f32 %v1461, 0.0
        %v1526 = vadd.f32 %v1462, 0.0
        %v1527 = vadd.f32 %v1463, 0.0
        %v1528 = vadd.f32 %v1464, 0.0
        %v1529 = vadd.f32 %v1465, 0.0
        %v1530 = vld [vmem:[#allocation2] sm:$0xfe]
        %v1531 = vld [vmem:[#allocation2 + $0x8] sm:$0xfe]
        %v1532 = vld [vmem:[#allocation2 + $0x20] sm:$0x1]
        %v1533 = vld [vmem:[#allocation2 + $0x28] sm:$0x1]
        %v1534 = vld [vmem:[#allocation2 + $0x30] sm:$0xfe]
        %v1535 = vld [vmem:[#allocation2 + $0x38] sm:$0xfe]
        %v1536 = vld [vmem:[#allocation2 + $0x50] sm:$0x1]
        %v1537 = vld [vmem:[#allocation2 + $0x58] sm:$0x1]
        %v1538 = vld [vmem:[#allocation2 + $0x60] sm:$0xfe]
        %v1539 = vld [vmem:[#allocation2 + $0x68] sm:$0xfe]
        %v1540 = vld [vmem:[#allocation2 + $0x80] sm:$0x1]
        %v1541 = vld [vmem:[#allocation2 + $0x88] sm:$0x1]
        %v1542 = vld [vmem:[#allocation2 + $0x90] sm:$0xfe]
        %v1543 = vld [vmem:[#allocation2 + $0x98] sm:$0xfe]
        %v1544 = vld [vmem:[#allocation2 + $0xb0] sm:$0x1]
        %v1545 = vld [vmem:[#allocation2 + $0xb8] sm:$0x1]
        %v1546 = vld [vmem:[#allocation2 + $0xc0] sm:$0xfe]
        %v1547 = vld [vmem:[#allocation2 + $0xc8] sm:$0xfe]
        %v1548 = vld [vmem:[#allocation2 + $0xe0] sm:$0x1]
        %v1549 = vld [vmem:[#allocation2 + $0xe8] sm:$0x1]
        %v1550 = vld [vmem:[#allocation2 + $0xf0] sm:$0xfe]
        %v1551 = vld [vmem:[#allocation2 + $0xf8] sm:$0xfe]
        %v1552 = vld [vmem:[#allocation2 + $0x110] sm:$0x1]
        %v1553 = vld [vmem:[#allocation2 + $0x118] sm:$0x1]
        %v1554 = vld [vmem:[#allocation2 + $0x120] sm:$0xfe]
        %v1555 = vld [vmem:[#allocation2 + $0x128] sm:$0xfe]
        %v1556 = vld [vmem:[#allocation2 + $0x140] sm:$0x1]
        %v1557 = vld [vmem:[#allocation2 + $0x148] sm:$0x1]
        %v1558 = vld [vmem:[#allocation2 + $0x150] sm:$0xfe]
        %v1559 = vld [vmem:[#allocation2 + $0x158] sm:$0xfe]
        %v1560 = vld [vmem:[#allocation2 + $0x170] sm:$0x1]
        %v1561 = vld [vmem:[#allocation2 + $0x178] sm:$0x1]
        %v1562 = vld [vmem:[#allocation2 + $0x180] sm:$0xfe]
        %v1563 = vld [vmem:[#allocation2 + $0x188] sm:$0xfe]
        %v1564 = vld [vmem:[#allocation2 + $0x1a0] sm:$0x1]
        %v1565 = vld [vmem:[#allocation2 + $0x1a8] sm:$0x1]
        %v1566 = vld [vmem:[#allocation2 + $0x1b0] sm:$0xfe]
        %v1567 = vld [vmem:[#allocation2 + $0x1b8] sm:$0xfe]
        %v1568 = vld [vmem:[#allocation2 + $0x1d0] sm:$0x1]
        %v1569 = vld [vmem:[#allocation2 + $0x1d8] sm:$0x1]
        %v1570 = vld [vmem:[#allocation2 + $0x1e0] sm:$0xfe]
        %v1571 = vld [vmem:[#allocation2 + $0x1e8] sm:$0xfe]
        %v1572 = vld [vmem:[#allocation2 + $0x200] sm:$0x1]
        %v1573 = vld [vmem:[#allocation2 + $0x208] sm:$0x1]
        %v1574 = vld [vmem:[#allocation2 + $0x210] sm:$0xfe]
        %v1575 = vld [vmem:[#allocation2 + $0x218] sm:$0xfe]
        %v1576 = vld [vmem:[#allocation2 + $0x230] sm:$0x1]
        %v1577 = vld [vmem:[#allocation2 + $0x238] sm:$0x1]
        %v1578 = vld [vmem:[#allocation2 + $0x240] sm:$0xfe]
        %v1579 = vld [vmem:[#allocation2 + $0x248] sm:$0xfe]
        %v1580 = vld [vmem:[#allocation2 + $0x260] sm:$0x1]
        %v1581 = vld [vmem:[#allocation2 + $0x268] sm:$0x1]
        %v1582 = vld [vmem:[#allocation2 + $0x270] sm:$0xfe]
        %v1583 = vld [vmem:[#allocation2 + $0x278] sm:$0xfe]
        %v1584 = vld [vmem:[#allocation2 + $0x290] sm:$0x1]
        %v1585 = vld [vmem:[#allocation2 + $0x298] sm:$0x1]
        %v1586 = vld [vmem:[#allocation2 + $0x2a0] sm:$0xfe]
        %v1587 = vld [vmem:[#allocation2 + $0x2a8] sm:$0xfe]
        %v1588 = vld [vmem:[#allocation2 + $0x2c0] sm:$0x1]
        %v1589 = vld [vmem:[#allocation2 + $0x2c8] sm:$0x1]
        %v1590 = vld [vmem:[#allocation2 + $0x2d0] sm:$0xfe]
        %v1591 = vld [vmem:[#allocation2 + $0x2d8] sm:$0xfe]
        %v1592 = vld [vmem:[#allocation2 + $0x2f0] sm:$0x1]
        %v1593 = vld [vmem:[#allocation2 + $0x2f8] sm:$0x1]
        %v1595 = vlaneseq
        %v1596 = vshrl.u32 %v1595, 7
        %v1597 = vsub.s32 0, %v1596
        %v1598 = vrot.slane %v1319, %v1597
        %v1599 = vlaneseq
        %v1600 = vshrl.u32 %v1599, 7
        %v1601 = vsub.s32 1, %v1600
        %v1602 = vrot.slane %v1319, %v1601
        %v1605 = vmul.f32 %v1530, %v1598
        %v1606 = vmul.f32 %v1531, %v1602
        %v1607 = vmul.f32 %v1329, %v1598
        %v1608 = vmul.f32 %v1330, %v1602
        %v1609 = vmul.f32 %v1532, %v1598
        %v1610 = vmul.f32 %v1533, %v1602
        %v1611 = vmul.f32 %v1534, %v1598
        %v1612 = vmul.f32 %v1535, %v1602
        %v1613 = vmul.f32 %v1333, %v1598
        %v1614 = vmul.f32 %v1334, %v1602
        %v1615 = vmul.f32 %v1536, %v1598
        %v1616 = vmul.f32 %v1537, %v1602
        %v1617 = vmul.f32 %v1538, %v1598
        %v1618 = vmul.f32 %v1539, %v1602
        %v1619 = vmul.f32 %v1337, %v1598
        %v1620 = vmul.f32 %v1338, %v1602
        %v1621 = vmul.f32 %v1540, %v1598
        %v1622 = vmul.f32 %v1541, %v1602
        %v1623 = vmul.f32 %v1542, %v1598
        %v1624 = vmul.f32 %v1543, %v1602
        %v1625 = vmul.f32 %v1341, %v1598
        %v1626 = vmul.f32 %v1342, %v1602
        %v1627 = vmul.f32 %v1544, %v1598
        %v1628 = vmul.f32 %v1545, %v1602
        %v1629 = vmul.f32 %v1546, %v1598
        %v1630 = vmul.f32 %v1547, %v1602
        %v1631 = vmul.f32 %v1345, %v1598
        %v1632 = vmul.f32 %v1346, %v1602
        %v1633 = vmul.f32 %v1548, %v1598
        %v1634 = vmul.f32 %v1549, %v1602
        %v1635 = vmul.f32 %v1550, %v1598
        %v1636 = vmul.f32 %v1551, %v1602
        %v1637 = vmul.f32 %v1349, %v1598
        %v1638 = vmul.f32 %v1350, %v1602
        %v1639 = vmul.f32 %v1552, %v1598
        %v1640 = vmul.f32 %v1553, %v1602
        %v1641 = vmul.f32 %v1554, %v1598
        %v1642 = vmul.f32 %v1555, %v1602
        %v1643 = vmul.f32 %v1353, %v1598
        %v1644 = vmul.f32 %v1354, %v1602
        %v1645 = vmul.f32 %v1556, %v1598
        %v1646 = vmul.f32 %v1557, %v1602
        %v1647 = vmul.f32 %v1558, %v1598
        %v1648 = vmul.f32 %v1559, %v1602
        %v1649 = vmul.f32 %v1357, %v1598
        %v1650 = vmul.f32 %v1358, %v1602
        %v1651 = vmul.f32 %v1560, %v1598
        %v1652 = vmul.f32 %v1561, %v1602
        %v1653 = vmul.f32 %v1562, %v1598
        %v1654 = vmul.f32 %v1563, %v1602
        %v1655 = vmul.f32 %v1361, %v1598
        %v1656 = vmul.f32 %v1362, %v1602
        %v1657 = vmul.f32 %v1564, %v1598
        %v1658 = vmul.f32 %v1565, %v1602
        %v1659 = vmul.f32 %v1566, %v1598
        %v1660 = vmul.f32 %v1567, %v1602
        %v1661 = vmul.f32 %v1365, %v1598
        %v1662 = vmul.f32 %v1366, %v1602
        %v1663 = vmul.f32 %v1568, %v1598
        %v1664 = vmul.f32 %v1569, %v1602
        %v1665 = vmul.f32 %v1570, %v1598
        %v1666 = vmul.f32 %v1571, %v1602
        %v1667 = vmul.f32 %v1369, %v1598
        %v1668 = vmul.f32 %v1370, %v1602
        %v1669 = vmul.f32 %v1572, %v1598
        %v1670 = vmul.f32 %v1573, %v1602
        %v1671 = vmul.f32 %v1574, %v1598
        %v1672 = vmul.f32 %v1575, %v1602
        %v1673 = vmul.f32 %v1373, %v1598
        %v1674 = vmul.f32 %v1374, %v1602
        %v1675 = vmul.f32 %v1576, %v1598
        %v1676 = vmul.f32 %v1577, %v1602
        %v1677 = vmul.f32 %v1578, %v1598
        %v1678 = vmul.f32 %v1579, %v1602
        %v1679 = vmul.f32 %v1377, %v1598
        %v1680 = vmul.f32 %v1378, %v1602
        %v1681 = vmul.f32 %v1580, %v1598
        %v1682 = vmul.f32 %v1581, %v1602
        %v1683 = vmul.f32 %v1582, %v1598
        %v1684 = vmul.f32 %v1583, %v1602
        %v1685 = vmul.f32 %v1381, %v1598
        %v1686 = vmul.f32 %v1382, %v1602
        %v1687 = vmul.f32 %v1584, %v1598
        %v1688 = vmul.f32 %v1585, %v1602
        %v1689 = vmul.f32 %v1586, %v1598
        %v1690 = vmul.f32 %v1587, %v1602
        %v1691 = vmul.f32 %v1385, %v1598
        %v1692 = vmul.f32 %v1386, %v1602
        %v1693 = vmul.f32 %v1588, %v1598
        %v1694 = vmul.f32 %v1589, %v1602
        %v1695 = vmul.f32 %v1590, %v1598
        %v1696 = vmul.f32 %v1591, %v1602
        %v1697 = vmul.f32 %v1389, %v1598
        %v1698 = vmul.f32 %v1390, %v1602
        %v1699 = vmul.f32 %v1592, %v1598
        %v1700 = vmul.f32 %v1593, %v1602
        %vm1797 = vcmask 1046528
        %v1798 = vrot.slane %v1605, 1
        %v1799 = vrot.slane %v1607, 1
        %v1800 = vsel %vm1797, %v1798, %v1799
        %v1801 = vrot.slane %v1606, 1
        %v1802 = vrot.slane %v1608, 1
        %v1803 = vsel %vm1797, %v1801, %v1802
        %v1804 = vrot.slane %v1609, 1
        %v1805 = vsel %vm1797, %v1799, %v1804
        %v1806 = vrot.slane %v1610, 1
        %v1807 = vsel %vm1797, %v1802, %v1806
        %v1808 = vrot.slane %v1611, 1
        %v1809 = vrot.slane %v1613, 1
        %v1810 = vsel %vm1797, %v1808, %v1809
        %v1811 = vrot.slane %v1612, 1
        %v1812 = vrot.slane %v1614, 1
        %v1813 = vsel %vm1797, %v1811, %v1812
        %v1814 = vrot.slane %v1615, 1
        %v1815 = vsel %vm1797, %v1809, %v1814
        %v1816 = vrot.slane %v1616, 1
        %v1817 = vsel %vm1797, %v1812, %v1816
        %v1818 = vrot.slane %v1617, 1
        %v1819 = vrot.slane %v1619, 1
        %v1820 = vsel %vm1797, %v1818, %v1819
        %v1821 = vrot.slane %v1618, 1
        %v1822 = vrot.slane %v1620, 1
        %v1823 = vsel %vm1797, %v1821, %v1822
        %v1824 = vrot.slane %v1621, 1
        %v1825 = vsel %vm1797, %v1819, %v1824
        %v1826 = vrot.slane %v1622, 1
        %v1827 = vsel %vm1797, %v1822, %v1826
        %v1828 = vrot.slane %v1623, 1
        %v1829 = vrot.slane %v1625, 1
        %v1830 = vsel %vm1797, %v1828, %v1829
        %v1831 = vrot.slane %v1624, 1
        %v1832 = vrot.slane %v1626, 1
        %v1833 = vsel %vm1797, %v1831, %v1832
        %v1834 = vrot.slane %v1627, 1
        %v1835 = vsel %vm1797, %v1829, %v1834
        %v1836 = vrot.slane %v1628, 1
        %v1837 = vsel %vm1797, %v1832, %v1836
        %v1838 = vrot.slane %v1629, 1
        %v1839 = vrot.slane %v1631, 1
        %v1840 = vsel %vm1797, %v1838, %v1839
        %v1841 = vrot.slane %v1630, 1
        %v1842 = vrot.slane %v1632, 1
        %v1843 = vsel %vm1797, %v1841, %v1842
        %v1844 = vrot.slane %v1633, 1
        %v1845 = vsel %vm1797, %v1839, %v1844
        %v1846 = vrot.slane %v1634, 1
        %v1847 = vsel %vm1797, %v1842, %v1846
        %v1848 = vrot.slane %v1635, 1
        %v1849 = vrot.slane %v1637, 1
        %v1850 = vsel %vm1797, %v1848, %v1849
        %v1851 = vrot.slane %v1636, 1
        %v1852 = vrot.slane %v1638, 1
        %v1853 = vsel %vm1797, %v1851, %v1852
        %v1854 = vrot.slane %v1639, 1
        %v1855 = vsel %vm1797, %v1849, %v1854
        %v1856 = vrot.slane %v1640, 1
        %v1857 = vsel %vm1797, %v1852, %v1856
        %v1858 = vrot.slane %v1641, 1
        %v1859 = vrot.slane %v1643, 1
        %v1860 = vsel %vm1797, %v1858, %v1859
        %v1861 = vrot.slane %v1642, 1
        %v1862 = vrot.slane %v1644, 1
        %v1863 = vsel %vm1797, %v1861, %v1862
        %v1864 = vrot.slane %v1645, 1
        %v1865 = vsel %vm1797, %v1859, %v1864
        %v1866 = vrot.slane %v1646, 1
        %v1867 = vsel %vm1797, %v1862, %v1866
        %v1868 = vrot.slane %v1647, 1
        %v1869 = vrot.slane %v1649, 1
        %v1870 = vsel %vm1797, %v1868, %v1869
        %v1871 = vrot.slane %v1648, 1
        %v1872 = vrot.slane %v1650, 1
        %v1873 = vsel %vm1797, %v1871, %v1872
        %v1874 = vrot.slane %v1651, 1
        %v1875 = vsel %vm1797, %v1869, %v1874
        %v1876 = vrot.slane %v1652, 1
        %v1877 = vsel %vm1797, %v1872, %v1876
        %v1878 = vrot.slane %v1653, 1
        %v1879 = vrot.slane %v1655, 1
        %v1880 = vsel %vm1797, %v1878, %v1879
        %v1881 = vrot.slane %v1654, 1
        %v1882 = vrot.slane %v1656, 1
        %v1883 = vsel %vm1797, %v1881, %v1882
        %v1884 = vrot.slane %v1657, 1
        %v1885 = vsel %vm1797, %v1879, %v1884
        %v1886 = vrot.slane %v1658, 1
        %v1887 = vsel %vm1797, %v1882, %v1886
        %v1888 = vrot.slane %v1659, 1
        %v1889 = vrot.slane %v1661, 1
        %v1890 = vsel %vm1797, %v1888, %v1889
        %v1891 = vrot.slane %v1660, 1
        %v1892 = vrot.slane %v1662, 1
        %v1893 = vsel %vm1797, %v1891, %v1892
        %v1894 = vrot.slane %v1663, 1
        %v1895 = vsel %vm1797, %v1889, %v1894
        %v1896 = vrot.slane %v1664, 1
        %v1897 = vsel %vm1797, %v1892, %v1896
        %v1898 = vrot.slane %v1665, 1
        %v1899 = vrot.slane %v1667, 1
        %v1900 = vsel %vm1797, %v1898, %v1899
        %v1901 = vrot.slane %v1666, 1
        %v1902 = vrot.slane %v1668, 1
        %v1903 = vsel %vm1797, %v1901, %v1902
        %v1904 = vrot.slane %v1669, 1
        %v1905 = vsel %vm1797, %v1899, %v1904
        %v1906 = vrot.slane %v1670, 1
        %v1907 = vsel %vm1797, %v1902, %v1906
        %v1908 = vrot.slane %v1671, 1
        %v1909 = vrot.slane %v1673, 1
        %v1910 = vsel %vm1797, %v1908, %v1909
        %v1911 = vrot.slane %v1672, 1
        %v1912 = vrot.slane %v1674, 1
        %v1913 = vsel %vm1797, %v1911, %v1912
        %v1914 = vrot.slane %v1675, 1
        %v1915 = vsel %vm1797, %v1909, %v1914
        %v1916 = vrot.slane %v1676, 1
        %v1917 = vsel %vm1797, %v1912, %v1916
        %v1918 = vrot.slane %v1677, 1
        %v1919 = vrot.slane %v1679, 1
        %v1920 = vsel %vm1797, %v1918, %v1919
        %v1921 = vrot.slane %v1678, 1
        %v1922 = vrot.slane %v1680, 1
        %v1923 = vsel %vm1797, %v1921, %v1922
        %v1924 = vrot.slane %v1681, 1
        %v1925 = vsel %vm1797, %v1919, %v1924
        %v1926 = vrot.slane %v1682, 1
        %v1927 = vsel %vm1797, %v1922, %v1926
        %v1928 = vrot.slane %v1683, 1
        %v1929 = vrot.slane %v1685, 1
        %v1930 = vsel %vm1797, %v1928, %v1929
        %v1931 = vrot.slane %v1684, 1
        %v1932 = vrot.slane %v1686, 1
        %v1933 = vsel %vm1797, %v1931, %v1932
        %v1934 = vrot.slane %v1687, 1
        %v1935 = vsel %vm1797, %v1929, %v1934
        %v1936 = vrot.slane %v1688, 1
        %v1937 = vsel %vm1797, %v1932, %v1936
        %v1938 = vrot.slane %v1689, 1
        %v1939 = vrot.slane %v1691, 1
        %v1940 = vsel %vm1797, %v1938, %v1939
        %v1941 = vrot.slane %v1690, 1
        %v1942 = vrot.slane %v1692, 1
        %v1943 = vsel %vm1797, %v1941, %v1942
        %v1944 = vrot.slane %v1693, 1
        %v1945 = vsel %vm1797, %v1939, %v1944
        %v1946 = vrot.slane %v1694, 1
        %v1947 = vsel %vm1797, %v1942, %v1946
        %v1948 = vrot.slane %v1695, 1
        %v1949 = vrot.slane %v1697, 1
        %v1950 = vsel %vm1797, %v1948, %v1949
        %v1951 = vrot.slane %v1696, 1
        %v1952 = vrot.slane %v1698, 1
        %v1953 = vsel %vm1797, %v1951, %v1952
        %v1954 = vrot.slane %v1699, 1
        %v1955 = vsel %vm1797, %v1949, %v1954
        %v1956 = vrot.slane %v1700, 1
        %v1957 = vsel %vm1797, %v1952, %v1956
        %v2022 = vadd.f32 %v1466, %v1800
        %v2023 = vadd.f32 %v1467, %v1803
        %v2024 = vadd.f32 %v1468, %v1805
        %v2025 = vadd.f32 %v1469, %v1807
        %v2026 = vadd.f32 %v1470, %v1810
        %v2027 = vadd.f32 %v1471, %v1813
        %v2028 = vadd.f32 %v1472, %v1815
        %v2029 = vadd.f32 %v1473, %v1817
        %v2030 = vadd.f32 %v1474, %v1820
        %v2031 = vadd.f32 %v1475, %v1823
        %v2032 = vadd.f32 %v1476, %v1825
        %v2033 = vadd.f32 %v1477, %v1827
        %v2034 = vadd.f32 %v1478, %v1830
        %v2035 = vadd.f32 %v1479, %v1833
        %v2036 = vadd.f32 %v1480, %v1835
        %v2037 = vadd.f32 %v1481, %v1837
        %v2038 = vadd.f32 %v1482, %v1840
        %v2039 = vadd.f32 %v1483, %v1843
        %v2040 = vadd.f32 %v1484, %v1845
        %v2041 = vadd.f32 %v1485, %v1847
        %v2042 = vadd.f32 %v1486, %v1850
        %v2043 = vadd.f32 %v1487, %v1853
        %v2044 = vadd.f32 %v1488, %v1855
        %v2045 = vadd.f32 %v1489, %v1857
        %v2046 = vadd.f32 %v1490, %v1860
        %v2047 = vadd.f32 %v1491, %v1863
        %v2048 = vadd.f32 %v1492, %v1865
        %v2049 = vadd.f32 %v1493, %v1867
        %v2050 = vadd.f32 %v1494, %v1870
        %v2051 = vadd.f32 %v1495, %v1873
        %v2052 = vadd.f32 %v1496, %v1875
        %v2053 = vadd.f32 %v1497, %v1877
        %v2054 = vadd.f32 %v1498, %v1880
        %v2055 = vadd.f32 %v1499, %v1883
        %v2056 = vadd.f32 %v1500, %v1885
        %v2057 = vadd.f32 %v1501, %v1887
        %v2058 = vadd.f32 %v1502, %v1890
        %v2059 = vadd.f32 %v1503, %v1893
        %v2060 = vadd.f32 %v1504, %v1895
        %v2061 = vadd.f32 %v1505, %v1897
        %v2062 = vadd.f32 %v1506, %v1900
        %v2063 = vadd.f32 %v1507, %v1903
        %v2064 = vadd.f32 %v1508, %v1905
        %v2065 = vadd.f32 %v1509, %v1907
        %v2066 = vadd.f32 %v1510, %v1910
        %v2067 = vadd.f32 %v1511, %v1913
        %v2068 = vadd.f32 %v1512, %v1915
        %v2069 = vadd.f32 %v1513, %v1917
        %v2070 = vadd.f32 %v1514, %v1920
        %v2071 = vadd.f32 %v1515, %v1923
        %v2072 = vadd.f32 %v1516, %v1925
        %v2073 = vadd.f32 %v1517, %v1927
        %v2074 = vadd.f32 %v1518, %v1930
        %v2075 = vadd.f32 %v1519, %v1933
        %v2076 = vadd.f32 %v1520, %v1935
        %v2077 = vadd.f32 %v1521, %v1937
        %v2078 = vadd.f32 %v1522, %v1940
        %v2079 = vadd.f32 %v1523, %v1943
        %v2080 = vadd.f32 %v1524, %v1945
        %v2081 = vadd.f32 %v1525, %v1947
        %v2082 = vadd.f32 %v1526, %v1950
        %v2083 = vadd.f32 %v1527, %v1953
        %v2084 = vadd.f32 %v1528, %v1955
        %v2085 = vadd.f32 %v1529, %v1957
        %v2086 = vld [vmem:[#allocation2] sm:$0xfc]
        %v2087 = vld [vmem:[#allocation2 + $0x8] sm:$0xfc]
        %v2088 = vld [vmem:[#allocation2 + $0x20] sm:$0x3]
        %v2089 = vld [vmem:[#allocation2 + $0x28] sm:$0x3]
        %v2090 = vld [vmem:[#allocation2 + $0x30] sm:$0xfc]
        %v2091 = vld [vmem:[#allocation2 + $0x38] sm:$0xfc]
        %v2092 = vld [vmem:[#allocation2 + $0x50] sm:$0x3]
        %v2093 = vld [vmem:[#allocation2 + $0x58] sm:$0x3]
        %v2094 = vld [vmem:[#allocation2 + $0x60] sm:$0xfc]
        %v2095 = vld [vmem:[#allocation2 + $0x68] sm:$0xfc]
        %v2096 = vld [vmem:[#allocation2 + $0x80] sm:$0x3]
        %v2097 = vld [vmem:[#allocation2 + $0x88] sm:$0x3]
        %v2098 = vld [vmem:[#allocation2 + $0x90] sm:$0xfc]
        %v2099 = vld [vmem:[#allocation2 + $0x98] sm:$0xfc]
        %v2100 = vld [vmem:[#allocation2 + $0xb0] sm:$0x3]
        %v2101 = vld [vmem:[#allocation2 + $0xb8] sm:$0x3]
        %v2102 = vld [vmem:[#allocation2 + $0xc0] sm:$0xfc]
        %v2103 = vld [vmem:[#allocation2 + $0xc8] sm:$0xfc]
        %v2104 = vld [vmem:[#allocation2 + $0xe0] sm:$0x3]
        %v2105 = vld [vmem:[#allocation2 + $0xe8] sm:$0x3]
        %v2106 = vld [vmem:[#allocation2 + $0xf0] sm:$0xfc]
        %v2107 = vld [vmem:[#allocation2 + $0xf8] sm:$0xfc]
        %v2108 = vld [vmem:[#allocation2 + $0x110] sm:$0x3]
        %v2109 = vld [vmem:[#allocation2 + $0x118] sm:$0x3]
        %v2110 = vld [vmem:[#allocation2 + $0x120] sm:$0xfc]
        %v2111 = vld [vmem:[#allocation2 + $0x128] sm:$0xfc]
        %v2112 = vld [vmem:[#allocation2 + $0x140] sm:$0x3]
        %v2113 = vld [vmem:[#allocation2 + $0x148] sm:$0x3]
        %v2114 = vld [vmem:[#allocation2 + $0x150] sm:$0xfc]
        %v2115 = vld [vmem:[#allocation2 + $0x158] sm:$0xfc]
        %v2116 = vld [vmem:[#allocation2 + $0x170] sm:$0x3]
        %v2117 = vld [vmem:[#allocation2 + $0x178] sm:$0x3]
        %v2118 = vld [vmem:[#allocation2 + $0x180] sm:$0xfc]
        %v2119 = vld [vmem:[#allocation2 + $0x188] sm:$0xfc]
        %v2120 = vld [vmem:[#allocation2 + $0x1a0] sm:$0x3]
        %v2121 = vld [vmem:[#allocation2 + $0x1a8] sm:$0x3]
        %v2122 = vld [vmem:[#allocation2 + $0x1b0] sm:$0xfc]
        %v2123 = vld [vmem:[#allocation2 + $0x1b8] sm:$0xfc]
        %v2124 = vld [vmem:[#allocation2 + $0x1d0] sm:$0x3]
        %v2125 = vld [vmem:[#allocation2 + $0x1d8] sm:$0x3]
        %v2126 = vld [vmem:[#allocation2 + $0x1e0] sm:$0xfc]
        %v2127 = vld [vmem:[#allocation2 + $0x1e8] sm:$0xfc]
        %v2128 = vld [vmem:[#allocation2 + $0x200] sm:$0x3]
        %v2129 = vld [vmem:[#allocation2 + $0x208] sm:$0x3]
        %v2130 = vld [vmem:[#allocation2 + $0x210] sm:$0xfc]
        %v2131 = vld [vmem:[#allocation2 + $0x218] sm:$0xfc]
        %v2132 = vld [vmem:[#allocation2 + $0x230] sm:$0x3]
        %v2133 = vld [vmem:[#allocation2 + $0x238] sm:$0x3]
        %v2134 = vld [vmem:[#allocation2 + $0x240] sm:$0xfc]
        %v2135 = vld [vmem:[#allocation2 + $0x248] sm:$0xfc]
        %v2136 = vld [vmem:[#allocation2 + $0x260] sm:$0x3]
        %v2137 = vld [vmem:[#allocation2 + $0x268] sm:$0x3]
        %v2138 = vld [vmem:[#allocation2 + $0x270] sm:$0xfc]
        %v2139 = vld [vmem:[#allocation2 + $0x278] sm:$0xfc]
        %v2140 = vld [vmem:[#allocation2 + $0x290] sm:$0x3]
        %v2141 = vld [vmem:[#allocation2 + $0x298] sm:$0x3]
        %v2142 = vld [vmem:[#allocation2 + $0x2a0] sm:$0xfc]
        %v2143 = vld [vmem:[#allocation2 + $0x2a8] sm:$0xfc]
        %v2144 = vld [vmem:[#allocation2 + $0x2c0] sm:$0x3]
        %v2145 = vld [vmem:[#allocation2 + $0x2c8] sm:$0x3]
        %v2146 = vld [vmem:[#allocation2 + $0x2d0] sm:$0xfc]
        %v2147 = vld [vmem:[#allocation2 + $0x2d8] sm:$0xfc]
        %v2148 = vld [vmem:[#allocation2 + $0x2f0] sm:$0x3]
        %v2149 = vld [vmem:[#allocation2 + $0x2f8] sm:$0x3]
        %v2151 = vlaneseq
        %v2152 = vshrl.u32 %v2151, 7
        %v2153 = vsub.s32 0, %v2152
        %v2154 = vrot.slane %v1320, %v2153
        %v2155 = vlaneseq
        %v2156 = vshrl.u32 %v2155, 7
        %v2157 = vsub.s32 1, %v2156
        %v2158 = vrot.slane %v1320, %v2157
        %v2161 = vmul.f32 %v2086, %v2154
        %v2162 = vmul.f32 %v2087, %v2158
        %v2163 = vmul.f32 %v1329, %v2154
        %v2164 = vmul.f32 %v1330, %v2158
        %v2165 = vmul.f32 %v2088, %v2154
        %v2166 = vmul.f32 %v2089, %v2158
        %v2167 = vmul.f32 %v2090, %v2154
        %v2168 = vmul.f32 %v2091, %v2158
        %v2169 = vmul.f32 %v1333, %v2154
        %v2170 = vmul.f32 %v1334, %v2158
        %v2171 = vmul.f32 %v2092, %v2154
        %v2172 = vmul.f32 %v2093, %v2158
        %v2173 = vmul.f32 %v2094, %v2154
        %v2174 = vmul.f32 %v2095, %v2158
        %v2175 = vmul.f32 %v1337, %v2154
        %v2176 = vmul.f32 %v1338, %v2158
        %v2177 = vmul.f32 %v2096, %v2154
        %v2178 = vmul.f32 %v2097, %v2158
        %v2179 = vmul.f32 %v2098, %v2154
        %v2180 = vmul.f32 %v2099, %v2158
        %v2181 = vmul.f32 %v1341, %v2154
        %v2182 = vmul.f32 %v1342, %v2158
        %v2183 = vmul.f32 %v2100, %v2154
        %v2184 = vmul.f32 %v2101, %v2158
        %v2185 = vmul.f32 %v2102, %v2154
        %v2186 = vmul.f32 %v2103, %v2158
        %v2187 = vmul.f32 %v1345, %v2154
        %v2188 = vmul.f32 %v1346, %v2158
        %v2189 = vmul.f32 %v2104, %v2154
        %v2190 = vmul.f32 %v2105, %v2158
        %v2191 = vmul.f32 %v2106, %v2154
        %v2192 = vmul.f32 %v2107, %v2158
        %v2193 = vmul.f32 %v1349, %v2154
        %v2194 = vmul.f32 %v1350, %v2158
        %v2195 = vmul.f32 %v2108, %v2154
        %v2196 = vmul.f32 %v2109, %v2158
        %v2197 = vmul.f32 %v2110, %v2154
        %v2198 = vmul.f32 %v2111, %v2158
        %v2199 = vmul.f32 %v1353, %v2154
        %v2200 = vmul.f32 %v1354, %v2158
        %v2201 = vmul.f32 %v2112, %v2154
        %v2202 = vmul.f32 %v2113, %v2158
        %v2203 = vmul.f32 %v2114, %v2154
        %v2204 = vmul.f32 %v2115, %v2158
        %v2205 = vmul.f32 %v1357, %v2154
        %v2206 = vmul.f32 %v1358, %v2158
        %v2207 = vmul.f32 %v2116, %v2154
        %v2208 = vmul.f32 %v2117, %v2158
        %v2209 = vmul.f32 %v2118, %v2154
        %v2210 = vmul.f32 %v2119, %v2158
        %v2211 = vmul.f32 %v1361, %v2154
        %v2212 = vmul.f32 %v1362, %v2158
        %v2213 = vmul.f32 %v2120, %v2154
        %v2214 = vmul.f32 %v2121, %v2158
        %v2215 = vmul.f32 %v2122, %v2154
        %v2216 = vmul.f32 %v2123, %v2158
        %v2217 = vmul.f32 %v1365, %v2154
        %v2218 = vmul.f32 %v1366, %v2158
        %v2219 = vmul.f32 %v2124, %v2154
        %v2220 = vmul.f32 %v2125, %v2158
        %v2221 = vmul.f32 %v2126, %v2154
        %v2222 = vmul.f32 %v2127, %v2158
        %v2223 = vmul.f32 %v1369, %v2154
        %v2224 = vmul.f32 %v1370, %v2158
        %v2225 = vmul.f32 %v2128, %v2154
        %v2226 = vmul.f32 %v2129, %v2158
        %v2227 = vmul.f32 %v2130, %v2154
        %v2228 = vmul.f32 %v2131, %v2158
        %v2229 = vmul.f32 %v1373, %v2154
        %v2230 = vmul.f32 %v1374, %v2158
        %v2231 = vmul.f32 %v2132, %v2154
        %v2232 = vmul.f32 %v2133, %v2158
        %v2233 = vmul.f32 %v2134, %v2154
        %v2234 = vmul.f32 %v2135, %v2158
        %v2235 = vmul.f32 %v1377, %v2154
        %v2236 = vmul.f32 %v1378, %v2158
        %v2237 = vmul.f32 %v2136, %v2154
        %v2238 = vmul.f32 %v2137, %v2158
        %v2239 = vmul.f32 %v2138, %v2154
        %v2240 = vmul.f32 %v2139, %v2158
        %v2241 = vmul.f32 %v1381, %v2154
        %v2242 = vmul.f32 %v1382, %v2158
        %v2243 = vmul.f32 %v2140, %v2154
        %v2244 = vmul.f32 %v2141, %v2158
        %v2245 = vmul.f32 %v2142, %v2154
        %v2246 = vmul.f32 %v2143, %v2158
        %v2247 = vmul.f32 %v1385, %v2154
        %v2248 = vmul.f32 %v1386, %v2158
        %v2249 = vmul.f32 %v2144, %v2154
        %v2250 = vmul.f32 %v2145, %v2158
        %v2251 = vmul.f32 %v2146, %v2154
        %v2252 = vmul.f32 %v2147, %v2158
        %v2253 = vmul.f32 %v1389, %v2154
        %v2254 = vmul.f32 %v1390, %v2158
        %v2255 = vmul.f32 %v2148, %v2154
        %v2256 = vmul.f32 %v2149, %v2158
        %vm2353 = vcmask 1045504
        %v2354 = vrot.slane %v2161, 2
        %v2355 = vrot.slane %v2163, 2
        %v2356 = vsel %vm2353, %v2354, %v2355
        %v2357 = vrot.slane %v2162, 2
        %v2358 = vrot.slane %v2164, 2
        %v2359 = vsel %vm2353, %v2357, %v2358
        %v2360 = vrot.slane %v2165, 2
        %v2361 = vsel %vm2353, %v2355, %v2360
        %v2362 = vrot.slane %v2166, 2
        %v2363 = vsel %vm2353, %v2358, %v2362
        %v2364 = vrot.slane %v2167, 2
        %v2365 = vrot.slane %v2169, 2
        %v2366 = vsel %vm2353, %v2364, %v2365
        %v2367 = vrot.slane %v2168, 2
        %v2368 = vrot.slane %v2170, 2
        %v2369 = vsel %vm2353, %v2367, %v2368
        %v2370 = vrot.slane %v2171, 2
        %v2371 = vsel %vm2353, %v2365, %v2370
        %v2372 = vrot.slane %v2172, 2
        %v2373 = vsel %vm2353, %v2368, %v2372
        %v2374 = vrot.slane %v2173, 2
        %v2375 = vrot.slane %v2175, 2
        %v2376 = vsel %vm2353, %v2374, %v2375
        %v2377 = vrot.slane %v2174, 2
        %v2378 = vrot.slane %v2176, 2
        %v2379 = vsel %vm2353, %v2377, %v2378
        %v2380 = vrot.slane %v2177, 2
        %v2381 = vsel %vm2353, %v2375, %v2380
        %v2382 = vrot.slane %v2178, 2
        %v2383 = vsel %vm2353, %v2378, %v2382
        %v2384 = vrot.slane %v2179, 2
        %v2385 = vrot.slane %v2181, 2
        %v2386 = vsel %vm2353, %v2384, %v2385
        %v2387 = vrot.slane %v2180, 2
        %v2388 = vrot.slane %v2182, 2
        %v2389 = vsel %vm2353, %v2387, %v2388
        %v2390 = vrot.slane %v2183, 2
        %v2391 = vsel %vm2353, %v2385, %v2390
        %v2392 = vrot.slane %v2184, 2
        %v2393 = vsel %vm2353, %v2388, %v2392
        %v2394 = vrot.slane %v2185, 2
        %v2395 = vrot.slane %v2187, 2
        %v2396 = vsel %vm2353, %v2394, %v2395
        %v2397 = vrot.slane %v2186, 2
        %v2398 = vrot.slane %v2188, 2
        %v2399 = vsel %vm2353, %v2397, %v2398
        %v2400 = vrot.slane %v2189, 2
        %v2401 = vsel %vm2353, %v2395, %v2400
        %v2402 = vrot.slane %v2190, 2
        %v2403 = vsel %vm2353, %v2398, %v2402
        %v2404 = vrot.slane %v2191, 2
        %v2405 = vrot.slane %v2193, 2
        %v2406 = vsel %vm2353, %v2404, %v2405
        %v2407 = vrot.slane %v2192, 2
        %v2408 = vrot.slane %v2194, 2
        %v2409 = vsel %vm2353, %v2407, %v2408
        %v2410 = vrot.slane %v2195, 2
        %v2411 = vsel %vm2353, %v2405, %v2410
        %v2412 = vrot.slane %v2196, 2
        %v2413 = vsel %vm2353, %v2408, %v2412
        %v2414 = vrot.slane %v2197, 2
        %v2415 = vrot.slane %v2199, 2
        %v2416 = vsel %vm2353, %v2414, %v2415
        %v2417 = vrot.slane %v2198, 2
        %v2418 = vrot.slane %v2200, 2
        %v2419 = vsel %vm2353, %v2417, %v2418
        %v2420 = vrot.slane %v2201, 2
        %v2421 = vsel %vm2353, %v2415, %v2420
        %v2422 = vrot.slane %v2202, 2
        %v2423 = vsel %vm2353, %v2418, %v2422
        %v2424 = vrot.slane %v2203, 2
        %v2425 = vrot.slane %v2205, 2
        %v2426 = vsel %vm2353, %v2424, %v2425
        %v2427 = vrot.slane %v2204, 2
        %v2428 = vrot.slane %v2206, 2
        %v2429 = vsel %vm2353, %v2427, %v2428
        %v2430 = vrot.slane %v2207, 2
        %v2431 = vsel %vm2353, %v2425, %v2430
        %v2432 = vrot.slane %v2208, 2
        %v2433 = vsel %vm2353, %v2428, %v2432
        %v2434 = vrot.slane %v2209, 2
        %v2435 = vrot.slane %v2211, 2
        %v2436 = vsel %vm2353, %v2434, %v2435
        %v2437 = vrot.slane %v2210, 2
        %v2438 = vrot.slane %v2212, 2
        %v2439 = vsel %vm2353, %v2437, %v2438
        %v2440 = vrot.slane %v2213, 2
        %v2441 = vsel %vm2353, %v2435, %v2440
        %v2442 = vrot.slane %v2214, 2
        %v2443 = vsel %vm2353, %v2438, %v2442
        %v2444 = vrot.slane %v2215, 2
        %v2445 = vrot.slane %v2217, 2
        %v2446 = vsel %vm2353, %v2444, %v2445
        %v2447 = vrot.slane %v2216, 2
        %v2448 = vrot.slane %v2218, 2
        %v2449 = vsel %vm2353, %v2447, %v2448
        %v2450 = vrot.slane %v2219, 2
        %v2451 = vsel %vm2353, %v2445, %v2450
        %v2452 = vrot.slane %v2220, 2
        %v2453 = vsel %vm2353, %v2448, %v2452
        %v2454 = vrot.slane %v2221, 2
        %v2455 = vrot.slane %v2223, 2
        %v2456 = vsel %vm2353, %v2454, %v2455
        %v2457 = vrot.slane %v2222, 2
        %v2458 = vrot.slane %v2224, 2
        %v2459 = vsel %vm2353, %v2457, %v2458
        %v2460 = vrot.slane %v2225, 2
        %v2461 = vsel %vm2353, %v2455, %v2460
        %v2462 = vrot.slane %v2226, 2
        %v2463 = vsel %vm2353, %v2458, %v2462
        %v2464 = vrot.slane %v2227, 2
        %v2465 = vrot.slane %v2229, 2
        %v2466 = vsel %vm2353, %v2464, %v2465
        %v2467 = vrot.slane %v2228, 2
        %v2468 = vrot.slane %v2230, 2
        %v2469 = vsel %vm2353, %v2467, %v2468
        %v2470 = vrot.slane %v2231, 2
        %v2471 = vsel %vm2353, %v2465, %v2470
        %v2472 = vrot.slane %v2232, 2
        %v2473 = vsel %vm2353, %v2468, %v2472
        %v2474 = vrot.slane %v2233, 2
        %v2475 = vrot.slane %v2235, 2
        %v2476 = vsel %vm2353, %v2474, %v2475
        %v2477 = vrot.slane %v2234, 2
        %v2478 = vrot.slane %v2236, 2
        %v2479 = vsel %vm2353, %v2477, %v2478
        %v2480 = vrot.slane %v2237, 2
        %v2481 = vsel %vm2353, %v2475, %v2480
        %v2482 = vrot.slane %v2238, 2
        %v2483 = vsel %vm2353, %v2478, %v2482
        %v2484 = vrot.slane %v2239, 2
        %v2485 = vrot.slane %v2241, 2
        %v2486 = vsel %vm2353, %v2484, %v2485
        %v2487 = vrot.slane %v2240, 2
        %v2488 = vrot.slane %v2242, 2
        %v2489 = vsel %vm2353, %v2487, %v2488
        %v2490 = vrot.slane %v2243, 2
        %v2491 = vsel %vm2353, %v2485, %v2490
        %v2492 = vrot.slane %v2244, 2
        %v2493 = vsel %vm2353, %v2488, %v2492
        %v2494 = vrot.slane %v2245, 2
        %v2495 = vrot.slane %v2247, 2
        %v2496 = vsel %vm2353, %v2494, %v2495
        %v2497 = vrot.slane %v2246, 2
        %v2498 = vrot.slane %v2248, 2
        %v2499 = vsel %vm2353, %v2497, %v2498
        %v2500 = vrot.slane %v2249, 2
        %v2501 = vsel %vm2353, %v2495, %v2500
        %v2502 = vrot.slane %v2250, 2
        %v2503 = vsel %vm2353, %v2498, %v2502
        %v2504 = vrot.slane %v2251, 2
        %v2505 = vrot.slane %v2253, 2
        %v2506 = vsel %vm2353, %v2504, %v2505
        %v2507 = vrot.slane %v2252, 2
        %v2508 = vrot.slane %v2254, 2
        %v2509 = vsel %vm2353, %v2507, %v2508
        %v2510 = vrot.slane %v2255, 2
        %v2511 = vsel %vm2353, %v2505, %v2510
        %v2512 = vrot.slane %v2256, 2
        %v2513 = vsel %vm2353, %v2508, %v2512
        %v2578 = vadd.f32 %v2022, %v2356
        %v2579 = vadd.f32 %v2023, %v2359
        %v2580 = vadd.f32 %v2024, %v2361
        %v2581 = vadd.f32 %v2025, %v2363
        %v2582 = vadd.f32 %v2026, %v2366
        %v2583 = vadd.f32 %v2027, %v2369
        %v2584 = vadd.f32 %v2028, %v2371
        %v2585 = vadd.f32 %v2029, %v2373
        %v2586 = vadd.f32 %v2030, %v2376
        %v2587 = vadd.f32 %v2031, %v2379
        %v2588 = vadd.f32 %v2032, %v2381
        %v2589 = vadd.f32 %v2033, %v2383
        %v2590 = vadd.f32 %v2034, %v2386
        %v2591 = vadd.f32 %v2035, %v2389
        %v2592 = vadd.f32 %v2036, %v2391
        %v2593 = vadd.f32 %v2037, %v2393
        %v2594 = vadd.f32 %v2038, %v2396
        %v2595 = vadd.f32 %v2039, %v2399
        %v2596 = vadd.f32 %v2040, %v2401
        %v2597 = vadd.f32 %v2041, %v2403
        %v2598 = vadd.f32 %v2042, %v2406
        %v2599 = vadd.f32 %v2043, %v2409
        %v2600 = vadd.f32 %v2044, %v2411
        %v2601 = vadd.f32 %v2045, %v2413
        %v2602 = vadd.f32 %v2046, %v2416
        %v2603 = vadd.f32 %v2047, %v2419
        %v2604 = vadd.f32 %v2048, %v2421
        %v2605 = vadd.f32 %v2049, %v2423
        %v2606 = vadd.f32 %v2050, %v2426
        %v2607 = vadd.f32 %v2051, %v2429
        %v2608 = vadd.f32 %v2052, %v2431
        %v2609 = vadd.f32 %v2053, %v2433
        %v2610 = vadd.f32 %v2054, %v2436
        %v2611 = vadd.f32 %v2055, %v2439
        %v2612 = vadd.f32 %v2056, %v2441
        %v2613 = vadd.f32 %v2057, %v2443
        %v2614 = vadd.f32 %v2058, %v2446
        %v2615 = vadd.f32 %v2059, %v2449
        %v2616 = vadd.f32 %v2060, %v2451
        %v2617 = vadd.f32 %v2061, %v2453
        %v2618 = vadd.f32 %v2062, %v2456
        %v2619 = vadd.f32 %v2063, %v2459
        %v2620 = vadd.f32 %v2064, %v2461
        %v2621 = vadd.f32 %v2065, %v2463
        %v2622 = vadd.f32 %v2066, %v2466
        %v2623 = vadd.f32 %v2067, %v2469
        %v2624 = vadd.f32 %v2068, %v2471
        %v2625 = vadd.f32 %v2069, %v2473
        %v2626 = vadd.f32 %v2070, %v2476
        %v2627 = vadd.f32 %v2071, %v2479
        %v2628 = vadd.f32 %v2072, %v2481
        %v2629 = vadd.f32 %v2073, %v2483
        %v2630 = vadd.f32 %v2074, %v2486
        %v2631 = vadd.f32 %v2075, %v2489
        %v2632 = vadd.f32 %v2076, %v2491
        %v2633 = vadd.f32 %v2077, %v2493
        %v2634 = vadd.f32 %v2078, %v2496
        %v2635 = vadd.f32 %v2079, %v2499
        %v2636 = vadd.f32 %v2080, %v2501
        %v2637 = vadd.f32 %v2081, %v2503
        %v2638 = vadd.f32 %v2082, %v2506
        %v2639 = vadd.f32 %v2083, %v2509
        %v2640 = vadd.f32 %v2084, %v2511
        %v2641 = vadd.f32 %v2085, %v2513
        %v2642 = vld [vmem:[%s1221] sm:$0xff]
        %v2643 = vld [vmem:[%s1221 + $0x8] sm:$0xff]
        %v2644 = vld [vmem:[%s1221 + $0x10] sm:$0xff]
        %v2645 = vld [vmem:[%s1221 + $0x18] sm:$0xff]
        %v2646 = vld [vmem:[%s1221 + $0x30] sm:$0xff]
        %v2647 = vld [vmem:[%s1221 + $0x38] sm:$0xff]
        %v2648 = vld [vmem:[%s1221 + $0x40] sm:$0xff]
        %v2649 = vld [vmem:[%s1221 + $0x48] sm:$0xff]
        %v2650 = vld [vmem:[%s1221 + $0x60] sm:$0xff]
        %v2651 = vld [vmem:[%s1221 + $0x68] sm:$0xff]
        %v2652 = vld [vmem:[%s1221 + $0x70] sm:$0xff]
        %v2653 = vld [vmem:[%s1221 + $0x78] sm:$0xff]
        %v2654 = vld [vmem:[%s1221 + $0x90] sm:$0xff]
        %v2655 = vld [vmem:[%s1221 + $0x98] sm:$0xff]
        %v2656 = vld [vmem:[%s1221 + $0xa0] sm:$0xff]
        %v2657 = vld [vmem:[%s1221 + $0xa8] sm:$0xff]
        %v2658 = vld [vmem:[%s1221 + $0xc0] sm:$0xff]
        %v2659 = vld [vmem:[%s1221 + $0xc8] sm:$0xff]
        %v2660 = vld [vmem:[%s1221 + $0xd0] sm:$0xff]
        %v2661 = vld [vmem:[%s1221 + $0xd8] sm:$0xff]
        %v2662 = vld [vmem:[%s1221 + $0xf0] sm:$0xff]
        %v2663 = vld [vmem:[%s1221 + $0xf8] sm:$0xff]
        %v2664 = vld [vmem:[%s1221 + $0x100] sm:$0xff]
        %v2665 = vld [vmem:[%s1221 + $0x108] sm:$0xff]
        %v2666 = vld [vmem:[%s1221 + $0x120] sm:$0xff]
        %v2667 = vld [vmem:[%s1221 + $0x128] sm:$0xff]
        %v2668 = vld [vmem:[%s1221 + $0x130] sm:$0xff]
        %v2669 = vld [vmem:[%s1221 + $0x138] sm:$0xff]
        %v2670 = vld [vmem:[%s1221 + $0x150] sm:$0xff]
        %v2671 = vld [vmem:[%s1221 + $0x158] sm:$0xff]
        %v2672 = vld [vmem:[%s1221 + $0x160] sm:$0xff]
        %v2673 = vld [vmem:[%s1221 + $0x168] sm:$0xff]
        %v2674 = vld [vmem:[%s1221 + $0x180] sm:$0xff]
        %v2675 = vld [vmem:[%s1221 + $0x188] sm:$0xff]
        %v2676 = vld [vmem:[%s1221 + $0x190] sm:$0xff]
        %v2677 = vld [vmem:[%s1221 + $0x198] sm:$0xff]
        %v2678 = vld [vmem:[%s1221 + $0x1b0] sm:$0xff]
        %v2679 = vld [vmem:[%s1221 + $0x1b8] sm:$0xff]
        %v2680 = vld [vmem:[%s1221 + $0x1c0] sm:$0xff]
        %v2681 = vld [vmem:[%s1221 + $0x1c8] sm:$0xff]
        %v2682 = vld [vmem:[%s1221 + $0x1e0] sm:$0xff]
        %v2683 = vld [vmem:[%s1221 + $0x1e8] sm:$0xff]
        %v2684 = vld [vmem:[%s1221 + $0x1f0] sm:$0xff]
        %v2685 = vld [vmem:[%s1221 + $0x1f8] sm:$0xff]
        %v2686 = vld [vmem:[%s1221 + $0x210] sm:$0xff]
        %v2687 = vld [vmem:[%s1221 + $0x218] sm:$0xff]
        %v2688 = vld [vmem:[%s1221 + $0x220] sm:$0xff]
        %v2689 = vld [vmem:[%s1221 + $0x228] sm:$0xff]
        %v2690 = vld [vmem:[%s1221 + $0x240] sm:$0xff]
        %v2691 = vld [vmem:[%s1221 + $0x248] sm:$0xff]
        %v2692 = vld [vmem:[%s1221 + $0x250] sm:$0xff]
        %v2693 = vld [vmem:[%s1221 + $0x258] sm:$0xff]
        %v2694 = vld [vmem:[%s1221 + $0x270] sm:$0xff]
        %v2695 = vld [vmem:[%s1221 + $0x278] sm:$0xff]
        %v2696 = vld [vmem:[%s1221 + $0x280] sm:$0xff]
        %v2697 = vld [vmem:[%s1221 + $0x288] sm:$0xff]
        %v2698 = vld [vmem:[%s1221 + $0x2a0] sm:$0xff]
        %v2699 = vld [vmem:[%s1221 + $0x2a8] sm:$0xff]
        %v2700 = vld [vmem:[%s1221 + $0x2b0] sm:$0xff]
        %v2701 = vld [vmem:[%s1221 + $0x2b8] sm:$0xff]
        %v2702 = vld [vmem:[%s1221 + $0x2d0] sm:$0xff]
        %v2703 = vld [vmem:[%s1221 + $0x2d8] sm:$0xff]
        %v2704 = vld [vmem:[%s1221 + $0x2e0] sm:$0xff]
        %v2705 = vld [vmem:[%s1221 + $0x2e8] sm:$0xff]
        %v2707 = vlaneseq
        %v2708 = vshrl.u32 %v2707, 7
        %v2709 = vsub.s32 0, %v2708
        %v2710 = vrot.slane %v1321, %v2709
        %v2711 = vlaneseq
        %v2712 = vshrl.u32 %v2711, 7
        %v2713 = vsub.s32 1, %v2712
        %v2714 = vrot.slane %v1321, %v2713
        %v2717 = vmul.f32 %v2642, %v2710
        %v2718 = vmul.f32 %v2643, %v2714
        %v2719 = vmul.f32 %v2644, %v2710
        %v2720 = vmul.f32 %v2645, %v2714
        %v2721 = vmul.f32 %v2646, %v2710
        %v2722 = vmul.f32 %v2647, %v2714
        %v2723 = vmul.f32 %v2648, %v2710
        %v2724 = vmul.f32 %v2649, %v2714
        %v2725 = vmul.f32 %v2650, %v2710
        %v2726 = vmul.f32 %v2651, %v2714
        %v2727 = vmul.f32 %v2652, %v2710
        %v2728 = vmul.f32 %v2653, %v2714
        %v2729 = vmul.f32 %v2654, %v2710
        %v2730 = vmul.f32 %v2655, %v2714
        %v2731 = vmul.f32 %v2656, %v2710
        %v2732 = vmul.f32 %v2657, %v2714
        %v2733 = vmul.f32 %v2658, %v2710
        %v2734 = vmul.f32 %v2659, %v2714
        %v2735 = vmul.f32 %v2660, %v2710
        %v2736 = vmul.f32 %v2661, %v2714
        %v2737 = vmul.f32 %v2662, %v2710
        %v2738 = vmul.f32 %v2663, %v2714
        %v2739 = vmul.f32 %v2664, %v2710
        %v2740 = vmul.f32 %v2665, %v2714
        %v2741 = vmul.f32 %v2666, %v2710
        %v2742 = vmul.f32 %v2667, %v2714
        %v2743 = vmul.f32 %v2668, %v2710
        %v2744 = vmul.f32 %v2669, %v2714
        %v2745 = vmul.f32 %v2670, %v2710
        %v2746 = vmul.f32 %v2671, %v2714
        %v2747 = vmul.f32 %v2672, %v2710
        %v2748 = vmul.f32 %v2673, %v2714
        %v2749 = vmul.f32 %v2674, %v2710
        %v2750 = vmul.f32 %v2675, %v2714
        %v2751 = vmul.f32 %v2676, %v2710
        %v2752 = vmul.f32 %v2677, %v2714
        %v2753 = vmul.f32 %v2678, %v2710
        %v2754 = vmul.f32 %v2679, %v2714
        %v2755 = vmul.f32 %v2680, %v2710
        %v2756 = vmul.f32 %v2681, %v2714
        %v2757 = vmul.f32 %v2682, %v2710
        %v2758 = vmul.f32 %v2683, %v2714
        %v2759 = vmul.f32 %v2684, %v2710
        %v2760 = vmul.f32 %v2685, %v2714
        %v2761 = vmul.f32 %v2686, %v2710
        %v2762 = vmul.f32 %v2687, %v2714
        %v2763 = vmul.f32 %v2688, %v2710
        %v2764 = vmul.f32 %v2689, %v2714
        %v2765 = vmul.f32 %v2690, %v2710
        %v2766 = vmul.f32 %v2691, %v2714
        %v2767 = vmul.f32 %v2692, %v2710
        %v2768 = vmul.f32 %v2693, %v2714
        %v2769 = vmul.f32 %v2694, %v2710
        %v2770 = vmul.f32 %v2695, %v2714
        %v2771 = vmul.f32 %v2696, %v2710
        %v2772 = vmul.f32 %v2697, %v2714
        %v2773 = vmul.f32 %v2698, %v2710
        %v2774 = vmul.f32 %v2699, %v2714
        %v2775 = vmul.f32 %v2700, %v2710
        %v2776 = vmul.f32 %v2701, %v2714
        %v2777 = vmul.f32 %v2702, %v2710
        %v2778 = vmul.f32 %v2703, %v2714
        %v2779 = vmul.f32 %v2704, %v2710
        %v2780 = vmul.f32 %v2705, %v2714
        %v2781 = vadd.f32 %v2578, %v2717
        %v2782 = vadd.f32 %v2579, %v2718
        %v2783 = vadd.f32 %v2580, %v2719
        %v2784 = vadd.f32 %v2581, %v2720
        %v2785 = vadd.f32 %v2582, %v2721
        %v2786 = vadd.f32 %v2583, %v2722
        %v2787 = vadd.f32 %v2584, %v2723
        %v2788 = vadd.f32 %v2585, %v2724
        %v2789 = vadd.f32 %v2586, %v2725
        %v2790 = vadd.f32 %v2587, %v2726
        %v2791 = vadd.f32 %v2588, %v2727
        %v2792 = vadd.f32 %v2589, %v2728
        %v2793 = vadd.f32 %v2590, %v2729
        %v2794 = vadd.f32 %v2591, %v2730
        %v2795 = vadd.f32 %v2592, %v2731
        %v2796 = vadd.f32 %v2593, %v2732
        %v2797 = vadd.f32 %v2594, %v2733
        %v2798 = vadd.f32 %v2595, %v2734
        %v2799 = vadd.f32 %v2596, %v2735
        %v2800 = vadd.f32 %v2597, %v2736
        %v2801 = vadd.f32 %v2598, %v2737
        %v2802 = vadd.f32 %v2599, %v2738
        %v2803 = vadd.f32 %v2600, %v2739
        %v2804 = vadd.f32 %v2601, %v2740
        %v2805 = vadd.f32 %v2602, %v2741
        %v2806 = vadd.f32 %v2603, %v2742
        %v2807 = vadd.f32 %v2604, %v2743
        %v2808 = vadd.f32 %v2605, %v2744
        %v2809 = vadd.f32 %v2606, %v2745
        %v2810 = vadd.f32 %v2607, %v2746
        %v2811 = vadd.f32 %v2608, %v2747
        %v2812 = vadd.f32 %v2609, %v2748
        %v2813 = vadd.f32 %v2610, %v2749
        %v2814 = vadd.f32 %v2611, %v2750
        %v2815 = vadd.f32 %v2612, %v2751
        %v2816 = vadd.f32 %v2613, %v2752
        %v2817 = vadd.f32 %v2614, %v2753
        %v2818 = vadd.f32 %v2615, %v2754
        %v2819 = vadd.f32 %v2616, %v2755
        %v2820 = vadd.f32 %v2617, %v2756
        %v2821 = vadd.f32 %v2618, %v2757
        %v2822 = vadd.f32 %v2619, %v2758
        %v2823 = vadd.f32 %v2620, %v2759
        %v2824 = vadd.f32 %v2621, %v2760
        %v2825 = vadd.f32 %v2622, %v2761
        %v2826 = vadd.f32 %v2623, %v2762
        %v2827 = vadd.f32 %v2624, %v2763
        %v2828 = vadd.f32 %v2625, %v2764
        %v2829 = vadd.f32 %v2626, %v2765
        %v2830 = vadd.f32 %v2627, %v2766
        %v2831 = vadd.f32 %v2628, %v2767
        %v2832 = vadd.f32 %v2629, %v2768
        %v2833 = vadd.f32 %v2630, %v2769
        %v2834 = vadd.f32 %v2631, %v2770
        %v2835 = vadd.f32 %v2632, %v2771
        %v2836 = vadd.f32 %v2633, %v2772
        %v2837 = vadd.f32 %v2634, %v2773
        %v2838 = vadd.f32 %v2635, %v2774
        %v2839 = vadd.f32 %v2636, %v2775
        %v2840 = vadd.f32 %v2637, %v2776
        %v2841 = vadd.f32 %v2638, %v2777
        %v2842 = vadd.f32 %v2639, %v2778
        %v2843 = vadd.f32 %v2640, %v2779
        %v2844 = vadd.f32 %v2641, %v2780
        %v2845 = vld [vmem:[%s1221] sm:$0xfe]
        %v2846 = vld [vmem:[%s1221 + $0x8] sm:$0xfe]
        %v2847 = vld [vmem:[%s1221 + $0x20] sm:$0x1]
        %v2848 = vld [vmem:[%s1221 + $0x28] sm:$0x1]
        %v2849 = vld [vmem:[%s1221 + $0x30] sm:$0xfe]
        %v2850 = vld [vmem:[%s1221 + $0x38] sm:$0xfe]
        %v2851 = vld [vmem:[%s1221 + $0x50] sm:$0x1]
        %v2852 = vld [vmem:[%s1221 + $0x58] sm:$0x1]
        %v2853 = vld [vmem:[%s1221 + $0x60] sm:$0xfe]
        %v2854 = vld [vmem:[%s1221 + $0x68] sm:$0xfe]
        %v2855 = vld [vmem:[%s1221 + $0x80] sm:$0x1]
        %v2856 = vld [vmem:[%s1221 + $0x88] sm:$0x1]
        %v2857 = vld [vmem:[%s1221 + $0x90] sm:$0xfe]
        %v2858 = vld [vmem:[%s1221 + $0x98] sm:$0xfe]
        %v2859 = vld [vmem:[%s1221 + $0xb0] sm:$0x1]
        %v2860 = vld [vmem:[%s1221 + $0xb8] sm:$0x1]
        %v2861 = vld [vmem:[%s1221 + $0xc0] sm:$0xfe]
        %v2862 = vld [vmem:[%s1221 + $0xc8] sm:$0xfe]
        %v2863 = vld [vmem:[%s1221 + $0xe0] sm:$0x1]
        %v2864 = vld [vmem:[%s1221 + $0xe8] sm:$0x1]
        %v2865 = vld [vmem:[%s1221 + $0xf0] sm:$0xfe]
        %v2866 = vld [vmem:[%s1221 + $0xf8] sm:$0xfe]
        %v2867 = vld [vmem:[%s1221 + $0x110] sm:$0x1]
        %v2868 = vld [vmem:[%s1221 + $0x118] sm:$0x1]
        %v2869 = vld [vmem:[%s1221 + $0x120] sm:$0xfe]
        %v2870 = vld [vmem:[%s1221 + $0x128] sm:$0xfe]
        %v2871 = vld [vmem:[%s1221 + $0x140] sm:$0x1]
        %v2872 = vld [vmem:[%s1221 + $0x148] sm:$0x1]
        %v2873 = vld [vmem:[%s1221 + $0x150] sm:$0xfe]
        %v2874 = vld [vmem:[%s1221 + $0x158] sm:$0xfe]
        %v2875 = vld [vmem:[%s1221 + $0x170] sm:$0x1]
        %v2876 = vld [vmem:[%s1221 + $0x178] sm:$0x1]
        %v2877 = vld [vmem:[%s1221 + $0x180] sm:$0xfe]
        %v2878 = vld [vmem:[%s1221 + $0x188] sm:$0xfe]
        %v2879 = vld [vmem:[%s1221 + $0x1a0] sm:$0x1]
        %v2880 = vld [vmem:[%s1221 + $0x1a8] sm:$0x1]
        %v2881 = vld [vmem:[%s1221 + $0x1b0] sm:$0xfe]
        %v2882 = vld [vmem:[%s1221 + $0x1b8] sm:$0xfe]
        %v2883 = vld [vmem:[%s1221 + $0x1d0] sm:$0x1]
        %v2884 = vld [vmem:[%s1221 + $0x1d8] sm:$0x1]
        %v2885 = vld [vmem:[%s1221 + $0x1e0] sm:$0xfe]
        %v2886 = vld [vmem:[%s1221 + $0x1e8] sm:$0xfe]
        %v2887 = vld [vmem:[%s1221 + $0x200] sm:$0x1]
        %v2888 = vld [vmem:[%s1221 + $0x208] sm:$0x1]
        %v2889 = vld [vmem:[%s1221 + $0x210] sm:$0xfe]
        %v2890 = vld [vmem:[%s1221 + $0x218] sm:$0xfe]
        %v2891 = vld [vmem:[%s1221 + $0x230] sm:$0x1]
        %v2892 = vld [vmem:[%s1221 + $0x238] sm:$0x1]
        %v2893 = vld [vmem:[%s1221 + $0x240] sm:$0xfe]
        %v2894 = vld [vmem:[%s1221 + $0x248] sm:$0xfe]
        %v2895 = vld [vmem:[%s1221 + $0x260] sm:$0x1]
        %v2896 = vld [vmem:[%s1221 + $0x268] sm:$0x1]
        %v2897 = vld [vmem:[%s1221 + $0x270] sm:$0xfe]
        %v2898 = vld [vmem:[%s1221 + $0x278] sm:$0xfe]
        %v2899 = vld [vmem:[%s1221 + $0x290] sm:$0x1]
        %v2900 = vld [vmem:[%s1221 + $0x298] sm:$0x1]
        %v2901 = vld [vmem:[%s1221 + $0x2a0] sm:$0xfe]
        %v2902 = vld [vmem:[%s1221 + $0x2a8] sm:$0xfe]
        %v2903 = vld [vmem:[%s1221 + $0x2c0] sm:$0x1]
        %v2904 = vld [vmem:[%s1221 + $0x2c8] sm:$0x1]
        %v2905 = vld [vmem:[%s1221 + $0x2d0] sm:$0xfe]
        %v2906 = vld [vmem:[%s1221 + $0x2d8] sm:$0xfe]
        %v2907 = vld [vmem:[%s1221 + $0x2f0] sm:$0x1]
        %v2908 = vld [vmem:[%s1221 + $0x2f8] sm:$0x1]
        %v2910 = vlaneseq
        %v2911 = vshrl.u32 %v2910, 7
        %v2912 = vsub.s32 0, %v2911
        %v2913 = vrot.slane %v1322, %v2912
        %v2914 = vlaneseq
        %v2915 = vshrl.u32 %v2914, 7
        %v2916 = vsub.s32 1, %v2915
        %v2917 = vrot.slane %v1322, %v2916
        %v2920 = vmul.f32 %v2845, %v2913
        %v2921 = vmul.f32 %v2846, %v2917
        %v2922 = vmul.f32 %v2644, %v2913
        %v2923 = vmul.f32 %v2645, %v2917
        %v2924 = vmul.f32 %v2847, %v2913
        %v2925 = vmul.f32 %v2848, %v2917
        %v2926 = vmul.f32 %v2849, %v2913
        %v2927 = vmul.f32 %v2850, %v2917
        %v2928 = vmul.f32 %v2648, %v2913
        %v2929 = vmul.f32 %v2649, %v2917
        %v2930 = vmul.f32 %v2851, %v2913
        %v2931 = vmul.f32 %v2852, %v2917
        %v2932 = vmul.f32 %v2853, %v2913
        %v2933 = vmul.f32 %v2854, %v2917
        %v2934 = vmul.f32 %v2652, %v2913
        %v2935 = vmul.f32 %v2653, %v2917
        %v2936 = vmul.f32 %v2855, %v2913
        %v2937 = vmul.f32 %v2856, %v2917
        %v2938 = vmul.f32 %v2857, %v2913
        %v2939 = vmul.f32 %v2858, %v2917
        %v2940 = vmul.f32 %v2656, %v2913
        %v2941 = vmul.f32 %v2657, %v2917
        %v2942 = vmul.f32 %v2859, %v2913
        %v2943 = vmul.f32 %v2860, %v2917
        %v2944 = vmul.f32 %v2861, %v2913
        %v2945 = vmul.f32 %v2862, %v2917
        %v2946 = vmul.f32 %v2660, %v2913
        %v2947 = vmul.f32 %v2661, %v2917
        %v2948 = vmul.f32 %v2863, %v2913
        %v2949 = vmul.f32 %v2864, %v2917
        %v2950 = vmul.f32 %v2865, %v2913
        %v2951 = vmul.f32 %v2866, %v2917
        %v2952 = vmul.f32 %v2664, %v2913
        %v2953 = vmul.f32 %v2665, %v2917
        %v2954 = vmul.f32 %v2867, %v2913
        %v2955 = vmul.f32 %v2868, %v2917
        %v2956 = vmul.f32 %v2869, %v2913
        %v2957 = vmul.f32 %v2870, %v2917
        %v2958 = vmul.f32 %v2668, %v2913
        %v2959 = vmul.f32 %v2669, %v2917
        %v2960 = vmul.f32 %v2871, %v2913
        %v2961 = vmul.f32 %v2872, %v2917
        %v2962 = vmul.f32 %v2873, %v2913
        %v2963 = vmul.f32 %v2874, %v2917
        %v2964 = vmul.f32 %v2672, %v2913
        %v2965 = vmul.f32 %v2673, %v2917
        %v2966 = vmul.f32 %v2875, %v2913
        %v2967 = vmul.f32 %v2876, %v2917
        %v2968 = vmul.f32 %v2877, %v2913
        %v2969 = vmul.f32 %v2878, %v2917
        %v2970 = vmul.f32 %v2676, %v2913
        %v2971 = vmul.f32 %v2677, %v2917
        %v2972 = vmul.f32 %v2879, %v2913
        %v2973 = vmul.f32 %v2880, %v2917
        %v2974 = vmul.f32 %v2881, %v2913
        %v2975 = vmul.f32 %v2882, %v2917
        %v2976 = vmul.f32 %v2680, %v2913
        %v2977 = vmul.f32 %v2681, %v2917
        %v2978 = vmul.f32 %v2883, %v2913
        %v2979 = vmul.f32 %v2884, %v2917
        %v2980 = vmul.f32 %v2885, %v2913
        %v2981 = vmul.f32 %v2886, %v2917
        %v2982 = vmul.f32 %v2684, %v2913
        %v2983 = vmul.f32 %v2685, %v2917
        %v2984 = vmul.f32 %v2887, %v2913
        %v2985 = vmul.f32 %v2888, %v2917
        %v2986 = vmul.f32 %v2889, %v2913
        %v2987 = vmul.f32 %v2890, %v2917
        %v2988 = vmul.f32 %v2688, %v2913
        %v2989 = vmul.f32 %v2689, %v2917
        %v2990 = vmul.f32 %v2891, %v2913
        %v2991 = vmul.f32 %v2892, %v2917
        %v2992 = vmul.f32 %v2893, %v2913
        %v2993 = vmul.f32 %v2894, %v2917
        %v2994 = vmul.f32 %v2692, %v2913
        %v2995 = vmul.f32 %v2693, %v2917
        %v2996 = vmul.f32 %v2895, %v2913
        %v2997 = vmul.f32 %v2896, %v2917
        %v2998 = vmul.f32 %v2897, %v2913
        %v2999 = vmul.f32 %v2898, %v2917
        %v3000 = vmul.f32 %v2696, %v2913
        %v3001 = vmul.f32 %v2697, %v2917
        %v3002 = vmul.f32 %v2899, %v2913
        %v3003 = vmul.f32 %v2900, %v2917
        %v3004 = vmul.f32 %v2901, %v2913
        %v3005 = vmul.f32 %v2902, %v2917
        %v3006 = vmul.f32 %v2700, %v2913
        %v3007 = vmul.f32 %v2701, %v2917
        %v3008 = vmul.f32 %v2903, %v2913
        %v3009 = vmul.f32 %v2904, %v2917
        %v3010 = vmul.f32 %v2905, %v2913
        %v3011 = vmul.f32 %v2906, %v2917
        %v3012 = vmul.f32 %v2704, %v2913
        %v3013 = vmul.f32 %v2705, %v2917
        %v3014 = vmul.f32 %v2907, %v2913
        %v3015 = vmul.f32 %v2908, %v2917
        %v3112 = vrot.slane %v2920, 1
        %v3113 = vrot.slane %v2922, 1
        %v3114 = vsel %vm1797, %v3112, %v3113
        %v3115 = vrot.slane %v2921, 1
        %v3116 = vrot.slane %v2923, 1
        %v3117 = vsel %vm1797, %v3115, %v3116
        %v3118 = vrot.slane %v2924, 1
        %v3119 = vsel %vm1797, %v3113, %v3118
        %v3120 = vrot.slane %v2925, 1
        %v3121 = vsel %vm1797, %v3116, %v3120
        %v3122 = vrot.slane %v2926, 1
        %v3123 = vrot.slane %v2928, 1
        %v3124 = vsel %vm1797, %v3122, %v3123
        %v3125 = vrot.slane %v2927, 1
        %v3126 = vrot.slane %v2929, 1
        %v3127 = vsel %vm1797, %v3125, %v3126
        %v3128 = vrot.slane %v2930, 1
        %v3129 = vsel %vm1797, %v3123, %v3128
        %v3130 = vrot.slane %v2931, 1
        %v3131 = vsel %vm1797, %v3126, %v3130
        %v3132 = vrot.slane %v2932, 1
        %v3133 = vrot.slane %v2934, 1
        %v3134 = vsel %vm1797, %v3132, %v3133
        %v3135 = vrot.slane %v2933, 1
        %v3136 = vrot.slane %v2935, 1
        %v3137 = vsel %vm1797, %v3135, %v3136
        %v3138 = vrot.slane %v2936, 1
        %v3139 = vsel %vm1797, %v3133, %v3138
        %v3140 = vrot.slane %v2937, 1
        %v3141 = vsel %vm1797, %v3136, %v3140
        %v3142 = vrot.slane %v2938, 1
        %v3143 = vrot.slane %v2940, 1
        %v3144 = vsel %vm1797, %v3142, %v3143
        %v3145 = vrot.slane %v2939, 1
        %v3146 = vrot.slane %v2941, 1
        %v3147 = vsel %vm1797, %v3145, %v3146
        %v3148 = vrot.slane %v2942, 1
        %v3149 = vsel %vm1797, %v3143, %v3148
        %v3150 = vrot.slane %v2943, 1
        %v3151 = vsel %vm1797, %v3146, %v3150
        %v3152 = vrot.slane %v2944, 1
        %v3153 = vrot.slane %v2946, 1
        %v3154 = vsel %vm1797, %v3152, %v3153
        %v3155 = vrot.slane %v2945, 1
        %v3156 = vrot.slane %v2947, 1
        %v3157 = vsel %vm1797, %v3155, %v3156
        %v3158 = vrot.slane %v2948, 1
        %v3159 = vsel %vm1797, %v3153, %v3158
        %v3160 = vrot.slane %v2949, 1
        %v3161 = vsel %vm1797, %v3156, %v3160
        %v3162 = vrot.slane %v2950, 1
        %v3163 = vrot.slane %v2952, 1
        %v3164 = vsel %vm1797, %v3162, %v3163
        %v3165 = vrot.slane %v2951, 1
        %v3166 = vrot.slane %v2953, 1
        %v3167 = vsel %vm1797, %v3165, %v3166
        %v3168 = vrot.slane %v2954, 1
        %v3169 = vsel %vm1797, %v3163, %v3168
        %v3170 = vrot.slane %v2955, 1
        %v3171 = vsel %vm1797, %v3166, %v3170
        %v3172 = vrot.slane %v2956, 1
        %v3173 = vrot.slane %v2958, 1
        %v3174 = vsel %vm1797, %v3172, %v3173
        %v3175 = vrot.slane %v2957, 1
        %v3176 = vrot.slane %v2959, 1
        %v3177 = vsel %vm1797, %v3175, %v3176
        %v3178 = vrot.slane %v2960, 1
        %v3179 = vsel %vm1797, %v3173, %v3178
        %v3180 = vrot.slane %v2961, 1
        %v3181 = vsel %vm1797, %v3176, %v3180
        %v3182 = vrot.slane %v2962, 1
        %v3183 = vrot.slane %v2964, 1
        %v3184 = vsel %vm1797, %v3182, %v3183
        %v3185 = vrot.slane %v2963, 1
        %v3186 = vrot.slane %v2965, 1
        %v3187 = vsel %vm1797, %v3185, %v3186
        %v3188 = vrot.slane %v2966, 1
        %v3189 = vsel %vm1797, %v3183, %v3188
        %v3190 = vrot.slane %v2967, 1
        %v3191 = vsel %vm1797, %v3186, %v3190
        %v3192 = vrot.slane %v2968, 1
        %v3193 = vrot.slane %v2970, 1
        %v3194 = vsel %vm1797, %v3192, %v3193
        %v3195 = vrot.slane %v2969, 1
        %v3196 = vrot.slane %v2971, 1
        %v3197 = vsel %vm1797, %v3195, %v3196
        %v3198 = vrot.slane %v2972, 1
        %v3199 = vsel %vm1797, %v3193, %v3198
        %v3200 = vrot.slane %v2973, 1
        %v3201 = vsel %vm1797, %v3196, %v3200
        %v3202 = vrot.slane %v2974, 1
        %v3203 = vrot.slane %v2976, 1
        %v3204 = vsel %vm1797, %v3202, %v3203
        %v3205 = vrot.slane %v2975, 1
        %v3206 = vrot.slane %v2977, 1
        %v3207 = vsel %vm1797, %v3205, %v3206
        %v3208 = vrot.slane %v2978, 1
        %v3209 = vsel %vm1797, %v3203, %v3208
        %v3210 = vrot.slane %v2979, 1
        %v3211 = vsel %vm1797, %v3206, %v3210
        %v3212 = vrot.slane %v2980, 1
        %v3213 = vrot.slane %v2982, 1
        %v3214 = vsel %vm1797, %v3212, %v3213
        %v3215 = vrot.slane %v2981, 1
        %v3216 = vrot.slane %v2983, 1
        %v3217 = vsel %vm1797, %v3215, %v3216
        %v3218 = vrot.slane %v2984, 1
        %v3219 = vsel %vm1797, %v3213, %v3218
        %v3220 = vrot.slane %v2985, 1
        %v3221 = vsel %vm1797, %v3216, %v3220
        %v3222 = vrot.slane %v2986, 1
        %v3223 = vrot.slane %v2988, 1
        %v3224 = vsel %vm1797, %v3222, %v3223
        %v3225 = vrot.slane %v2987, 1
        %v3226 = vrot.slane %v2989, 1
        %v3227 = vsel %vm1797, %v3225, %v3226
        %v3228 = vrot.slane %v2990, 1
        %v3229 = vsel %vm1797, %v3223, %v3228
        %v3230 = vrot.slane %v2991, 1
        %v3231 = vsel %vm1797, %v3226, %v3230
        %v3232 = vrot.slane %v2992, 1
        %v3233 = vrot.slane %v2994, 1
        %v3234 = vsel %vm1797, %v3232, %v3233
        %v3235 = vrot.slane %v2993, 1
        %v3236 = vrot.slane %v2995, 1
        %v3237 = vsel %vm1797, %v3235, %v3236
        %v3238 = vrot.slane %v2996, 1
        %v3239 = vsel %vm1797, %v3233, %v3238
        %v3240 = vrot.slane %v2997, 1
        %v3241 = vsel %vm1797, %v3236, %v3240
        %v3242 = vrot.slane %v2998, 1
        %v3243 = vrot.slane %v3000, 1
        %v3244 = vsel %vm1797, %v3242, %v3243
        %v3245 = vrot.slane %v2999, 1
        %v3246 = vrot.slane %v3001, 1
        %v3247 = vsel %vm1797, %v3245, %v3246
        %v3248 = vrot.slane %v3002, 1
        %v3249 = vsel %vm1797, %v3243, %v3248
        %v3250 = vrot.slane %v3003, 1
        %v3251 = vsel %vm1797, %v3246, %v3250
        %v3252 = vrot.slane %v3004, 1
        %v3253 = vrot.slane %v3006, 1
        %v3254 = vsel %vm1797, %v3252, %v3253
        %v3255 = vrot.slane %v3005, 1
        %v3256 = vrot.slane %v3007, 1
        %v3257 = vsel %vm1797, %v3255, %v3256
        %v3258 = vrot.slane %v3008, 1
        %v3259 = vsel %vm1797, %v3253, %v3258
        %v3260 = vrot.slane %v3009, 1
        %v3261 = vsel %vm1797, %v3256, %v3260
        %v3262 = vrot.slane %v3010, 1
        %v3263 = vrot.slane %v3012, 1
        %v3264 = vsel %vm1797, %v3262, %v3263
        %v3265 = vrot.slane %v3011, 1
        %v3266 = vrot.slane %v3013, 1
        %v3267 = vsel %vm1797, %v3265, %v3266
        %v3268 = vrot.slane %v3014, 1
        %v3269 = vsel %vm1797, %v3263, %v3268
        %v3270 = vrot.slane %v3015, 1
        %v3271 = vsel %vm1797, %v3266, %v3270
        %v3336 = vadd.f32 %v2781, %v3114
        %v3337 = vadd.f32 %v2782, %v3117
        %v3338 = vadd.f32 %v2783, %v3119
        %v3339 = vadd.f32 %v2784, %v3121
        %v3340 = vadd.f32 %v2785, %v3124
        %v3341 = vadd.f32 %v2786, %v3127
        %v3342 = vadd.f32 %v2787, %v3129
        %v3343 = vadd.f32 %v2788, %v3131
        %v3344 = vadd.f32 %v2789, %v3134
        %v3345 = vadd.f32 %v2790, %v3137
        %v3346 = vadd.f32 %v2791, %v3139
        %v3347 = vadd.f32 %v2792, %v3141
        %v3348 = vadd.f32 %v2793, %v3144
        %v3349 = vadd.f32 %v2794, %v3147
        %v3350 = vadd.f32 %v2795, %v3149
        %v3351 = vadd.f32 %v2796, %v3151
        %v3352 = vadd.f32 %v2797, %v3154
        %v3353 = vadd.f32 %v2798, %v3157
        %v3354 = vadd.f32 %v2799, %v3159
        %v3355 = vadd.f32 %v2800, %v3161
        %v3356 = vadd.f32 %v2801, %v3164
        %v3357 = vadd.f32 %v2802, %v3167
        %v3358 = vadd.f32 %v2803, %v3169
        %v3359 = vadd.f32 %v2804, %v3171
        %v3360 = vadd.f32 %v2805, %v3174
        %v3361 = vadd.f32 %v2806, %v3177
        %v3362 = vadd.f32 %v2807, %v3179
        %v3363 = vadd.f32 %v2808, %v3181
        %v3364 = vadd.f32 %v2809, %v3184
        %v3365 = vadd.f32 %v2810, %v3187
        %v3366 = vadd.f32 %v2811, %v3189
        %v3367 = vadd.f32 %v2812, %v3191
        %v3368 = vadd.f32 %v2813, %v3194
        %v3369 = vadd.f32 %v2814, %v3197
        %v3370 = vadd.f32 %v2815, %v3199
        %v3371 = vadd.f32 %v2816, %v3201
        %v3372 = vadd.f32 %v2817, %v3204
        %v3373 = vadd.f32 %v2818, %v3207
        %v3374 = vadd.f32 %v2819, %v3209
        %v3375 = vadd.f32 %v2820, %v3211
        %v3376 = vadd.f32 %v2821, %v3214
        %v3377 = vadd.f32 %v2822, %v3217
        %v3378 = vadd.f32 %v2823, %v3219
        %v3379 = vadd.f32 %v2824, %v3221
        %v3380 = vadd.f32 %v2825, %v3224
        %v3381 = vadd.f32 %v2826, %v3227
        %v3382 = vadd.f32 %v2827, %v3229
        %v3383 = vadd.f32 %v2828, %v3231
        %v3384 = vadd.f32 %v2829, %v3234
        %v3385 = vadd.f32 %v2830, %v3237
        %v3386 = vadd.f32 %v2831, %v3239
        %v3387 = vadd.f32 %v2832, %v3241
        %v3388 = vadd.f32 %v2833, %v3244
        %v3389 = vadd.f32 %v2834, %v3247
        %v3390 = vadd.f32 %v2835, %v3249
        %v3391 = vadd.f32 %v2836, %v3251
        %v3392 = vadd.f32 %v2837, %v3254
        %v3393 = vadd.f32 %v2838, %v3257
        %v3394 = vadd.f32 %v2839, %v3259
        %v3395 = vadd.f32 %v2840, %v3261
        %v3396 = vadd.f32 %v2841, %v3264
        %v3397 = vadd.f32 %v2842, %v3267
        %v3398 = vadd.f32 %v2843, %v3269
        %v3399 = vadd.f32 %v2844, %v3271
        %v3400 = vld [vmem:[%s1221] sm:$0xfc]
        %v3401 = vld [vmem:[%s1221 + $0x8] sm:$0xfc]
        %v3402 = vld [vmem:[%s1221 + $0x20] sm:$0x3]
        %v3403 = vld [vmem:[%s1221 + $0x28] sm:$0x3]
        %v3404 = vld [vmem:[%s1221 + $0x30] sm:$0xfc]
        %v3405 = vld [vmem:[%s1221 + $0x38] sm:$0xfc]
        %v3406 = vld [vmem:[%s1221 + $0x50] sm:$0x3]
        %v3407 = vld [vmem:[%s1221 + $0x58] sm:$0x3]
        %v3408 = vld [vmem:[%s1221 + $0x60] sm:$0xfc]
        %v3409 = vld [vmem:[%s1221 + $0x68] sm:$0xfc]
        %v3410 = vld [vmem:[%s1221 + $0x80] sm:$0x3]
        %v3411 = vld [vmem:[%s1221 + $0x88] sm:$0x3]
        %v3412 = vld [vmem:[%s1221 + $0x90] sm:$0xfc]
        %v3413 = vld [vmem:[%s1221 + $0x98] sm:$0xfc]
        %v3414 = vld [vmem:[%s1221 + $0xb0] sm:$0x3]
        %v3415 = vld [vmem:[%s1221 + $0xb8] sm:$0x3]
        %v3416 = vld [vmem:[%s1221 + $0xc0] sm:$0xfc]
        %v3417 = vld [vmem:[%s1221 + $0xc8] sm:$0xfc]
        %v3418 = vld [vmem:[%s1221 + $0xe0] sm:$0x3]
        %v3419 = vld [vmem:[%s1221 + $0xe8] sm:$0x3]
        %v3420 = vld [vmem:[%s1221 + $0xf0] sm:$0xfc]
        %v3421 = vld [vmem:[%s1221 + $0xf8] sm:$0xfc]
        %v3422 = vld [vmem:[%s1221 + $0x110] sm:$0x3]
        %v3423 = vld [vmem:[%s1221 + $0x118] sm:$0x3]
        %v3424 = vld [vmem:[%s1221 + $0x120] sm:$0xfc]
        %v3425 = vld [vmem:[%s1221 + $0x128] sm:$0xfc]
        %v3426 = vld [vmem:[%s1221 + $0x140] sm:$0x3]
        %v3427 = vld [vmem:[%s1221 + $0x148] sm:$0x3]
        %v3428 = vld [vmem:[%s1221 + $0x150] sm:$0xfc]
        %v3429 = vld [vmem:[%s1221 + $0x158] sm:$0xfc]
        %v3430 = vld [vmem:[%s1221 + $0x170] sm:$0x3]
        %v3431 = vld [vmem:[%s1221 + $0x178] sm:$0x3]
        %v3432 = vld [vmem:[%s1221 + $0x180] sm:$0xfc]
        %v3433 = vld [vmem:[%s1221 + $0x188] sm:$0xfc]
        %v3434 = vld [vmem:[%s1221 + $0x1a0] sm:$0x3]
        %v3435 = vld [vmem:[%s1221 + $0x1a8] sm:$0x3]
        %v3436 = vld [vmem:[%s1221 + $0x1b0] sm:$0xfc]
        %v3437 = vld [vmem:[%s1221 + $0x1b8] sm:$0xfc]
        %v3438 = vld [vmem:[%s1221 + $0x1d0] sm:$0x3]
        %v3439 = vld [vmem:[%s1221 + $0x1d8] sm:$0x3]
        %v3440 = vld [vmem:[%s1221 + $0x1e0] sm:$0xfc]
        %v3441 = vld [vmem:[%s1221 + $0x1e8] sm:$0xfc]
        %v3442 = vld [vmem:[%s1221 + $0x200] sm:$0x3]
        %v3443 = vld [vmem:[%s1221 + $0x208] sm:$0x3]
        %v3444 = vld [vmem:[%s1221 + $0x210] sm:$0xfc]
        %v3445 = vld [vmem:[%s1221 + $0x218] sm:$0xfc]
        %v3446 = vld [vmem:[%s1221 + $0x230] sm:$0x3]
        %v3447 = vld [vmem:[%s1221 + $0x238] sm:$0x3]
        %v3448 = vld [vmem:[%s1221 + $0x240] sm:$0xfc]
        %v3449 = vld [vmem:[%s1221 + $0x248] sm:$0xfc]
        %v3450 = vld [vmem:[%s1221 + $0x260] sm:$0x3]
        %v3451 = vld [vmem:[%s1221 + $0x268] sm:$0x3]
        %v3452 = vld [vmem:[%s1221 + $0x270] sm:$0xfc]
        %v3453 = vld [vmem:[%s1221 + $0x278] sm:$0xfc]
        %v3454 = vld [vmem:[%s1221 + $0x290] sm:$0x3]
        %v3455 = vld [vmem:[%s1221 + $0x298] sm:$0x3]
        %v3456 = vld [vmem:[%s1221 + $0x2a0] sm:$0xfc]
        %v3457 = vld [vmem:[%s1221 + $0x2a8] sm:$0xfc]
        %v3458 = vld [vmem:[%s1221 + $0x2c0] sm:$0x3]
        %v3459 = vld [vmem:[%s1221 + $0x2c8] sm:$0x3]
        %v3460 = vld [vmem:[%s1221 + $0x2d0] sm:$0xfc]
        %v3461 = vld [vmem:[%s1221 + $0x2d8] sm:$0xfc]
        %v3462 = vld [vmem:[%s1221 + $0x2f0] sm:$0x3]
        %v3463 = vld [vmem:[%s1221 + $0x2f8] sm:$0x3]
        %v3465 = vlaneseq
        %v3466 = vshrl.u32 %v3465, 7
        %v3467 = vsub.s32 0, %v3466
        %v3468 = vrot.slane %v1323, %v3467
        %v3469 = vlaneseq
        %v3470 = vshrl.u32 %v3469, 7
        %v3471 = vsub.s32 1, %v3470
        %v3472 = vrot.slane %v1323, %v3471
        %v3475 = vmul.f32 %v3400, %v3468
        %v3476 = vmul.f32 %v3401, %v3472
        %v3477 = vmul.f32 %v2644, %v3468
        %v3478 = vmul.f32 %v2645, %v3472
        %v3479 = vmul.f32 %v3402, %v3468
        %v3480 = vmul.f32 %v3403, %v3472
        %v3481 = vmul.f32 %v3404, %v3468
        %v3482 = vmul.f32 %v3405, %v3472
        %v3483 = vmul.f32 %v2648, %v3468
        %v3484 = vmul.f32 %v2649, %v3472
        %v3485 = vmul.f32 %v3406, %v3468
        %v3486 = vmul.f32 %v3407, %v3472
        %v3487 = vmul.f32 %v3408, %v3468
        %v3488 = vmul.f32 %v3409, %v3472
        %v3489 = vmul.f32 %v2652, %v3468
        %v3490 = vmul.f32 %v2653, %v3472
        %v3491 = vmul.f32 %v3410, %v3468
        %v3492 = vmul.f32 %v3411, %v3472
        %v3493 = vmul.f32 %v3412, %v3468
        %v3494 = vmul.f32 %v3413, %v3472
        %v3495 = vmul.f32 %v2656, %v3468
        %v3496 = vmul.f32 %v2657, %v3472
        %v3497 = vmul.f32 %v3414, %v3468
        %v3498 = vmul.f32 %v3415, %v3472
        %v3499 = vmul.f32 %v3416, %v3468
        %v3500 = vmul.f32 %v3417, %v3472
        %v3501 = vmul.f32 %v2660, %v3468
        %v3502 = vmul.f32 %v2661, %v3472
        %v3503 = vmul.f32 %v3418, %v3468
        %v3504 = vmul.f32 %v3419, %v3472
        %v3505 = vmul.f32 %v3420, %v3468
        %v3506 = vmul.f32 %v3421, %v3472
        %v3507 = vmul.f32 %v2664, %v3468
        %v3508 = vmul.f32 %v2665, %v3472
        %v3509 = vmul.f32 %v3422, %v3468
        %v3510 = vmul.f32 %v3423, %v3472
        %v3511 = vmul.f32 %v3424, %v3468
        %v3512 = vmul.f32 %v3425, %v3472
        %v3513 = vmul.f32 %v2668, %v3468
        %v3514 = vmul.f32 %v2669, %v3472
        %v3515 = vmul.f32 %v3426, %v3468
        %v3516 = vmul.f32 %v3427, %v3472
        %v3517 = vmul.f32 %v3428, %v3468
        %v3518 = vmul.f32 %v3429, %v3472
        %v3519 = vmul.f32 %v2672, %v3468
        %v3520 = vmul.f32 %v2673, %v3472
        %v3521 = vmul.f32 %v3430, %v3468
        %v3522 = vmul.f32 %v3431, %v3472
        %v3523 = vmul.f32 %v3432, %v3468
        %v3524 = vmul.f32 %v3433, %v3472
        %v3525 = vmul.f32 %v2676, %v3468
        %v3526 = vmul.f32 %v2677, %v3472
        %v3527 = vmul.f32 %v3434, %v3468
        %v3528 = vmul.f32 %v3435, %v3472
        %v3529 = vmul.f32 %v3436, %v3468
        %v3530 = vmul.f32 %v3437, %v3472
        %v3531 = vmul.f32 %v2680, %v3468
        %v3532 = vmul.f32 %v2681, %v3472
        %v3533 = vmul.f32 %v3438, %v3468
        %v3534 = vmul.f32 %v3439, %v3472
        %v3535 = vmul.f32 %v3440, %v3468
        %v3536 = vmul.f32 %v3441, %v3472
        %v3537 = vmul.f32 %v2684, %v3468
        %v3538 = vmul.f32 %v2685, %v3472
        %v3539 = vmul.f32 %v3442, %v3468
        %v3540 = vmul.f32 %v3443, %v3472
        %v3541 = vmul.f32 %v3444, %v3468
        %v3542 = vmul.f32 %v3445, %v3472
        %v3543 = vmul.f32 %v2688, %v3468
        %v3544 = vmul.f32 %v2689, %v3472
        %v3545 = vmul.f32 %v3446, %v3468
        %v3546 = vmul.f32 %v3447, %v3472
        %v3547 = vmul.f32 %v3448, %v3468
        %v3548 = vmul.f32 %v3449, %v3472
        %v3549 = vmul.f32 %v2692, %v3468
        %v3550 = vmul.f32 %v2693, %v3472
        %v3551 = vmul.f32 %v3450, %v3468
        %v3552 = vmul.f32 %v3451, %v3472
        %v3553 = vmul.f32 %v3452, %v3468
        %v3554 = vmul.f32 %v3453, %v3472
        %v3555 = vmul.f32 %v2696, %v3468
        %v3556 = vmul.f32 %v2697, %v3472
        %v3557 = vmul.f32 %v3454, %v3468
        %v3558 = vmul.f32 %v3455, %v3472
        %v3559 = vmul.f32 %v3456, %v3468
        %v3560 = vmul.f32 %v3457, %v3472
        %v3561 = vmul.f32 %v2700, %v3468
        %v3562 = vmul.f32 %v2701, %v3472
        %v3563 = vmul.f32 %v3458, %v3468
        %v3564 = vmul.f32 %v3459, %v3472
        %v3565 = vmul.f32 %v3460, %v3468
        %v3566 = vmul.f32 %v3461, %v3472
        %v3567 = vmul.f32 %v2704, %v3468
        %v3568 = vmul.f32 %v2705, %v3472
        %v3569 = vmul.f32 %v3462, %v3468
        %v3570 = vmul.f32 %v3463, %v3472
        %v3667 = vrot.slane %v3475, 2
        %v3668 = vrot.slane %v3477, 2
        %v3669 = vsel %vm2353, %v3667, %v3668
        %v3670 = vrot.slane %v3476, 2
        %v3671 = vrot.slane %v3478, 2
        %v3672 = vsel %vm2353, %v3670, %v3671
        %v3673 = vrot.slane %v3479, 2
        %v3674 = vsel %vm2353, %v3668, %v3673
        %v3675 = vrot.slane %v3480, 2
        %v3676 = vsel %vm2353, %v3671, %v3675
        %v3677 = vrot.slane %v3481, 2
        %v3678 = vrot.slane %v3483, 2
        %v3679 = vsel %vm2353, %v3677, %v3678
        %v3680 = vrot.slane %v3482, 2
        %v3681 = vrot.slane %v3484, 2
        %v3682 = vsel %vm2353, %v3680, %v3681
        %v3683 = vrot.slane %v3485, 2
        %v3684 = vsel %vm2353, %v3678, %v3683
        %v3685 = vrot.slane %v3486, 2
        %v3686 = vsel %vm2353, %v3681, %v3685
        %v3687 = vrot.slane %v3487, 2
        %v3688 = vrot.slane %v3489, 2
        %v3689 = vsel %vm2353, %v3687, %v3688
        %v3690 = vrot.slane %v3488, 2
        %v3691 = vrot.slane %v3490, 2
        %v3692 = vsel %vm2353, %v3690, %v3691
        %v3693 = vrot.slane %v3491, 2
        %v3694 = vsel %vm2353, %v3688, %v3693
        %v3695 = vrot.slane %v3492, 2
        %v3696 = vsel %vm2353, %v3691, %v3695
        %v3697 = vrot.slane %v3493, 2
        %v3698 = vrot.slane %v3495, 2
        %v3699 = vsel %vm2353, %v3697, %v3698
        %v3700 = vrot.slane %v3494, 2
        %v3701 = vrot.slane %v3496, 2
        %v3702 = vsel %vm2353, %v3700, %v3701
        %v3703 = vrot.slane %v3497, 2
        %v3704 = vsel %vm2353, %v3698, %v3703
        %v3705 = vrot.slane %v3498, 2
        %v3706 = vsel %vm2353, %v3701, %v3705
        %v3707 = vrot.slane %v3499, 2
        %v3708 = vrot.slane %v3501, 2
        %v3709 = vsel %vm2353, %v3707, %v3708
        %v3710 = vrot.slane %v3500, 2
        %v3711 = vrot.slane %v3502, 2
        %v3712 = vsel %vm2353, %v3710, %v3711
        %v3713 = vrot.slane %v3503, 2
        %v3714 = vsel %vm2353, %v3708, %v3713
        %v3715 = vrot.slane %v3504, 2
        %v3716 = vsel %vm2353, %v3711, %v3715
        %v3717 = vrot.slane %v3505, 2
        %v3718 = vrot.slane %v3507, 2
        %v3719 = vsel %vm2353, %v3717, %v3718
        %v3720 = vrot.slane %v3506, 2
        %v3721 = vrot.slane %v3508, 2
        %v3722 = vsel %vm2353, %v3720, %v3721
        %v3723 = vrot.slane %v3509, 2
        %v3724 = vsel %vm2353, %v3718, %v3723
        %v3725 = vrot.slane %v3510, 2
        %v3726 = vsel %vm2353, %v3721, %v3725
        %v3727 = vrot.slane %v3511, 2
        %v3728 = vrot.slane %v3513, 2
        %v3729 = vsel %vm2353, %v3727, %v3728
        %v3730 = vrot.slane %v3512, 2
        %v3731 = vrot.slane %v3514, 2
        %v3732 = vsel %vm2353, %v3730, %v3731
        %v3733 = vrot.slane %v3515, 2
        %v3734 = vsel %vm2353, %v3728, %v3733
        %v3735 = vrot.slane %v3516, 2
        %v3736 = vsel %vm2353, %v3731, %v3735
        %v3737 = vrot.slane %v3517, 2
        %v3738 = vrot.slane %v3519, 2
        %v3739 = vsel %vm2353, %v3737, %v3738
        %v3740 = vrot.slane %v3518, 2
        %v3741 = vrot.slane %v3520, 2
        %v3742 = vsel %vm2353, %v3740, %v3741
        %v3743 = vrot.slane %v3521, 2
        %v3744 = vsel %vm2353, %v3738, %v3743
        %v3745 = vrot.slane %v3522, 2
        %v3746 = vsel %vm2353, %v3741, %v3745
        %v3747 = vrot.slane %v3523, 2
        %v3748 = vrot.slane %v3525, 2
        %v3749 = vsel %vm2353, %v3747, %v3748
        %v3750 = vrot.slane %v3524, 2
        %v3751 = vrot.slane %v3526, 2
        %v3752 = vsel %vm2353, %v3750, %v3751
        %v3753 = vrot.slane %v3527, 2
        %v3754 = vsel %vm2353, %v3748, %v3753
        %v3755 = vrot.slane %v3528, 2
        %v3756 = vsel %vm2353, %v3751, %v3755
        %v3757 = vrot.slane %v3529, 2
        %v3758 = vrot.slane %v3531, 2
        %v3759 = vsel %vm2353, %v3757, %v3758
        %v3760 = vrot.slane %v3530, 2
        %v3761 = vrot.slane %v3532, 2
        %v3762 = vsel %vm2353, %v3760, %v3761
        %v3763 = vrot.slane %v3533, 2
        %v3764 = vsel %vm2353, %v3758, %v3763
        %v3765 = vrot.slane %v3534, 2
        %v3766 = vsel %vm2353, %v3761, %v3765
        %v3767 = vrot.slane %v3535, 2
        %v3768 = vrot.slane %v3537, 2
        %v3769 = vsel %vm2353, %v3767, %v3768
        %v3770 = vrot.slane %v3536, 2
        %v3771 = vrot.slane %v3538, 2
        %v3772 = vsel %vm2353, %v3770, %v3771
        %v3773 = vrot.slane %v3539, 2
        %v3774 = vsel %vm2353, %v3768, %v3773
        %v3775 = vrot.slane %v3540, 2
        %v3776 = vsel %vm2353, %v3771, %v3775
        %v3777 = vrot.slane %v3541, 2
        %v3778 = vrot.slane %v3543, 2
        %v3779 = vsel %vm2353, %v3777, %v3778
        %v3780 = vrot.slane %v3542, 2
        %v3781 = vrot.slane %v3544, 2
        %v3782 = vsel %vm2353, %v3780, %v3781
        %v3783 = vrot.slane %v3545, 2
        %v3784 = vsel %vm2353, %v3778, %v3783
        %v3785 = vrot.slane %v3546, 2
        %v3786 = vsel %vm2353, %v3781, %v3785
        %v3787 = vrot.slane %v3547, 2
        %v3788 = vrot.slane %v3549, 2
        %v3789 = vsel %vm2353, %v3787, %v3788
        %v3790 = vrot.slane %v3548, 2
        %v3791 = vrot.slane %v3550, 2
        %v3792 = vsel %vm2353, %v3790, %v3791
        %v3793 = vrot.slane %v3551, 2
        %v3794 = vsel %vm2353, %v3788, %v3793
        %v3795 = vrot.slane %v3552, 2
        %v3796 = vsel %vm2353, %v3791, %v3795
        %v3797 = vrot.slane %v3553, 2
        %v3798 = vrot.slane %v3555, 2
        %v3799 = vsel %vm2353, %v3797, %v3798
        %v3800 = vrot.slane %v3554, 2
        %v3801 = vrot.slane %v3556, 2
        %v3802 = vsel %vm2353, %v3800, %v3801
        %v3803 = vrot.slane %v3557, 2
        %v3804 = vsel %vm2353, %v3798, %v3803
        %v3805 = vrot.slane %v3558, 2
        %v3806 = vsel %vm2353, %v3801, %v3805
        %v3807 = vrot.slane %v3559, 2
        %v3808 = vrot.slane %v3561, 2
        %v3809 = vsel %vm2353, %v3807, %v3808
        %v3810 = vrot.slane %v3560, 2
        %v3811 = vrot.slane %v3562, 2
        %v3812 = vsel %vm2353, %v3810, %v3811
        %v3813 = vrot.slane %v3563, 2
        %v3814 = vsel %vm2353, %v3808, %v3813
        %v3815 = vrot.slane %v3564, 2
        %v3816 = vsel %vm2353, %v3811, %v3815
        %v3817 = vrot.slane %v3565, 2
        %v3818 = vrot.slane %v3567, 2
        %v3819 = vsel %vm2353, %v3817, %v3818
        %v3820 = vrot.slane %v3566, 2
        %v3821 = vrot.slane %v3568, 2
        %v3822 = vsel %vm2353, %v3820, %v3821
        %v3823 = vrot.slane %v3569, 2
        %v3824 = vsel %vm2353, %v3818, %v3823
        %v3825 = vrot.slane %v3570, 2
        %v3826 = vsel %vm2353, %v3821, %v3825
        %v3891 = vadd.f32 %v3336, %v3669
        %v3892 = vadd.f32 %v3337, %v3672
        %v3893 = vadd.f32 %v3338, %v3674
        %v3894 = vadd.f32 %v3339, %v3676
        %v3895 = vadd.f32 %v3340, %v3679
        %v3896 = vadd.f32 %v3341, %v3682
        %v3897 = vadd.f32 %v3342, %v3684
        %v3898 = vadd.f32 %v3343, %v3686
        %v3899 = vadd.f32 %v3344, %v3689
        %v3900 = vadd.f32 %v3345, %v3692
        %v3901 = vadd.f32 %v3346, %v3694
        %v3902 = vadd.f32 %v3347, %v3696
        %v3903 = vadd.f32 %v3348, %v3699
        %v3904 = vadd.f32 %v3349, %v3702
        %v3905 = vadd.f32 %v3350, %v3704
        %v3906 = vadd.f32 %v3351, %v3706
        %v3907 = vadd.f32 %v3352, %v3709
        %v3908 = vadd.f32 %v3353, %v3712
        %v3909 = vadd.f32 %v3354, %v3714
        %v3910 = vadd.f32 %v3355, %v3716
        %v3911 = vadd.f32 %v3356, %v3719
        %v3912 = vadd.f32 %v3357, %v3722
        %v3913 = vadd.f32 %v3358, %v3724
        %v3914 = vadd.f32 %v3359, %v3726
        %v3915 = vadd.f32 %v3360, %v3729
        %v3916 = vadd.f32 %v3361, %v3732
        %v3917 = vadd.f32 %v3362, %v3734
        %v3918 = vadd.f32 %v3363, %v3736
        %v3919 = vadd.f32 %v3364, %v3739
        %v3920 = vadd.f32 %v3365, %v3742
        %v3921 = vadd.f32 %v3366, %v3744
        %v3922 = vadd.f32 %v3367, %v3746
        %v3923 = vadd.f32 %v3368, %v3749
        %v3924 = vadd.f32 %v3369, %v3752
        %v3925 = vadd.f32 %v3370, %v3754
        %v3926 = vadd.f32 %v3371, %v3756
        %v3927 = vadd.f32 %v3372, %v3759
        %v3928 = vadd.f32 %v3373, %v3762
        %v3929 = vadd.f32 %v3374, %v3764
        %v3930 = vadd.f32 %v3375, %v3766
        %v3931 = vadd.f32 %v3376, %v3769
        %v3932 = vadd.f32 %v3377, %v3772
        %v3933 = vadd.f32 %v3378, %v3774
        %v3934 = vadd.f32 %v3379, %v3776
        %v3935 = vadd.f32 %v3380, %v3779
        %v3936 = vadd.f32 %v3381, %v3782
        %v3937 = vadd.f32 %v3382, %v3784
        %v3938 = vadd.f32 %v3383, %v3786
        %v3939 = vadd.f32 %v3384, %v3789
        %v3940 = vadd.f32 %v3385, %v3792
        %v3941 = vadd.f32 %v3386, %v3794
        %v3942 = vadd.f32 %v3387, %v3796
        %v3943 = vadd.f32 %v3388, %v3799
        %v3944 = vadd.f32 %v3389, %v3802
        %v3945 = vadd.f32 %v3390, %v3804
        %v3946 = vadd.f32 %v3391, %v3806
        %v3947 = vadd.f32 %v3392, %v3809
        %v3948 = vadd.f32 %v3393, %v3812
        %v3949 = vadd.f32 %v3394, %v3814
        %v3950 = vadd.f32 %v3395, %v3816
        %v3951 = vadd.f32 %v3396, %v3819
        %v3952 = vadd.f32 %v3397, %v3822
        %v3953 = vadd.f32 %v3398, %v3824
        %v3954 = vadd.f32 %v3399, %v3826
        %s3955 = scalar_lea.vmem [#allocation2], 96
        %v3956 = vld [vmem:[%s3955] sm:$0xff]
        %v3957 = vld [vmem:[%s3955 + $0x8] sm:$0xff]
        %v3958 = vld [vmem:[%s3955 + $0x10] sm:$0xff]
        %v3959 = vld [vmem:[%s3955 + $0x18] sm:$0xff]
        %v3960 = vld [vmem:[%s3955 + $0x30] sm:$0xff]
        %v3961 = vld [vmem:[%s3955 + $0x38] sm:$0xff]
        %v3962 = vld [vmem:[%s3955 + $0x40] sm:$0xff]
        %v3963 = vld [vmem:[%s3955 + $0x48] sm:$0xff]
        %v3964 = vld [vmem:[%s3955 + $0x60] sm:$0xff]
        %v3965 = vld [vmem:[%s3955 + $0x68] sm:$0xff]
        %v3966 = vld [vmem:[%s3955 + $0x70] sm:$0xff]
        %v3967 = vld [vmem:[%s3955 + $0x78] sm:$0xff]
        %v3968 = vld [vmem:[%s3955 + $0x90] sm:$0xff]
        %v3969 = vld [vmem:[%s3955 + $0x98] sm:$0xff]
        %v3970 = vld [vmem:[%s3955 + $0xa0] sm:$0xff]
        %v3971 = vld [vmem:[%s3955 + $0xa8] sm:$0xff]
        %v3972 = vld [vmem:[%s3955 + $0xc0] sm:$0xff]
        %v3973 = vld [vmem:[%s3955 + $0xc8] sm:$0xff]
        %v3974 = vld [vmem:[%s3955 + $0xd0] sm:$0xff]
        %v3975 = vld [vmem:[%s3955 + $0xd8] sm:$0xff]
        %v3976 = vld [vmem:[%s3955 + $0xf0] sm:$0xff]
        %v3977 = vld [vmem:[%s3955 + $0xf8] sm:$0xff]
        %v3978 = vld [vmem:[%s3955 + $0x100] sm:$0xff]
        %v3979 = vld [vmem:[%s3955 + $0x108] sm:$0xff]
        %v3980 = vld [vmem:[%s3955 + $0x120] sm:$0xff]
        %v3981 = vld [vmem:[%s3955 + $0x128] sm:$0xff]
        %v3982 = vld [vmem:[%s3955 + $0x130] sm:$0xff]
        %v3983 = vld [vmem:[%s3955 + $0x138] sm:$0xff]
        %v3984 = vld [vmem:[%s3955 + $0x150] sm:$0xff]
        %v3985 = vld [vmem:[%s3955 + $0x158] sm:$0xff]
        %v3986 = vld [vmem:[%s3955 + $0x160] sm:$0xff]
        %v3987 = vld [vmem:[%s3955 + $0x168] sm:$0xff]
        %v3988 = vld [vmem:[%s3955 + $0x180] sm:$0xff]
        %v3989 = vld [vmem:[%s3955 + $0x188] sm:$0xff]
        %v3990 = vld [vmem:[%s3955 + $0x190] sm:$0xff]
        %v3991 = vld [vmem:[%s3955 + $0x198] sm:$0xff]
        %v3992 = vld [vmem:[%s3955 + $0x1b0] sm:$0xff]
        %v3993 = vld [vmem:[%s3955 + $0x1b8] sm:$0xff]
        %v3994 = vld [vmem:[%s3955 + $0x1c0] sm:$0xff]
        %v3995 = vld [vmem:[%s3955 + $0x1c8] sm:$0xff]
        %v3996 = vld [vmem:[%s3955 + $0x1e0] sm:$0xff]
        %v3997 = vld [vmem:[%s3955 + $0x1e8] sm:$0xff]
        %v3998 = vld [vmem:[%s3955 + $0x1f0] sm:$0xff]
        %v3999 = vld [vmem:[%s3955 + $0x1f8] sm:$0xff]
        %v4000 = vld [vmem:[%s3955 + $0x210] sm:$0xff]
        %v4001 = vld [vmem:[%s3955 + $0x218] sm:$0xff]
        %v4002 = vld [vmem:[%s3955 + $0x220] sm:$0xff]
        %v4003 = vld [vmem:[%s3955 + $0x228] sm:$0xff]
        %v4004 = vld [vmem:[%s3955 + $0x240] sm:$0xff]
        %v4005 = vld [vmem:[%s3955 + $0x248] sm:$0xff]
        %v4006 = vld [vmem:[%s3955 + $0x250] sm:$0xff]
        %v4007 = vld [vmem:[%s3955 + $0x258] sm:$0xff]
        %v4008 = vld [vmem:[%s3955 + $0x270] sm:$0xff]
        %v4009 = vld [vmem:[%s3955 + $0x278] sm:$0xff]
        %v4010 = vld [vmem:[%s3955 + $0x280] sm:$0xff]
        %v4011 = vld [vmem:[%s3955 + $0x288] sm:$0xff]
        %v4012 = vld [vmem:[%s3955 + $0x2a0] sm:$0xff]
        %v4013 = vld [vmem:[%s3955 + $0x2a8] sm:$0xff]
        %v4014 = vld [vmem:[%s3955 + $0x2b0] sm:$0xff]
        %v4015 = vld [vmem:[%s3955 + $0x2b8] sm:$0xff]
        %v4016 = vld [vmem:[%s3955 + $0x2d0] sm:$0xff]
        %v4017 = vld [vmem:[%s3955 + $0x2d8] sm:$0xff]
        %v4018 = vld [vmem:[%s3955 + $0x2e0] sm:$0xff]
        %v4019 = vld [vmem:[%s3955 + $0x2e8] sm:$0xff]
        %v4021 = vlaneseq
        %v4022 = vshrl.u32 %v4021, 7
        %v4023 = vsub.s32 0, %v4022
        %v4024 = vrot.slane %v1324, %v4023
        %v4025 = vlaneseq
        %v4026 = vshrl.u32 %v4025, 7
        %v4027 = vsub.s32 1, %v4026
        %v4028 = vrot.slane %v1324, %v4027
        %v4031 = vmul.f32 %v3956, %v4024
        %v4032 = vmul.f32 %v3957, %v4028
        %v4033 = vmul.f32 %v3958, %v4024
        %v4034 = vmul.f32 %v3959, %v4028
        %v4035 = vmul.f32 %v3960, %v4024
        %v4036 = vmul.f32 %v3961, %v4028
        %v4037 = vmul.f32 %v3962, %v4024
        %v4038 = vmul.f32 %v3963, %v4028
        %v4039 = vmul.f32 %v3964, %v4024
        %v4040 = vmul.f32 %v3965, %v4028
        %v4041 = vmul.f32 %v3966, %v4024
        %v4042 = vmul.f32 %v3967, %v4028
        %v4043 = vmul.f32 %v3968, %v4024
        %v4044 = vmul.f32 %v3969, %v4028
        %v4045 = vmul.f32 %v3970, %v4024
        %v4046 = vmul.f32 %v3971, %v4028
        %v4047 = vmul.f32 %v3972, %v4024
        %v4048 = vmul.f32 %v3973, %v4028
        %v4049 = vmul.f32 %v3974, %v4024
        %v4050 = vmul.f32 %v3975, %v4028
        %v4051 = vmul.f32 %v3976, %v4024
        %v4052 = vmul.f32 %v3977, %v4028
        %v4053 = vmul.f32 %v3978, %v4024
        %v4054 = vmul.f32 %v3979, %v4028
        %v4055 = vmul.f32 %v3980, %v4024
        %v4056 = vmul.f32 %v3981, %v4028
        %v4057 = vmul.f32 %v3982, %v4024
        %v4058 = vmul.f32 %v3983, %v4028
        %v4059 = vmul.f32 %v3984, %v4024
        %v4060 = vmul.f32 %v3985, %v4028
        %v4061 = vmul.f32 %v3986, %v4024
        %v4062 = vmul.f32 %v3987, %v4028
        %v4063 = vmul.f32 %v3988, %v4024
        %v4064 = vmul.f32 %v3989, %v4028
        %v4065 = vmul.f32 %v3990, %v4024
        %v4066 = vmul.f32 %v3991, %v4028
        %v4067 = vmul.f32 %v3992, %v4024
        %v4068 = vmul.f32 %v3993, %v4028
        %v4069 = vmul.f32 %v3994, %v4024
        %v4070 = vmul.f32 %v3995, %v4028
        %v4071 = vmul.f32 %v3996, %v4024
        %v4072 = vmul.f32 %v3997, %v4028
        %v4073 = vmul.f32 %v3998, %v4024
        %v4074 = vmul.f32 %v3999, %v4028
        %v4075 = vmul.f32 %v4000, %v4024
        %v4076 = vmul.f32 %v4001, %v4028
        %v4077 = vmul.f32 %v4002, %v4024
        %v4078 = vmul.f32 %v4003, %v4028
        %v4079 = vmul.f32 %v4004, %v4024
        %v4080 = vmul.f32 %v4005, %v4028
        %v4081 = vmul.f32 %v4006, %v4024
        %v4082 = vmul.f32 %v4007, %v4028
        %v4083 = vmul.f32 %v4008, %v4024
        %v4084 = vmul.f32 %v4009, %v4028
        %v4085 = vmul.f32 %v4010, %v4024
        %v4086 = vmul.f32 %v4011, %v4028
        %v4087 = vmul.f32 %v4012, %v4024
        %v4088 = vmul.f32 %v4013, %v4028
        %v4089 = vmul.f32 %v4014, %v4024
        %v4090 = vmul.f32 %v4015, %v4028
        %v4091 = vmul.f32 %v4016, %v4024
        %v4092 = vmul.f32 %v4017, %v4028
        %v4093 = vmul.f32 %v4018, %v4024
        %v4094 = vmul.f32 %v4019, %v4028
        %v4095 = vadd.f32 %v3891, %v4031
        %v4096 = vadd.f32 %v3892, %v4032
        %v4097 = vadd.f32 %v3893, %v4033
        %v4098 = vadd.f32 %v3894, %v4034
        %v4099 = vadd.f32 %v3895, %v4035
        %v4100 = vadd.f32 %v3896, %v4036
        %v4101 = vadd.f32 %v3897, %v4037
        %v4102 = vadd.f32 %v3898, %v4038
        %v4103 = vadd.f32 %v3899, %v4039
        %v4104 = vadd.f32 %v3900, %v4040
        %v4105 = vadd.f32 %v3901, %v4041
        %v4106 = vadd.f32 %v3902, %v4042
        %v4107 = vadd.f32 %v3903, %v4043
        %v4108 = vadd.f32 %v3904, %v4044
        %v4109 = vadd.f32 %v3905, %v4045
        %v4110 = vadd.f32 %v3906, %v4046
        %v4111 = vadd.f32 %v3907, %v4047
        %v4112 = vadd.f32 %v3908, %v4048
        %v4113 = vadd.f32 %v3909, %v4049
        %v4114 = vadd.f32 %v3910, %v4050
        %v4115 = vadd.f32 %v3911, %v4051
        %v4116 = vadd.f32 %v3912, %v4052
        %v4117 = vadd.f32 %v3913, %v4053
        %v4118 = vadd.f32 %v3914, %v4054
        %v4119 = vadd.f32 %v3915, %v4055
        %v4120 = vadd.f32 %v3916, %v4056
        %v4121 = vadd.f32 %v3917, %v4057
        %v4122 = vadd.f32 %v3918, %v4058
        %v4123 = vadd.f32 %v3919, %v4059
        %v4124 = vadd.f32 %v3920, %v4060
        %v4125 = vadd.f32 %v3921, %v4061
        %v4126 = vadd.f32 %v3922, %v4062
        %v4127 = vadd.f32 %v3923, %v4063
        %v4128 = vadd.f32 %v3924, %v4064
        %v4129 = vadd.f32 %v3925, %v4065
        %v4130 = vadd.f32 %v3926, %v4066
        %v4131 = vadd.f32 %v3927, %v4067
        %v4132 = vadd.f32 %v3928, %v4068
        %v4133 = vadd.f32 %v3929, %v4069
        %v4134 = vadd.f32 %v3930, %v4070
        %v4135 = vadd.f32 %v3931, %v4071
        %v4136 = vadd.f32 %v3932, %v4072
        %v4137 = vadd.f32 %v3933, %v4073
        %v4138 = vadd.f32 %v3934, %v4074
        %v4139 = vadd.f32 %v3935, %v4075
        %v4140 = vadd.f32 %v3936, %v4076
        %v4141 = vadd.f32 %v3937, %v4077
        %v4142 = vadd.f32 %v3938, %v4078
        %v4143 = vadd.f32 %v3939, %v4079
        %v4144 = vadd.f32 %v3940, %v4080
        %v4145 = vadd.f32 %v3941, %v4081
        %v4146 = vadd.f32 %v3942, %v4082
        %v4147 = vadd.f32 %v3943, %v4083
        %v4148 = vadd.f32 %v3944, %v4084
        %v4149 = vadd.f32 %v3945, %v4085
        %v4150 = vadd.f32 %v3946, %v4086
        %v4151 = vadd.f32 %v3947, %v4087
        %v4152 = vadd.f32 %v3948, %v4088
        %v4153 = vadd.f32 %v3949, %v4089
        %v4154 = vadd.f32 %v3950, %v4090
        %v4155 = vadd.f32 %v3951, %v4091
        %v4156 = vadd.f32 %v3952, %v4092
        %v4157 = vadd.f32 %v3953, %v4093
        %v4158 = vadd.f32 %v3954, %v4094
        %v4159 = vld [vmem:[%s3955] sm:$0xfe]
        %v4160 = vld [vmem:[%s3955 + $0x8] sm:$0xfe]
        %v4161 = vld [vmem:[%s3955 + $0x20] sm:$0x1]
        %v4162 = vld [vmem:[%s3955 + $0x28] sm:$0x1]
        %v4163 = vld [vmem:[%s3955 + $0x30] sm:$0xfe]
        %v4164 = vld [vmem:[%s3955 + $0x38] sm:$0xfe]
        %v4165 = vld [vmem:[%s3955 + $0x50] sm:$0x1]
        %v4166 = vld [vmem:[%s3955 + $0x58] sm:$0x1]
        %v4167 = vld [vmem:[%s3955 + $0x60] sm:$0xfe]
        %v4168 = vld [vmem:[%s3955 + $0x68] sm:$0xfe]
        %v4169 = vld [vmem:[%s3955 + $0x80] sm:$0x1]
        %v4170 = vld [vmem:[%s3955 + $0x88] sm:$0x1]
        %v4171 = vld [vmem:[%s3955 + $0x90] sm:$0xfe]
        %v4172 = vld [vmem:[%s3955 + $0x98] sm:$0xfe]
        %v4173 = vld [vmem:[%s3955 + $0xb0] sm:$0x1]
        %v4174 = vld [vmem:[%s3955 + $0xb8] sm:$0x1]
        %v4175 = vld [vmem:[%s3955 + $0xc0] sm:$0xfe]
        %v4176 = vld [vmem:[%s3955 + $0xc8] sm:$0xfe]
        %v4177 = vld [vmem:[%s3955 + $0xe0] sm:$0x1]
        %v4178 = vld [vmem:[%s3955 + $0xe8] sm:$0x1]
        %v4179 = vld [vmem:[%s3955 + $0xf0] sm:$0xfe]
        %v4180 = vld [vmem:[%s3955 + $0xf8] sm:$0xfe]
        %v4181 = vld [vmem:[%s3955 + $0x110] sm:$0x1]
        %v4182 = vld [vmem:[%s3955 + $0x118] sm:$0x1]
        %v4183 = vld [vmem:[%s3955 + $0x120] sm:$0xfe]
        %v4184 = vld [vmem:[%s3955 + $0x128] sm:$0xfe]
        %v4185 = vld [vmem:[%s3955 + $0x140] sm:$0x1]
        %v4186 = vld [vmem:[%s3955 + $0x148] sm:$0x1]
        %v4187 = vld [vmem:[%s3955 + $0x150] sm:$0xfe]
        %v4188 = vld [vmem:[%s3955 + $0x158] sm:$0xfe]
        %v4189 = vld [vmem:[%s3955 + $0x170] sm:$0x1]
        %v4190 = vld [vmem:[%s3955 + $0x178] sm:$0x1]
        %v4191 = vld [vmem:[%s3955 + $0x180] sm:$0xfe]
        %v4192 = vld [vmem:[%s3955 + $0x188] sm:$0xfe]
        %v4193 = vld [vmem:[%s3955 + $0x1a0] sm:$0x1]
        %v4194 = vld [vmem:[%s3955 + $0x1a8] sm:$0x1]
        %v4195 = vld [vmem:[%s3955 + $0x1b0] sm:$0xfe]
        %v4196 = vld [vmem:[%s3955 + $0x1b8] sm:$0xfe]
        %v4197 = vld [vmem:[%s3955 + $0x1d0] sm:$0x1]
        %v4198 = vld [vmem:[%s3955 + $0x1d8] sm:$0x1]
        %v4199 = vld [vmem:[%s3955 + $0x1e0] sm:$0xfe]
        %v4200 = vld [vmem:[%s3955 + $0x1e8] sm:$0xfe]
        %v4201 = vld [vmem:[%s3955 + $0x200] sm:$0x1]
        %v4202 = vld [vmem:[%s3955 + $0x208] sm:$0x1]
        %v4203 = vld [vmem:[%s3955 + $0x210] sm:$0xfe]
        %v4204 = vld [vmem:[%s3955 + $0x218] sm:$0xfe]
        %v4205 = vld [vmem:[%s3955 + $0x230] sm:$0x1]
        %v4206 = vld [vmem:[%s3955 + $0x238] sm:$0x1]
        %v4207 = vld [vmem:[%s3955 + $0x240] sm:$0xfe]
        %v4208 = vld [vmem:[%s3955 + $0x248] sm:$0xfe]
        %v4209 = vld [vmem:[%s3955 + $0x260] sm:$0x1]
        %v4210 = vld [vmem:[%s3955 + $0x268] sm:$0x1]
        %v4211 = vld [vmem:[%s3955 + $0x270] sm:$0xfe]
        %v4212 = vld [vmem:[%s3955 + $0x278] sm:$0xfe]
        %v4213 = vld [vmem:[%s3955 + $0x290] sm:$0x1]
        %v4214 = vld [vmem:[%s3955 + $0x298] sm:$0x1]
        %v4215 = vld [vmem:[%s3955 + $0x2a0] sm:$0xfe]
        %v4216 = vld [vmem:[%s3955 + $0x2a8] sm:$0xfe]
        %v4217 = vld [vmem:[%s3955 + $0x2c0] sm:$0x1]
        %v4218 = vld [vmem:[%s3955 + $0x2c8] sm:$0x1]
        %v4219 = vld [vmem:[%s3955 + $0x2d0] sm:$0xfe]
        %v4220 = vld [vmem:[%s3955 + $0x2d8] sm:$0xfe]
        %v4221 = vld [vmem:[%s3955 + $0x2f0] sm:$0x1]
        %v4222 = vld [vmem:[%s3955 + $0x2f8] sm:$0x1]
        %v4224 = vlaneseq
        %v4225 = vshrl.u32 %v4224, 7
        %v4226 = vsub.s32 0, %v4225
        %v4227 = vrot.slane %v1325, %v4226
        %v4228 = vlaneseq
        %v4229 = vshrl.u32 %v4228, 7
        %v4230 = vsub.s32 1, %v4229
        %v4231 = vrot.slane %v1325, %v4230
        %v4234 = vmul.f32 %v4159, %v4227
        %v4235 = vmul.f32 %v4160, %v4231
        %v4236 = vmul.f32 %v3958, %v4227
        %v4237 = vmul.f32 %v3959, %v4231
        %v4238 = vmul.f32 %v4161, %v4227
        %v4239 = vmul.f32 %v4162, %v4231
        %v4240 = vmul.f32 %v4163, %v4227
        %v4241 = vmul.f32 %v4164, %v4231
        %v4242 = vmul.f32 %v3962, %v4227
        %v4243 = vmul.f32 %v3963, %v4231
        %v4244 = vmul.f32 %v4165, %v4227
        %v4245 = vmul.f32 %v4166, %v4231
        %v4246 = vmul.f32 %v4167, %v4227
        %v4247 = vmul.f32 %v4168, %v4231
        %v4248 = vmul.f32 %v3966, %v4227
        %v4249 = vmul.f32 %v3967, %v4231
        %v4250 = vmul.f32 %v4169, %v4227
        %v4251 = vmul.f32 %v4170, %v4231
        %v4252 = vmul.f32 %v4171, %v4227
        %v4253 = vmul.f32 %v4172, %v4231
        %v4254 = vmul.f32 %v3970, %v4227
        %v4255 = vmul.f32 %v3971, %v4231
        %v4256 = vmul.f32 %v4173, %v4227
        %v4257 = vmul.f32 %v4174, %v4231
        %v4258 = vmul.f32 %v4175, %v4227
        %v4259 = vmul.f32 %v4176, %v4231
        %v4260 = vmul.f32 %v3974, %v4227
        %v4261 = vmul.f32 %v3975, %v4231
        %v4262 = vmul.f32 %v4177, %v4227
        %v4263 = vmul.f32 %v4178, %v4231
        %v4264 = vmul.f32 %v4179, %v4227
        %v4265 = vmul.f32 %v4180, %v4231
        %v4266 = vmul.f32 %v3978, %v4227
        %v4267 = vmul.f32 %v3979, %v4231
        %v4268 = vmul.f32 %v4181, %v4227
        %v4269 = vmul.f32 %v4182, %v4231
        %v4270 = vmul.f32 %v4183, %v4227
        %v4271 = vmul.f32 %v4184, %v4231
        %v4272 = vmul.f32 %v3982, %v4227
        %v4273 = vmul.f32 %v3983, %v4231
        %v4274 = vmul.f32 %v4185, %v4227
        %v4275 = vmul.f32 %v4186, %v4231
        %v4276 = vmul.f32 %v4187, %v4227
        %v4277 = vmul.f32 %v4188, %v4231
        %v4278 = vmul.f32 %v3986, %v4227
        %v4279 = vmul.f32 %v3987, %v4231
        %v4280 = vmul.f32 %v4189, %v4227
        %v4281 = vmul.f32 %v4190, %v4231
        %v4282 = vmul.f32 %v4191, %v4227
        %v4283 = vmul.f32 %v4192, %v4231
        %v4284 = vmul.f32 %v3990, %v4227
        %v4285 = vmul.f32 %v3991, %v4231
        %v4286 = vmul.f32 %v4193, %v4227
        %v4287 = vmul.f32 %v4194, %v4231
        %v4288 = vmul.f32 %v4195, %v4227
        %v4289 = vmul.f32 %v4196, %v4231
        %v4290 = vmul.f32 %v3994, %v4227
        %v4291 = vmul.f32 %v3995, %v4231
        %v4292 = vmul.f32 %v4197, %v4227
        %v4293 = vmul.f32 %v4198, %v4231
        %v4294 = vmul.f32 %v4199, %v4227
        %v4295 = vmul.f32 %v4200, %v4231
        %v4296 = vmul.f32 %v3998, %v4227
        %v4297 = vmul.f32 %v3999, %v4231
        %v4298 = vmul.f32 %v4201, %v4227
        %v4299 = vmul.f32 %v4202, %v4231
        %v4300 = vmul.f32 %v4203, %v4227
        %v4301 = vmul.f32 %v4204, %v4231
        %v4302 = vmul.f32 %v4002, %v4227
        %v4303 = vmul.f32 %v4003, %v4231
        %v4304 = vmul.f32 %v4205, %v4227
        %v4305 = vmul.f32 %v4206, %v4231
        %v4306 = vmul.f32 %v4207, %v4227
        %v4307 = vmul.f32 %v4208, %v4231
        %v4308 = vmul.f32 %v4006, %v4227
        %v4309 = vmul.f32 %v4007, %v4231
        %v4310 = vmul.f32 %v4209, %v4227
        %v4311 = vmul.f32 %v4210, %v4231
        %v4312 = vmul.f32 %v4211, %v4227
        %v4313 = vmul.f32 %v4212, %v4231
        %v4314 = vmul.f32 %v4010, %v4227
        %v4315 = vmul.f32 %v4011, %v4231
        %v4316 = vmul.f32 %v4213, %v4227
        %v4317 = vmul.f32 %v4214, %v4231
        %v4318 = vmul.f32 %v4215, %v4227
        %v4319 = vmul.f32 %v4216, %v4231
        %v4320 = vmul.f32 %v4014, %v4227
        %v4321 = vmul.f32 %v4015, %v4231
        %v4322 = vmul.f32 %v4217, %v4227
        %v4323 = vmul.f32 %v4218, %v4231
        %v4324 = vmul.f32 %v4219, %v4227
        %v4325 = vmul.f32 %v4220, %v4231
        %v4326 = vmul.f32 %v4018, %v4227
        %v4327 = vmul.f32 %v4019, %v4231
        %v4328 = vmul.f32 %v4221, %v4227
        %v4329 = vmul.f32 %v4222, %v4231
        %v4426 = vrot.slane %v4234, 1
        %v4427 = vrot.slane %v4236, 1
        %v4428 = vsel %vm1797, %v4426, %v4427
        %v4429 = vrot.slane %v4235, 1
        %v4430 = vrot.slane %v4237, 1
        %v4431 = vsel %vm1797, %v4429, %v4430
        %v4432 = vrot.slane %v4238, 1
        %v4433 = vsel %vm1797, %v4427, %v4432
        %v4434 = vrot.slane %v4239, 1
        %v4435 = vsel %vm1797, %v4430, %v4434
        %v4436 = vrot.slane %v4240, 1
        %v4437 = vrot.slane %v4242, 1
        %v4438 = vsel %vm1797, %v4436, %v4437
        %v4439 = vrot.slane %v4241, 1
        %v4440 = vrot.slane %v4243, 1
        %v4441 = vsel %vm1797, %v4439, %v4440
        %v4442 = vrot.slane %v4244, 1
        %v4443 = vsel %vm1797, %v4437, %v4442
        %v4444 = vrot.slane %v4245, 1
        %v4445 = vsel %vm1797, %v4440, %v4444
        %v4446 = vrot.slane %v4246, 1
        %v4447 = vrot.slane %v4248, 1
        %v4448 = vsel %vm1797, %v4446, %v4447
        %v4449 = vrot.slane %v4247, 1
        %v4450 = vrot.slane %v4249, 1
        %v4451 = vsel %vm1797, %v4449, %v4450
        %v4452 = vrot.slane %v4250, 1
        %v4453 = vsel %vm1797, %v4447, %v4452
        %v4454 = vrot.slane %v4251, 1
        %v4455 = vsel %vm1797, %v4450, %v4454
        %v4456 = vrot.slane %v4252, 1
        %v4457 = vrot.slane %v4254, 1
        %v4458 = vsel %vm1797, %v4456, %v4457
        %v4459 = vrot.slane %v4253, 1
        %v4460 = vrot.slane %v4255, 1
        %v4461 = vsel %vm1797, %v4459, %v4460
        %v4462 = vrot.slane %v4256, 1
        %v4463 = vsel %vm1797, %v4457, %v4462
        %v4464 = vrot.slane %v4257, 1
        %v4465 = vsel %vm1797, %v4460, %v4464
        %v4466 = vrot.slane %v4258, 1
        %v4467 = vrot.slane %v4260, 1
        %v4468 = vsel %vm1797, %v4466, %v4467
        %v4469 = vrot.slane %v4259, 1
        %v4470 = vrot.slane %v4261, 1
        %v4471 = vsel %vm1797, %v4469, %v4470
        %v4472 = vrot.slane %v4262, 1
        %v4473 = vsel %vm1797, %v4467, %v4472
        %v4474 = vrot.slane %v4263, 1
        %v4475 = vsel %vm1797, %v4470, %v4474
        %v4476 = vrot.slane %v4264, 1
        %v4477 = vrot.slane %v4266, 1
        %v4478 = vsel %vm1797, %v4476, %v4477
        %v4479 = vrot.slane %v4265, 1
        %v4480 = vrot.slane %v4267, 1
        %v4481 = vsel %vm1797, %v4479, %v4480
        %v4482 = vrot.slane %v4268, 1
        %v4483 = vsel %vm1797, %v4477, %v4482
        %v4484 = vrot.slane %v4269, 1
        %v4485 = vsel %vm1797, %v4480, %v4484
        %v4486 = vrot.slane %v4270, 1
        %v4487 = vrot.slane %v4272, 1
        %v4488 = vsel %vm1797, %v4486, %v4487
        %v4489 = vrot.slane %v4271, 1
        %v4490 = vrot.slane %v4273, 1
        %v4491 = vsel %vm1797, %v4489, %v4490
        %v4492 = vrot.slane %v4274, 1
        %v4493 = vsel %vm1797, %v4487, %v4492
        %v4494 = vrot.slane %v4275, 1
        %v4495 = vsel %vm1797, %v4490, %v4494
        %v4496 = vrot.slane %v4276, 1
        %v4497 = vrot.slane %v4278, 1
        %v4498 = vsel %vm1797, %v4496, %v4497
        %v4499 = vrot.slane %v4277, 1
        %v4500 = vrot.slane %v4279, 1
        %v4501 = vsel %vm1797, %v4499, %v4500
        %v4502 = vrot.slane %v4280, 1
        %v4503 = vsel %vm1797, %v4497, %v4502
        %v4504 = vrot.slane %v4281, 1
        %v4505 = vsel %vm1797, %v4500, %v4504
        %v4506 = vrot.slane %v4282, 1
        %v4507 = vrot.slane %v4284, 1
        %v4508 = vsel %vm1797, %v4506, %v4507
        %v4509 = vrot.slane %v4283, 1
        %v4510 = vrot.slane %v4285, 1
        %v4511 = vsel %vm1797, %v4509, %v4510
        %v4512 = vrot.slane %v4286, 1
        %v4513 = vsel %vm1797, %v4507, %v4512
        %v4514 = vrot.slane %v4287, 1
        %v4515 = vsel %vm1797, %v4510, %v4514
        %v4516 = vrot.slane %v4288, 1
        %v4517 = vrot.slane %v4290, 1
        %v4518 = vsel %vm1797, %v4516, %v4517
        %v4519 = vrot.slane %v4289, 1
        %v4520 = vrot.slane %v4291, 1
        %v4521 = vsel %vm1797, %v4519, %v4520
        %v4522 = vrot.slane %v4292, 1
        %v4523 = vsel %vm1797, %v4517, %v4522
        %v4524 = vrot.slane %v4293, 1
        %v4525 = vsel %vm1797, %v4520, %v4524
        %v4526 = vrot.slane %v4294, 1
        %v4527 = vrot.slane %v4296, 1
        %v4528 = vsel %vm1797, %v4526, %v4527
        %v4529 = vrot.slane %v4295, 1
        %v4530 = vrot.slane %v4297, 1
        %v4531 = vsel %vm1797, %v4529, %v4530
        %v4532 = vrot.slane %v4298, 1
        %v4533 = vsel %vm1797, %v4527, %v4532
        %v4534 = vrot.slane %v4299, 1
        %v4535 = vsel %vm1797, %v4530, %v4534
        %v4536 = vrot.slane %v4300, 1
        %v4537 = vrot.slane %v4302, 1
        %v4538 = vsel %vm1797, %v4536, %v4537
        %v4539 = vrot.slane %v4301, 1
        %v4540 = vrot.slane %v4303, 1
        %v4541 = vsel %vm1797, %v4539, %v4540
        %v4542 = vrot.slane %v4304, 1
        %v4543 = vsel %vm1797, %v4537, %v4542
        %v4544 = vrot.slane %v4305, 1
        %v4545 = vsel %vm1797, %v4540, %v4544
        %v4546 = vrot.slane %v4306, 1
        %v4547 = vrot.slane %v4308, 1
        %v4548 = vsel %vm1797, %v4546, %v4547
        %v4549 = vrot.slane %v4307, 1
        %v4550 = vrot.slane %v4309, 1
        %v4551 = vsel %vm1797, %v4549, %v4550
        %v4552 = vrot.slane %v4310, 1
        %v4553 = vsel %vm1797, %v4547, %v4552
        %v4554 = vrot.slane %v4311, 1
        %v4555 = vsel %vm1797, %v4550, %v4554
        %v4556 = vrot.slane %v4312, 1
        %v4557 = vrot.slane %v4314, 1
        %v4558 = vsel %vm1797, %v4556, %v4557
        %v4559 = vrot.slane %v4313, 1
        %v4560 = vrot.slane %v4315, 1
        %v4561 = vsel %vm1797, %v4559, %v4560
        %v4562 = vrot.slane %v4316, 1
        %v4563 = vsel %vm1797, %v4557, %v4562
        %v4564 = vrot.slane %v4317, 1
        %v4565 = vsel %vm1797, %v4560, %v4564
        %v4566 = vrot.slane %v4318, 1
        %v4567 = vrot.slane %v4320, 1
        %v4568 = vsel %vm1797, %v4566, %v4567
        %v4569 = vrot.slane %v4319, 1
        %v4570 = vrot.slane %v4321, 1
        %v4571 = vsel %vm1797, %v4569, %v4570
        %v4572 = vrot.slane %v4322, 1
        %v4573 = vsel %vm1797, %v4567, %v4572
        %v4574 = vrot.slane %v4323, 1
        %v4575 = vsel %vm1797, %v4570, %v4574
        %v4576 = vrot.slane %v4324, 1
        %v4577 = vrot.slane %v4326, 1
        %v4578 = vsel %vm1797, %v4576, %v4577
        %v4579 = vrot.slane %v4325, 1
        %v4580 = vrot.slane %v4327, 1
        %v4581 = vsel %vm1797, %v4579, %v4580
        %v4582 = vrot.slane %v4328, 1
        %v4583 = vsel %vm1797, %v4577, %v4582
        %v4584 = vrot.slane %v4329, 1
        %v4585 = vsel %vm1797, %v4580, %v4584
        %v4650 = vadd.f32 %v4095, %v4428
        %v4651 = vadd.f32 %v4096, %v4431
        %v4652 = vadd.f32 %v4097, %v4433
        %v4653 = vadd.f32 %v4098, %v4435
        %v4654 = vadd.f32 %v4099, %v4438
        %v4655 = vadd.f32 %v4100, %v4441
        %v4656 = vadd.f32 %v4101, %v4443
        %v4657 = vadd.f32 %v4102, %v4445
        %v4658 = vadd.f32 %v4103, %v4448
        %v4659 = vadd.f32 %v4104, %v4451
        %v4660 = vadd.f32 %v4105, %v4453
        %v4661 = vadd.f32 %v4106, %v4455
        %v4662 = vadd.f32 %v4107, %v4458
        %v4663 = vadd.f32 %v4108, %v4461
        %v4664 = vadd.f32 %v4109, %v4463
        %v4665 = vadd.f32 %v4110, %v4465
        %v4666 = vadd.f32 %v4111, %v4468
        %v4667 = vadd.f32 %v4112, %v4471
        %v4668 = vadd.f32 %v4113, %v4473
        %v4669 = vadd.f32 %v4114, %v4475
        %v4670 = vadd.f32 %v4115, %v4478
        %v4671 = vadd.f32 %v4116, %v4481
        %v4672 = vadd.f32 %v4117, %v4483
        %v4673 = vadd.f32 %v4118, %v4485
        %v4674 = vadd.f32 %v4119, %v4488
        %v4675 = vadd.f32 %v4120, %v4491
        %v4676 = vadd.f32 %v4121, %v4493
        %v4677 = vadd.f32 %v4122, %v4495
        %v4678 = vadd.f32 %v4123, %v4498
        %v4679 = vadd.f32 %v4124, %v4501
        %v4680 = vadd.f32 %v4125, %v4503
        %v4681 = vadd.f32 %v4126, %v4505
        %v4682 = vadd.f32 %v4127, %v4508
        %v4683 = vadd.f32 %v4128, %v4511
        %v4684 = vadd.f32 %v4129, %v4513
        %v4685 = vadd.f32 %v4130, %v4515
        %v4686 = vadd.f32 %v4131, %v4518
        %v4687 = vadd.f32 %v4132, %v4521
        %v4688 = vadd.f32 %v4133, %v4523
        %v4689 = vadd.f32 %v4134, %v4525
        %v4690 = vadd.f32 %v4135, %v4528
        %v4691 = vadd.f32 %v4136, %v4531
        %v4692 = vadd.f32 %v4137, %v4533
        %v4693 = vadd.f32 %v4138, %v4535
        %v4694 = vadd.f32 %v4139, %v4538
        %v4695 = vadd.f32 %v4140, %v4541
        %v4696 = vadd.f32 %v4141, %v4543
        %v4697 = vadd.f32 %v4142, %v4545
        %v4698 = vadd.f32 %v4143, %v4548
        %v4699 = vadd.f32 %v4144, %v4551
        %v4700 = vadd.f32 %v4145, %v4553
        %v4701 = vadd.f32 %v4146, %v4555
        %v4702 = vadd.f32 %v4147, %v4558
        %v4703 = vadd.f32 %v4148, %v4561
        %v4704 = vadd.f32 %v4149, %v4563
        %v4705 = vadd.f32 %v4150, %v4565
        %v4706 = vadd.f32 %v4151, %v4568
        %v4707 = vadd.f32 %v4152, %v4571
        %v4708 = vadd.f32 %v4153, %v4573
        %v4709 = vadd.f32 %v4154, %v4575
        %v4710 = vadd.f32 %v4155, %v4578
        %v4711 = vadd.f32 %v4156, %v4581
        %v4712 = vadd.f32 %v4157, %v4583
        %v4713 = vadd.f32 %v4158, %v4585
        %v4714 = vld [vmem:[%s3955] sm:$0xfc]
        %v4715 = vld [vmem:[%s3955 + $0x8] sm:$0xfc]
        %v4716 = vld [vmem:[%s3955 + $0x20] sm:$0x3]
        %v4717 = vld [vmem:[%s3955 + $0x28] sm:$0x3]
        %v4718 = vld [vmem:[%s3955 + $0x30] sm:$0xfc]
        %v4719 = vld [vmem:[%s3955 + $0x38] sm:$0xfc]
        %v4720 = vld [vmem:[%s3955 + $0x50] sm:$0x3]
        %v4721 = vld [vmem:[%s3955 + $0x58] sm:$0x3]
        %v4722 = vld [vmem:[%s3955 + $0x60] sm:$0xfc]
        %v4723 = vld [vmem:[%s3955 + $0x68] sm:$0xfc]
        %v4724 = vld [vmem:[%s3955 + $0x80] sm:$0x3]
        %v4725 = vld [vmem:[%s3955 + $0x88] sm:$0x3]
        %v4726 = vld [vmem:[%s3955 + $0x90] sm:$0xfc]
        %v4727 = vld [vmem:[%s3955 + $0x98] sm:$0xfc]
        %v4728 = vld [vmem:[%s3955 + $0xb0] sm:$0x3]
        %v4729 = vld [vmem:[%s3955 + $0xb8] sm:$0x3]
        %v4730 = vld [vmem:[%s3955 + $0xc0] sm:$0xfc]
        %v4731 = vld [vmem:[%s3955 + $0xc8] sm:$0xfc]
        %v4732 = vld [vmem:[%s3955 + $0xe0] sm:$0x3]
        %v4733 = vld [vmem:[%s3955 + $0xe8] sm:$0x3]
        %v4734 = vld [vmem:[%s3955 + $0xf0] sm:$0xfc]
        %v4735 = vld [vmem:[%s3955 + $0xf8] sm:$0xfc]
        %v4736 = vld [vmem:[%s3955 + $0x110] sm:$0x3]
        %v4737 = vld [vmem:[%s3955 + $0x118] sm:$0x3]
        %v4738 = vld [vmem:[%s3955 + $0x120] sm:$0xfc]
        %v4739 = vld [vmem:[%s3955 + $0x128] sm:$0xfc]
        %v4740 = vld [vmem:[%s3955 + $0x140] sm:$0x3]
        %v4741 = vld [vmem:[%s3955 + $0x148] sm:$0x3]
        %v4742 = vld [vmem:[%s3955 + $0x150] sm:$0xfc]
        %v4743 = vld [vmem:[%s3955 + $0x158] sm:$0xfc]
        %v4744 = vld [vmem:[%s3955 + $0x170] sm:$0x3]
        %v4745 = vld [vmem:[%s3955 + $0x178] sm:$0x3]
        %v4746 = vld [vmem:[%s3955 + $0x180] sm:$0xfc]
        %v4747 = vld [vmem:[%s3955 + $0x188] sm:$0xfc]
        %v4748 = vld [vmem:[%s3955 + $0x1a0] sm:$0x3]
        %v4749 = vld [vmem:[%s3955 + $0x1a8] sm:$0x3]
        %v4750 = vld [vmem:[%s3955 + $0x1b0] sm:$0xfc]
        %v4751 = vld [vmem:[%s3955 + $0x1b8] sm:$0xfc]
        %v4752 = vld [vmem:[%s3955 + $0x1d0] sm:$0x3]
        %v4753 = vld [vmem:[%s3955 + $0x1d8] sm:$0x3]
        %v4754 = vld [vmem:[%s3955 + $0x1e0] sm:$0xfc]
        %v4755 = vld [vmem:[%s3955 + $0x1e8] sm:$0xfc]
        %v4756 = vld [vmem:[%s3955 + $0x200] sm:$0x3]
        %v4757 = vld [vmem:[%s3955 + $0x208] sm:$0x3]
        %v4758 = vld [vmem:[%s3955 + $0x210] sm:$0xfc]
        %v4759 = vld [vmem:[%s3955 + $0x218] sm:$0xfc]
        %v4760 = vld [vmem:[%s3955 + $0x230] sm:$0x3]
        %v4761 = vld [vmem:[%s3955 + $0x238] sm:$0x3]
        %v4762 = vld [vmem:[%s3955 + $0x240] sm:$0xfc]
        %v4763 = vld [vmem:[%s3955 + $0x248] sm:$0xfc]
        %v4764 = vld [vmem:[%s3955 + $0x260] sm:$0x3]
        %v4765 = vld [vmem:[%s3955 + $0x268] sm:$0x3]
        %v4766 = vld [vmem:[%s3955 + $0x270] sm:$0xfc]
        %v4767 = vld [vmem:[%s3955 + $0x278] sm:$0xfc]
        %v4768 = vld [vmem:[%s3955 + $0x290] sm:$0x3]
        %v4769 = vld [vmem:[%s3955 + $0x298] sm:$0x3]
        %v4770 = vld [vmem:[%s3955 + $0x2a0] sm:$0xfc]
        %v4771 = vld [vmem:[%s3955 + $0x2a8] sm:$0xfc]
        %v4772 = vld [vmem:[%s3955 + $0x2c0] sm:$0x3]
        %v4773 = vld [vmem:[%s3955 + $0x2c8] sm:$0x3]
        %v4774 = vld [vmem:[%s3955 + $0x2d0] sm:$0xfc]
        %v4775 = vld [vmem:[%s3955 + $0x2d8] sm:$0xfc]
        %v4776 = vld [vmem:[%s3955 + $0x2f0] sm:$0x3]
        %v4777 = vld [vmem:[%s3955 + $0x2f8] sm:$0x3]
        %v4779 = vlaneseq
        %v4780 = vshrl.u32 %v4779, 7
        %v4781 = vsub.s32 0, %v4780
        %v4782 = vrot.slane %v1326, %v4781
        %v4783 = vlaneseq
        %v4784 = vshrl.u32 %v4783, 7
        %v4785 = vsub.s32 1, %v4784
        %v4786 = vrot.slane %v1326, %v4785
        %v4789 = vmul.f32 %v4714, %v4782
        %v4790 = vmul.f32 %v4715, %v4786
        %v4791 = vmul.f32 %v3958, %v4782
        %v4792 = vmul.f32 %v3959, %v4786
        %v4793 = vmul.f32 %v4716, %v4782
        %v4794 = vmul.f32 %v4717, %v4786
        %v4795 = vmul.f32 %v4718, %v4782
        %v4796 = vmul.f32 %v4719, %v4786
        %v4797 = vmul.f32 %v3962, %v4782
        %v4798 = vmul.f32 %v3963, %v4786
        %v4799 = vmul.f32 %v4720, %v4782
        %v4800 = vmul.f32 %v4721, %v4786
        %v4801 = vmul.f32 %v4722, %v4782
        %v4802 = vmul.f32 %v4723, %v4786
        %v4803 = vmul.f32 %v3966, %v4782
        %v4804 = vmul.f32 %v3967, %v4786
        %v4805 = vmul.f32 %v4724, %v4782
        %v4806 = vmul.f32 %v4725, %v4786
        %v4807 = vmul.f32 %v4726, %v4782
        %v4808 = vmul.f32 %v4727, %v4786
        %v4809 = vmul.f32 %v3970, %v4782
        %v4810 = vmul.f32 %v3971, %v4786
        %v4811 = vmul.f32 %v4728, %v4782
        %v4812 = vmul.f32 %v4729, %v4786
        %v4813 = vmul.f32 %v4730, %v4782
        %v4814 = vmul.f32 %v4731, %v4786
        %v4815 = vmul.f32 %v3974, %v4782
        %v4816 = vmul.f32 %v3975, %v4786
        %v4817 = vmul.f32 %v4732, %v4782
        %v4818 = vmul.f32 %v4733, %v4786
        %v4819 = vmul.f32 %v4734, %v4782
        %v4820 = vmul.f32 %v4735, %v4786
        %v4821 = vmul.f32 %v3978, %v4782
        %v4822 = vmul.f32 %v3979, %v4786
        %v4823 = vmul.f32 %v4736, %v4782
        %v4824 = vmul.f32 %v4737, %v4786
        %v4825 = vmul.f32 %v4738, %v4782
        %v4826 = vmul.f32 %v4739, %v4786
        %v4827 = vmul.f32 %v3982, %v4782
        %v4828 = vmul.f32 %v3983, %v4786
        %v4829 = vmul.f32 %v4740, %v4782
        %v4830 = vmul.f32 %v4741, %v4786
        %v4831 = vmul.f32 %v4742, %v4782
        %v4832 = vmul.f32 %v4743, %v4786
        %v4833 = vmul.f32 %v3986, %v4782
        %v4834 = vmul.f32 %v3987, %v4786
        %v4835 = vmul.f32 %v4744, %v4782
        %v4836 = vmul.f32 %v4745, %v4786
        %v4837 = vmul.f32 %v4746, %v4782
        %v4838 = vmul.f32 %v4747, %v4786
        %v4839 = vmul.f32 %v3990, %v4782
        %v4840 = vmul.f32 %v3991, %v4786
        %v4841 = vmul.f32 %v4748, %v4782
        %v4842 = vmul.f32 %v4749, %v4786
        %v4843 = vmul.f32 %v4750, %v4782
        %v4844 = vmul.f32 %v4751, %v4786
        %v4845 = vmul.f32 %v3994, %v4782
        %v4846 = vmul.f32 %v3995, %v4786
        %v4847 = vmul.f32 %v4752, %v4782
        %v4848 = vmul.f32 %v4753, %v4786
        %v4849 = vmul.f32 %v4754, %v4782
        %v4850 = vmul.f32 %v4755, %v4786
        %v4851 = vmul.f32 %v3998, %v4782
        %v4852 = vmul.f32 %v3999, %v4786
        %v4853 = vmul.f32 %v4756, %v4782
        %v4854 = vmul.f32 %v4757, %v4786
        %v4855 = vmul.f32 %v4758, %v4782
        %v4856 = vmul.f32 %v4759, %v4786
        %v4857 = vmul.f32 %v4002, %v4782
        %v4858 = vmul.f32 %v4003, %v4786
        %v4859 = vmul.f32 %v4760, %v4782
        %v4860 = vmul.f32 %v4761, %v4786
        %v4861 = vmul.f32 %v4762, %v4782
        %v4862 = vmul.f32 %v4763, %v4786
        %v4863 = vmul.f32 %v4006, %v4782
        %v4864 = vmul.f32 %v4007, %v4786
        %v4865 = vmul.f32 %v4764, %v4782
        %v4866 = vmul.f32 %v4765, %v4786
        %v4867 = vmul.f32 %v4766, %v4782
        %v4868 = vmul.f32 %v4767, %v4786
        %v4869 = vmul.f32 %v4010, %v4782
        %v4870 = vmul.f32 %v4011, %v4786
        %v4871 = vmul.f32 %v4768, %v4782
        %v4872 = vmul.f32 %v4769, %v4786
        %v4873 = vmul.f32 %v4770, %v4782
        %v4874 = vmul.f32 %v4771, %v4786
        %v4875 = vmul.f32 %v4014, %v4782
        %v4876 = vmul.f32 %v4015, %v4786
        %v4877 = vmul.f32 %v4772, %v4782
        %v4878 = vmul.f32 %v4773, %v4786
        %v4879 = vmul.f32 %v4774, %v4782
        %v4880 = vmul.f32 %v4775, %v4786
        %v4881 = vmul.f32 %v4018, %v4782
        %v4882 = vmul.f32 %v4019, %v4786
        %v4883 = vmul.f32 %v4776, %v4782
        %v4884 = vmul.f32 %v4777, %v4786
        %v4981 = vrot.slane %v4789, 2
        %v4982 = vrot.slane %v4791, 2
        %v4983 = vsel %vm2353, %v4981, %v4982
        %v4984 = vrot.slane %v4790, 2
        %v4985 = vrot.slane %v4792, 2
        %v4986 = vsel %vm2353, %v4984, %v4985
        %v4987 = vrot.slane %v4793, 2
        %v4988 = vsel %vm2353, %v4982, %v4987
        %v4989 = vrot.slane %v4794, 2
        %v4990 = vsel %vm2353, %v4985, %v4989
        %v4991 = vrot.slane %v4795, 2
        %v4992 = vrot.slane %v4797, 2
        %v4993 = vsel %vm2353, %v4991, %v4992
        %v4994 = vrot.slane %v4796, 2
        %v4995 = vrot.slane %v4798, 2
        %v4996 = vsel %vm2353, %v4994, %v4995
        %v4997 = vrot.slane %v4799, 2
        %v4998 = vsel %vm2353, %v4992, %v4997
        %v4999 = vrot.slane %v4800, 2
        %v5000 = vsel %vm2353, %v4995, %v4999
        %v5001 = vrot.slane %v4801, 2
        %v5002 = vrot.slane %v4803, 2
        %v5003 = vsel %vm2353, %v5001, %v5002
        %v5004 = vrot.slane %v4802, 2
        %v5005 = vrot.slane %v4804, 2
        %v5006 = vsel %vm2353, %v5004, %v5005
        %v5007 = vrot.slane %v4805, 2
        %v5008 = vsel %vm2353, %v5002, %v5007
        %v5009 = vrot.slane %v4806, 2
        %v5010 = vsel %vm2353, %v5005, %v5009
        %v5011 = vrot.slane %v4807, 2
        %v5012 = vrot.slane %v4809, 2
        %v5013 = vsel %vm2353, %v5011, %v5012
        %v5014 = vrot.slane %v4808, 2
        %v5015 = vrot.slane %v4810, 2
        %v5016 = vsel %vm2353, %v5014, %v5015
        %v5017 = vrot.slane %v4811, 2
        %v5018 = vsel %vm2353, %v5012, %v5017
        %v5019 = vrot.slane %v4812, 2
        %v5020 = vsel %vm2353, %v5015, %v5019
        %v5021 = vrot.slane %v4813, 2
        %v5022 = vrot.slane %v4815, 2
        %v5023 = vsel %vm2353, %v5021, %v5022
        %v5024 = vrot.slane %v4814, 2
        %v5025 = vrot.slane %v4816, 2
        %v5026 = vsel %vm2353, %v5024, %v5025
        %v5027 = vrot.slane %v4817, 2
        %v5028 = vsel %vm2353, %v5022, %v5027
        %v5029 = vrot.slane %v4818, 2
        %v5030 = vsel %vm2353, %v5025, %v5029
        %v5031 = vrot.slane %v4819, 2
        %v5032 = vrot.slane %v4821, 2
        %v5033 = vsel %vm2353, %v5031, %v5032
        %v5034 = vrot.slane %v4820, 2
        %v5035 = vrot.slane %v4822, 2
        %v5036 = vsel %vm2353, %v5034, %v5035
        %v5037 = vrot.slane %v4823, 2
        %v5038 = vsel %vm2353, %v5032, %v5037
        %v5039 = vrot.slane %v4824, 2
        %v5040 = vsel %vm2353, %v5035, %v5039
        %v5041 = vrot.slane %v4825, 2
        %v5042 = vrot.slane %v4827, 2
        %v5043 = vsel %vm2353, %v5041, %v5042
        %v5044 = vrot.slane %v4826, 2
        %v5045 = vrot.slane %v4828, 2
        %v5046 = vsel %vm2353, %v5044, %v5045
        %v5047 = vrot.slane %v4829, 2
        %v5048 = vsel %vm2353, %v5042, %v5047
        %v5049 = vrot.slane %v4830, 2
        %v5050 = vsel %vm2353, %v5045, %v5049
        %v5051 = vrot.slane %v4831, 2
        %v5052 = vrot.slane %v4833, 2
        %v5053 = vsel %vm2353, %v5051, %v5052
        %v5054 = vrot.slane %v4832, 2
        %v5055 = vrot.slane %v4834, 2
        %v5056 = vsel %vm2353, %v5054, %v5055
        %v5057 = vrot.slane %v4835, 2
        %v5058 = vsel %vm2353, %v5052, %v5057
        %v5059 = vrot.slane %v4836, 2
        %v5060 = vsel %vm2353, %v5055, %v5059
        %v5061 = vrot.slane %v4837, 2
        %v5062 = vrot.slane %v4839, 2
        %v5063 = vsel %vm2353, %v5061, %v5062
        %v5064 = vrot.slane %v4838, 2
        %v5065 = vrot.slane %v4840, 2
        %v5066 = vsel %vm2353, %v5064, %v5065
        %v5067 = vrot.slane %v4841, 2
        %v5068 = vsel %vm2353, %v5062, %v5067
        %v5069 = vrot.slane %v4842, 2
        %v5070 = vsel %vm2353, %v5065, %v5069
        %v5071 = vrot.slane %v4843, 2
        %v5072 = vrot.slane %v4845, 2
        %v5073 = vsel %vm2353, %v5071, %v5072
        %v5074 = vrot.slane %v4844, 2
        %v5075 = vrot.slane %v4846, 2
        %v5076 = vsel %vm2353, %v5074, %v5075
        %v5077 = vrot.slane %v4847, 2
        %v5078 = vsel %vm2353, %v5072, %v5077
        %v5079 = vrot.slane %v4848, 2
        %v5080 = vsel %vm2353, %v5075, %v5079
        %v5081 = vrot.slane %v4849, 2
        %v5082 = vrot.slane %v4851, 2
        %v5083 = vsel %vm2353, %v5081, %v5082
        %v5084 = vrot.slane %v4850, 2
        %v5085 = vrot.slane %v4852, 2
        %v5086 = vsel %vm2353, %v5084, %v5085
        %v5087 = vrot.slane %v4853, 2
        %v5088 = vsel %vm2353, %v5082, %v5087
        %v5089 = vrot.slane %v4854, 2
        %v5090 = vsel %vm2353, %v5085, %v5089
        %v5091 = vrot.slane %v4855, 2
        %v5092 = vrot.slane %v4857, 2
        %v5093 = vsel %vm2353, %v5091, %v5092
        %v5094 = vrot.slane %v4856, 2
        %v5095 = vrot.slane %v4858, 2
        %v5096 = vsel %vm2353, %v5094, %v5095
        %v5097 = vrot.slane %v4859, 2
        %v5098 = vsel %vm2353, %v5092, %v5097
        %v5099 = vrot.slane %v4860, 2
        %v5100 = vsel %vm2353, %v5095, %v5099
        %v5101 = vrot.slane %v4861, 2
        %v5102 = vrot.slane %v4863, 2
        %v5103 = vsel %vm2353, %v5101, %v5102
        %v5104 = vrot.slane %v4862, 2
        %v5105 = vrot.slane %v4864, 2
        %v5106 = vsel %vm2353, %v5104, %v5105
        %v5107 = vrot.slane %v4865, 2
        %v5108 = vsel %vm2353, %v5102, %v5107
        %v5109 = vrot.slane %v4866, 2
        %v5110 = vsel %vm2353, %v5105, %v5109
        %v5111 = vrot.slane %v4867, 2
        %v5112 = vrot.slane %v4869, 2
        %v5113 = vsel %vm2353, %v5111, %v5112
        %v5114 = vrot.slane %v4868, 2
        %v5115 = vrot.slane %v4870, 2
        %v5116 = vsel %vm2353, %v5114, %v5115
        %v5117 = vrot.slane %v4871, 2
        %v5118 = vsel %vm2353, %v5112, %v5117
        %v5119 = vrot.slane %v4872, 2
        %v5120 = vsel %vm2353, %v5115, %v5119
        %v5121 = vrot.slane %v4873, 2
        %v5122 = vrot.slane %v4875, 2
        %v5123 = vsel %vm2353, %v5121, %v5122
        %v5124 = vrot.slane %v4874, 2
        %v5125 = vrot.slane %v4876, 2
        %v5126 = vsel %vm2353, %v5124, %v5125
        %v5127 = vrot.slane %v4877, 2
        %v5128 = vsel %vm2353, %v5122, %v5127
        %v5129 = vrot.slane %v4878, 2
        %v5130 = vsel %vm2353, %v5125, %v5129
        %v5131 = vrot.slane %v4879, 2
        %v5132 = vrot.slane %v4881, 2
        %v5133 = vsel %vm2353, %v5131, %v5132
        %v5134 = vrot.slane %v4880, 2
        %v5135 = vrot.slane %v4882, 2
        %v5136 = vsel %vm2353, %v5134, %v5135
        %v5137 = vrot.slane %v4883, 2
        %v5138 = vsel %vm2353, %v5132, %v5137
        %v5139 = vrot.slane %v4884, 2
        %v5140 = vsel %vm2353, %v5135, %v5139
        %v5205 = vadd.f32 %v4650, %v4983
        %v5206 = vadd.f32 %v4651, %v4986
        %v5207 = vadd.f32 %v4652, %v4988
        %v5208 = vadd.f32 %v4653, %v4990
        %v5209 = vadd.f32 %v4654, %v4993
        %v5210 = vadd.f32 %v4655, %v4996
        %v5211 = vadd.f32 %v4656, %v4998
        %v5212 = vadd.f32 %v4657, %v5000
        %v5213 = vadd.f32 %v4658, %v5003
        %v5214 = vadd.f32 %v4659, %v5006
        %v5215 = vadd.f32 %v4660, %v5008
        %v5216 = vadd.f32 %v4661, %v5010
        %v5217 = vadd.f32 %v4662, %v5013
        %v5218 = vadd.f32 %v4663, %v5016
        %v5219 = vadd.f32 %v4664, %v5018
        %v5220 = vadd.f32 %v4665, %v5020
        %v5221 = vadd.f32 %v4666, %v5023
        %v5222 = vadd.f32 %v4667, %v5026
        %v5223 = vadd.f32 %v4668, %v5028
        %v5224 = vadd.f32 %v4669, %v5030
        %v5225 = vadd.f32 %v4670, %v5033
        %v5226 = vadd.f32 %v4671, %v5036
        %v5227 = vadd.f32 %v4672, %v5038
        %v5228 = vadd.f32 %v4673, %v5040
        %v5229 = vadd.f32 %v4674, %v5043
        %v5230 = vadd.f32 %v4675, %v5046
        %v5231 = vadd.f32 %v4676, %v5048
        %v5232 = vadd.f32 %v4677, %v5050
        %v5233 = vadd.f32 %v4678, %v5053
        %v5234 = vadd.f32 %v4679, %v5056
        %v5235 = vadd.f32 %v4680, %v5058
        %v5236 = vadd.f32 %v4681, %v5060
        %v5237 = vadd.f32 %v4682, %v5063
        %v5238 = vadd.f32 %v4683, %v5066
        %v5239 = vadd.f32 %v4684, %v5068
        %v5240 = vadd.f32 %v4685, %v5070
        %v5241 = vadd.f32 %v4686, %v5073
        %v5242 = vadd.f32 %v4687, %v5076
        %v5243 = vadd.f32 %v4688, %v5078
        %v5244 = vadd.f32 %v4689, %v5080
        %v5245 = vadd.f32 %v4690, %v5083
        %v5246 = vadd.f32 %v4691, %v5086
        %v5247 = vadd.f32 %v4692, %v5088
        %v5248 = vadd.f32 %v4693, %v5090
        %v5249 = vadd.f32 %v4694, %v5093
        %v5250 = vadd.f32 %v4695, %v5096
        %v5251 = vadd.f32 %v4696, %v5098
        %v5252 = vadd.f32 %v4697, %v5100
        %v5253 = vadd.f32 %v4698, %v5103
        %v5254 = vadd.f32 %v4699, %v5106
        %v5255 = vadd.f32 %v4700, %v5108
        %v5256 = vadd.f32 %v4701, %v5110
        %v5257 = vadd.f32 %v4702, %v5113
        %v5258 = vadd.f32 %v4703, %v5116
        %v5259 = vadd.f32 %v4704, %v5118
        %v5260 = vadd.f32 %v4705, %v5120
        %v5261 = vadd.f32 %v4706, %v5123
        %v5262 = vadd.f32 %v4707, %v5126
        %v5263 = vadd.f32 %v4708, %v5128
        %v5264 = vadd.f32 %v4709, %v5130
        %v5265 = vadd.f32 %v4710, %v5133
        %v5266 = vadd.f32 %v4711, %v5136
        %v5267 = vadd.f32 %v4712, %v5138
        %v5268 = vadd.f32 %v4713, %v5140
        %v5269 = vld [vmem:[#allocation11] sm:$0x3]
        %v5271 = vlaneseq
        %v5272 = vshrl.u32 %v5271, 7
        %v5273 = vsub.s32 0, %v5272
        %v5274 = vrot.slane %v5269, %v5273
        %v5275 = vlaneseq
        %v5276 = vshrl.u32 %v5275, 7
        %v5277 = vsub.s32 1, %v5276
        %v5278 = vrot.slane %v5269, %v5277
        %v5281 = vadd.f32 %v5205, %v5274
        %v5282 = vadd.f32 %v5206, %v5278
        %v5283 = vadd.f32 %v5207, %v5274
        %v5284 = vadd.f32 %v5208, %v5278
        %v5285 = vadd.f32 %v5209, %v5274
        %v5286 = vadd.f32 %v5210, %v5278
        %v5287 = vadd.f32 %v5211, %v5274
        %v5288 = vadd.f32 %v5212, %v5278
        %v5289 = vadd.f32 %v5213, %v5274
        %v5290 = vadd.f32 %v5214, %v5278
        %v5291 = vadd.f32 %v5215, %v5274
        %v5292 = vadd.f32 %v5216, %v5278
        %v5293 = vadd.f32 %v5217, %v5274
        %v5294 = vadd.f32 %v5218, %v5278
        %v5295 = vadd.f32 %v5219, %v5274
        %v5296 = vadd.f32 %v5220, %v5278
        %v5297 = vadd.f32 %v5221, %v5274
        %v5298 = vadd.f32 %v5222, %v5278
        %v5299 = vadd.f32 %v5223, %v5274
        %v5300 = vadd.f32 %v5224, %v5278
        %v5301 = vadd.f32 %v5225, %v5274
        %v5302 = vadd.f32 %v5226, %v5278
        %v5303 = vadd.f32 %v5227, %v5274
        %v5304 = vadd.f32 %v5228, %v5278
        %v5305 = vadd.f32 %v5229, %v5274
        %v5306 = vadd.f32 %v5230, %v5278
        %v5307 = vadd.f32 %v5231, %v5274
        %v5308 = vadd.f32 %v5232, %v5278
        %v5309 = vadd.f32 %v5233, %v5274
        %v5310 = vadd.f32 %v5234, %v5278
        %v5311 = vadd.f32 %v5235, %v5274
        %v5312 = vadd.f32 %v5236, %v5278
        %v5313 = vadd.f32 %v5237, %v5274
        %v5314 = vadd.f32 %v5238, %v5278
        %v5315 = vadd.f32 %v5239, %v5274
        %v5316 = vadd.f32 %v5240, %v5278
        %v5317 = vadd.f32 %v5241, %v5274
        %v5318 = vadd.f32 %v5242, %v5278
        %v5319 = vadd.f32 %v5243, %v5274
        %v5320 = vadd.f32 %v5244, %v5278
        %v5321 = vadd.f32 %v5245, %v5274
        %v5322 = vadd.f32 %v5246, %v5278
        %v5323 = vadd.f32 %v5247, %v5274
        %v5324 = vadd.f32 %v5248, %v5278
        %v5325 = vadd.f32 %v5249, %v5274
        %v5326 = vadd.f32 %v5250, %v5278
        %v5327 = vadd.f32 %v5251, %v5274
        %v5328 = vadd.f32 %v5252, %v5278
        %v5329 = vadd.f32 %v5253, %v5274
        %v5330 = vadd.f32 %v5254, %v5278
        %v5331 = vadd.f32 %v5255, %v5274
        %v5332 = vadd.f32 %v5256, %v5278
        %v5333 = vadd.f32 %v5257, %v5274
        %v5334 = vadd.f32 %v5258, %v5278
        %v5335 = vadd.f32 %v5259, %v5274
        %v5336 = vadd.f32 %v5260, %v5278
        %v5337 = vadd.f32 %v5261, %v5274
        %v5338 = vadd.f32 %v5262, %v5278
        %v5339 = vadd.f32 %v5263, %v5274
        %v5340 = vadd.f32 %v5264, %v5278
        %v5341 = vadd.f32 %v5265, %v5274
        %v5342 = vadd.f32 %v5266, %v5278
        %v5343 = vadd.f32 %v5267, %v5274
        %v5344 = vadd.f32 %v5268, %v5278
        %v5345 = vmax.f32 %v5281, 0.0
        %v5346 = vmax.f32 %v5282, 0.0
        %v5347 = vmax.f32 %v5283, 0.0
        %v5348 = vmax.f32 %v5284, 0.0
        %v5349 = vmax.f32 %v5285, 0.0
        %v5350 = vmax.f32 %v5286, 0.0
        %v5351 = vmax.f32 %v5287, 0.0
        %v5352 = vmax.f32 %v5288, 0.0
        %v5353 = vmax.f32 %v5289, 0.0
        %v5354 = vmax.f32 %v5290, 0.0
        %v5355 = vmax.f32 %v5291, 0.0
        %v5356 = vmax.f32 %v5292, 0.0
        %v5357 = vmax.f32 %v5293, 0.0
        %v5358 = vmax.f32 %v5294, 0.0
        %v5359 = vmax.f32 %v5295, 0.0
        %v5360 = vmax.f32 %v5296, 0.0
        %v5361 = vmax.f32 %v5297, 0.0
        %v5362 = vmax.f32 %v5298, 0.0
        %v5363 = vmax.f32 %v5299, 0.0
        %v5364 = vmax.f32 %v5300, 0.0
        %v5365 = vmax.f32 %v5301, 0.0
        %v5366 = vmax.f32 %v5302, 0.0
        %v5367 = vmax.f32 %v5303, 0.0
        %v5368 = vmax.f32 %v5304, 0.0
        %v5369 = vmax.f32 %v5305, 0.0
        %v5370 = vmax.f32 %v5306, 0.0
        %v5371 = vmax.f32 %v5307, 0.0
        %v5372 = vmax.f32 %v5308, 0.0
        %v5373 = vmax.f32 %v5309, 0.0
        %v5374 = vmax.f32 %v5310, 0.0
        %v5375 = vmax.f32 %v5311, 0.0
        %v5376 = vmax.f32 %v5312, 0.0
        %v5377 = vmax.f32 %v5313, 0.0
        %v5378 = vmax.f32 %v5314, 0.0
        %v5379 = vmax.f32 %v5315, 0.0
        %v5380 = vmax.f32 %v5316, 0.0
        %v5381 = vmax.f32 %v5317, 0.0
        %v5382 = vmax.f32 %v5318, 0.0
        %v5383 = vmax.f32 %v5319, 0.0
        %v5384 = vmax.f32 %v5320, 0.0
        %v5385 = vmax.f32 %v5321, 0.0
        %v5386 = vmax.f32 %v5322, 0.0
        %v5387 = vmax.f32 %v5323, 0.0
        %v5388 = vmax.f32 %v5324, 0.0
        %v5389 = vmax.f32 %v5325, 0.0
        %v5390 = vmax.f32 %v5326, 0.0
        %v5391 = vmax.f32 %v5327, 0.0
        %v5392 = vmax.f32 %v5328, 0.0
        %v5393 = vmax.f32 %v5329, 0.0
        %v5394 = vmax.f32 %v5330, 0.0
        %v5395 = vmax.f32 %v5331, 0.0
        %v5396 = vmax.f32 %v5332, 0.0
        %v5397 = vmax.f32 %v5333, 0.0
        %v5398 = vmax.f32 %v5334, 0.0
        %v5399 = vmax.f32 %v5335, 0.0
        %v5400 = vmax.f32 %v5336, 0.0
        %v5401 = vmax.f32 %v5337, 0.0
        %v5402 = vmax.f32 %v5338, 0.0
        %v5403 = vmax.f32 %v5339, 0.0
        %v5404 = vmax.f32 %v5340, 0.0
        %v5405 = vmax.f32 %v5341, 0.0
        %v5406 = vmax.f32 %v5342, 0.0
        %v5407 = vmax.f32 %v5343, 0.0
        %v5408 = vmax.f32 %v5344, 0.0
        %v5409 = vmin.f32 %v5345, 6.0
        %v5410 = vmin.f32 %v5346, 6.0
        %v5411 = vmin.f32 %v5347, 6.0
        %v5412 = vmin.f32 %v5348, 6.0
        %v5413 = vmin.f32 %v5349, 6.0
        %v5414 = vmin.f32 %v5350, 6.0
        %v5415 = vmin.f32 %v5351, 6.0
        %v5416 = vmin.f32 %v5352, 6.0
        %v5417 = vmin.f32 %v5353, 6.0
        %v5418 = vmin.f32 %v5354, 6.0
        %v5419 = vmin.f32 %v5355, 6.0
        %v5420 = vmin.f32 %v5356, 6.0
        %v5421 = vmin.f32 %v5357, 6.0
        %v5422 = vmin.f32 %v5358, 6.0
        %v5423 = vmin.f32 %v5359, 6.0
        %v5424 = vmin.f32 %v5360, 6.0
        %v5425 = vmin.f32 %v5361, 6.0
        %v5426 = vmin.f32 %v5362, 6.0
        %v5427 = vmin.f32 %v5363, 6.0
        %v5428 = vmin.f32 %v5364, 6.0
        %v5429 = vmin.f32 %v5365, 6.0
        %v5430 = vmin.f32 %v5366, 6.0
        %v5431 = vmin.f32 %v5367, 6.0
        %v5432 = vmin.f32 %v5368, 6.0
        %v5433 = vmin.f32 %v5369, 6.0
        %v5434 = vmin.f32 %v5370, 6.0
        %v5435 = vmin.f32 %v5371, 6.0
        %v5436 = vmin.f32 %v5372, 6.0
        %v5437 = vmin.f32 %v5373, 6.0
        %v5438 = vmin.f32 %v5374, 6.0
        %v5439 = vmin.f32 %v5375, 6.0
        %v5440 = vmin.f32 %v5376, 6.0
        %v5441 = vmin.f32 %v5377, 6.0
        %v5442 = vmin.f32 %v5378, 6.0
        %v5443 = vmin.f32 %v5379, 6.0
        %v5444 = vmin.f32 %v5380, 6.0
        %v5445 = vmin.f32 %v5381, 6.0
        %v5446 = vmin.f32 %v5382, 6.0
        %v5447 = vmin.f32 %v5383, 6.0
        %v5448 = vmin.f32 %v5384, 6.0
        %v5449 = vmin.f32 %v5385, 6.0
        %v5450 = vmin.f32 %v5386, 6.0
        %v5451 = vmin.f32 %v5387, 6.0
        %v5452 = vmin.f32 %v5388, 6.0
        %v5453 = vmin.f32 %v5389, 6.0
        %v5454 = vmin.f32 %v5390, 6.0
        %v5455 = vmin.f32 %v5391, 6.0
        %v5456 = vmin.f32 %v5392, 6.0
        %v5457 = vmin.f32 %v5393, 6.0
        %v5458 = vmin.f32 %v5394, 6.0
        %v5459 = vmin.f32 %v5395, 6.0
        %v5460 = vmin.f32 %v5396, 6.0
        %v5461 = vmin.f32 %v5397, 6.0
        %v5462 = vmin.f32 %v5398, 6.0
        %v5463 = vmin.f32 %v5399, 6.0
        %v5464 = vmin.f32 %v5400, 6.0
        %v5465 = vmin.f32 %v5401, 6.0
        %v5466 = vmin.f32 %v5402, 6.0
        %v5467 = vmin.f32 %v5403, 6.0
        %v5468 = vmin.f32 %v5404, 6.0
        %v5469 = vmin.f32 %v5405, 6.0
        %v5470 = vmin.f32 %v5406, 6.0
        %v5471 = vmin.f32 %v5407, 6.0
        %v5472 = vmin.f32 %v5408, 6.0
        %v5473 = vpack.c.bf16 %v5411, %v5409
        %v5474 = vpack.c.bf16 %v5412, %v5410
        %v5475 = vpack.c.bf16 %v5415, %v5413
        %v5476 = vpack.c.bf16 %v5416, %v5414
        %v5477 = vpack.c.bf16 %v5419, %v5417
        %v5478 = vpack.c.bf16 %v5420, %v5418
        %v5479 = vpack.c.bf16 %v5423, %v5421
        %v5480 = vpack.c.bf16 %v5424, %v5422
        %v5481 = vpack.c.bf16 %v5427, %v5425
        %v5482 = vpack.c.bf16 %v5428, %v5426
        %v5483 = vpack.c.bf16 %v5431, %v5429
        %v5484 = vpack.c.bf16 %v5432, %v5430
        %v5485 = vpack.c.bf16 %v5435, %v5433
        %v5486 = vpack.c.bf16 %v5436, %v5434
        %v5487 = vpack.c.bf16 %v5439, %v5437
        %v5488 = vpack.c.bf16 %v5440, %v5438
        %v5489 = vpack.c.bf16 %v5443, %v5441
        %v5490 = vpack.c.bf16 %v5444, %v5442
        %v5491 = vpack.c.bf16 %v5447, %v5445
        %v5492 = vpack.c.bf16 %v5448, %v5446
        %v5493 = vpack.c.bf16 %v5451, %v5449
        %v5494 = vpack.c.bf16 %v5452, %v5450
        %v5495 = vpack.c.bf16 %v5455, %v5453
        %v5496 = vpack.c.bf16 %v5456, %v5454
        %v5497 = vpack.c.bf16 %v5459, %v5457
        %v5498 = vpack.c.bf16 %v5460, %v5458
        %v5499 = vpack.c.bf16 %v5463, %v5461
        %v5500 = vpack.c.bf16 %v5464, %v5462
        %v5501 = vpack.c.bf16 %v5467, %v5465
        %v5502 = vpack.c.bf16 %v5468, %v5466
        %v5503 = vpack.c.bf16 %v5471, %v5469
        %v5504 = vpack.c.bf16 %v5472, %v5470
        %v5505 = vld [vmem:[#allocation12] sm:$0xf]
        %v5506 = vld [vmem:[#allocation12 + $0x4] sm:$0xf]
        %v5507 = vld [vmem:[#allocation12 + $0x8] sm:$0xf]
        %v5508 = vld [vmem:[#allocation12 + $0xc] sm:$0xf]
        %v5509 = vld [vmem:[#allocation12 + $0x10] sm:$0xf]
        %v5510 = vld [vmem:[#allocation12 + $0x14] sm:$0xf]
        %v5511 = vld [vmem:[#allocation12 + $0x18] sm:$0xf]
        %v5512 = vld [vmem:[#allocation12 + $0x1c] sm:$0xf]
        %v5513 = vld [vmem:[#allocation12 + $0x20] sm:$0xf]
        %v5514 = vld [vmem:[#allocation12 + $0x24] sm:$0xf]
        %v5515 = vld [vmem:[#allocation12 + $0x28] sm:$0xf]
        %v5516 = vld [vmem:[#allocation12 + $0x2c] sm:$0xf]
        %v5517 = vld [vmem:[#allocation12 + $0x30] sm:$0xf]
        %v5518 = vld [vmem:[#allocation12 + $0x34] sm:$0xf]
        %v5519 = vld [vmem:[#allocation12 + $0x38] sm:$0xf]
        %v5520 = vld [vmem:[#allocation12 + $0x3c] sm:$0xf]
        %v5521 = vld [vmem:[#allocation12 + $0x40] sm:$0xf]
        %v5522 = vld [vmem:[#allocation12 + $0x44] sm:$0xf]
        %v5523 = vld [vmem:[#allocation12 + $0x48] sm:$0xf]
        %v5524 = vld [vmem:[#allocation12 + $0x4c] sm:$0xf]
        %v5525 = vld [vmem:[#allocation12 + $0x50] sm:$0xf]
        %v5526 = vld [vmem:[#allocation12 + $0x54] sm:$0xf]
        %v5527 = vld [vmem:[#allocation12 + $0x58] sm:$0xf]
        %v5528 = vld [vmem:[#allocation12 + $0x5c] sm:$0xf]
        %v5529 = vld [vmem:[#allocation12 + $0x60] sm:$0xf]
        %v5530 = vld [vmem:[#allocation12 + $0x64] sm:$0xf]
        %v5531 = vld [vmem:[#allocation12 + $0x68] sm:$0xf]
        %v5532 = vld [vmem:[#allocation12 + $0x6c] sm:$0xf]
        %v5533 = vld [vmem:[#allocation12 + $0x70] sm:$0xf]
        %v5534 = vld [vmem:[#allocation12 + $0x74] sm:$0xf]
        %v5535 = vld [vmem:[#allocation12 + $0x78] sm:$0xf]
        %v5536 = vld [vmem:[#allocation12 + $0x7c] sm:$0xf]
        %v5537 = vld [vmem:[#allocation14] sm:$0x1]
        %v5539 = vlaneseq
        %v5540 = vshrl.u32 %v5539, 7
        %v5541 = vsub.s32 0, %v5540
        %v5542 = vrot.slane %v5537, %v5541
        %v5576 = vunpack.c.l.b16 %v5505
        %v5577 = vunpack.c.l.b16 %v5506
        %v5578 = vunpack.c.l.b16 %v5507
        %v5579 = vunpack.c.l.b16 %v5508
        %v5580 = vunpack.c.l.b16 %v5509
        %v5581 = vunpack.c.l.b16 %v5510
        %v5582 = vunpack.c.l.b16 %v5511
        %v5583 = vunpack.c.l.b16 %v5512
        %v5584 = vunpack.c.l.b16 %v5513
        %v5585 = vunpack.c.l.b16 %v5514
        %v5586 = vunpack.c.l.b16 %v5515
        %v5587 = vunpack.c.l.b16 %v5516
        %v5588 = vunpack.c.l.b16 %v5517
        %v5589 = vunpack.c.l.b16 %v5518
        %v5590 = vunpack.c.l.b16 %v5519
        %v5591 = vunpack.c.l.b16 %v5520
        %v5592 = vunpack.c.l.b16 %v5521
        %v5593 = vunpack.c.l.b16 %v5522
        %v5594 = vunpack.c.l.b16 %v5523
        %v5595 = vunpack.c.l.b16 %v5524
        %v5596 = vunpack.c.l.b16 %v5525
        %v5597 = vunpack.c.l.b16 %v5526
        %v5598 = vunpack.c.l.b16 %v5527
        %v5599 = vunpack.c.l.b16 %v5528
        %v5600 = vunpack.c.l.b16 %v5529
        %v5601 = vunpack.c.l.b16 %v5530
        %v5602 = vunpack.c.l.b16 %v5531
        %v5603 = vunpack.c.l.b16 %v5532
        %v5604 = vunpack.c.l.b16 %v5533
        %v5605 = vunpack.c.l.b16 %v5534
        %v5606 = vunpack.c.l.b16 %v5535
        %v5607 = vunpack.c.l.b16 %v5536
        %v5608 = vpack.c.b16 %v5577, %v5576
        %v5609 = vpack.c.b16 %v5579, %v5578
        %v5610 = vpack.c.b16 %v5581, %v5580
        %v5611 = vpack.c.b16 %v5583, %v5582
        %v5612 = vpack.c.b16 %v5585, %v5584
        %v5613 = vpack.c.b16 %v5587, %v5586
        %v5614 = vpack.c.b16 %v5589, %v5588
        %v5615 = vpack.c.b16 %v5591, %v5590
        %v5616 = vpack.c.b16 %v5593, %v5592
        %v5617 = vpack.c.b16 %v5595, %v5594
        %v5618 = vpack.c.b16 %v5597, %v5596
        %v5619 = vpack.c.b16 %v5599, %v5598
        %v5620 = vpack.c.b16 %v5601, %v5600
        %v5621 = vpack.c.b16 %v5603, %v5602
        %v5622 = vpack.c.b16 %v5605, %v5604
        %v5623 = vpack.c.b16 %v5607, %v5606
        %5640 = vmatprep.subr.bf16.mxu0 0
        %5641 = vmatpush1.bf16.msra.mxu0 %v5608
        %5642 = vmatprep.subr.bf16.mxu0 0
        %5643 = vmatpush1.bf16.msra.mxu0 %v5609
        %5644 = vmatprep.subr.bf16.mxu0 0
        %5645 = vmatpush1.bf16.msra.mxu0 %v5610
        %5646 = vmatprep.subr.bf16.mxu0 0
        %5647 = vmatpush1.bf16.msra.mxu0 %v5611
        %5648 = vmatprep.subr.bf16.mxu0 0
        %5649 = vmatpush1.bf16.msra.mxu0 %v5612
        %5650 = vmatprep.subr.bf16.mxu0 0
        %5651 = vmatpush1.bf16.msra.mxu0 %v5613
        %5652 = vmatprep.subr.bf16.mxu0 0
        %5653 = vmatpush1.bf16.msra.mxu0 %v5614
        %5654 = vmatprep.subr.bf16.mxu0 0
        %5655 = vmatpush1.bf16.msra.mxu0 %v5615
        %5656 = vmatprep.subr.bf16.mxu0 0
        %5657 = vmatpush1.bf16.msra.mxu0 %v5616
        %5658 = vmatprep.subr.bf16.mxu0 0
        %5659 = vmatpush1.bf16.msra.mxu0 %v5617
        %5660 = vmatprep.subr.bf16.mxu0 0
        %5661 = vmatpush1.bf16.msra.mxu0 %v5618
        %5662 = vmatprep.subr.bf16.mxu0 0
        %5663 = vmatpush1.bf16.msra.mxu0 %v5619
        %5664 = vmatprep.subr.bf16.mxu0 0
        %5665 = vmatpush1.bf16.msra.mxu0 %v5620
        %5666 = vmatprep.subr.bf16.mxu0 0
        %5667 = vmatpush1.bf16.msra.mxu0 %v5621
        %5668 = vmatprep.subr.bf16.mxu0 0
        %5669 = vmatpush1.bf16.msra.mxu0 %v5622
        %5670 = vmatprep.subr.bf16.mxu0 0
        %5671 = vmatpush1.bf16.msra.mxu0 %v5623
        %5672 = vmatprep.mubr.bf16.mxu0 %v5474
        %5673 = vmatmul.mubr.bf16.gmra.mrb[0].mxu0 %v5473
        %v5674 = vpop.f32.mrb[0].mxu0
        %v5675 = vadd.f32 %v5542, %v5674
        %v5676 = vpop.f32.mrb[0].mxu0
        %v5677 = vpop.f32.mrb[0].mxu0
        %v5678 = vadd.f32 %v5542, %v5677
        %v5679 = vpop.f32.mrb[0].mxu0
        %5680 = vmatprep.mubr.bf16.mxu0 %v5476
        %5681 = vmatmul.mubr.bf16.gmra.mrb[0].mxu0 %v5475
        %v5682 = vpop.f32.mrb[0].mxu0
        %v5683 = vadd.f32 %v5542, %v5682
        %v5684 = vpop.f32.mrb[0].mxu0
        %v5685 = vpop.f32.mrb[0].mxu0
        %v5686 = vadd.f32 %v5542, %v5685
        %v5687 = vpop.f32.mrb[0].mxu0
        %5688 = vmatprep.mubr.bf16.mxu0 %v5478
        %5689 = vmatmul.mubr.bf16.gmra.mrb[0].mxu0 %v5477
        %v5690 = vpop.f32.mrb[0].mxu0
        %v5691 = vadd.f32 %v5542, %v5690
        %v5692 = vpop.f32.mrb[0].mxu0
        %v5693 = vpop.f32.mrb[0].mxu0
        %v5694 = vadd.f32 %v5542, %v5693
        %v5695 = vpop.f32.mrb[0].mxu0
        %5696 = vmatprep.mubr.bf16.mxu0 %v5480
        %5697 = vmatmul.mubr.bf16.gmra.mrb[0].mxu0 %v5479
        %v5698 = vpop.f32.mrb[0].mxu0
        %v5699 = vadd.f32 %v5542, %v5698
        %v5700 = vpop.f32.mrb[0].mxu0
        %v5701 = vpop.f32.mrb[0].mxu0
        %v5702 = vadd.f32 %v5542, %v5701
        %v5703 = vpop.f32.mrb[0].mxu0
        %5704 = vmatprep.mubr.bf16.mxu0 %v5482
        %5705 = vmatmul.mubr.bf16.gmra.mrb[0].mxu0 %v5481
        %v5706 = vpop.f32.mrb[0].mxu0
        %v5707 = vadd.f32 %v5542, %v5706
        %v5708 = vpop.f32.mrb[0].mxu0
        %v5709 = vpop.f32.mrb[0].mxu0
        %v5710 = vadd.f32 %v5542, %v5709
        %v5711 = vpop.f32.mrb[0].mxu0
        %5712 = vmatprep.mubr.bf16.mxu0 %v5484
        %5713 = vmatmul.mubr.bf16.gmra.mrb[0].mxu0 %v5483
        %v5714 = vpop.f32.mrb[0].mxu0
        %v5715 = vadd.f32 %v5542, %v5714
        %v5716 = vpop.f32.mrb[0].mxu0
        %v5717 = vpop.f32.mrb[0].mxu0
        %v5718 = vadd.f32 %v5542, %v5717
        %v5719 = vpop.f32.mrb[0].mxu0
        %5720 = vmatprep.mubr.bf16.mxu0 %v5486
        %5721 = vmatmul.mubr.bf16.gmra.mrb[0].mxu0 %v5485
        %v5722 = vpop.f32.mrb[0].mxu0
        %v5723 = vadd.f32 %v5542, %v5722
        %v5724 = vpop.f32.mrb[0].mxu0
        %v5725 = vpop.f32.mrb[0].mxu0
        %v5726 = vadd.f32 %v5542, %v5725
        %v5727 = vpop.f32.mrb[0].mxu0
        %5728 = vmatprep.mubr.bf16.mxu0 %v5488
        %5729 = vmatmul.mubr.bf16.gmra.mrb[0].mxu0 %v5487
        %v5730 = vpop.f32.mrb[0].mxu0
        %v5731 = vadd.f32 %v5542, %v5730
        %v5732 = vpop.f32.mrb[0].mxu0
        %v5733 = vpop.f32.mrb[0].mxu0
        %v5734 = vadd.f32 %v5542, %v5733
        %v5735 = vpop.f32.mrb[0].mxu0
        %5736 = vmatprep.mubr.bf16.mxu0 %v5490
        %5737 = vmatmul.mubr.bf16.gmra.mrb[0].mxu0 %v5489
        %v5738 = vpop.f32.mrb[0].mxu0
        %v5739 = vadd.f32 %v5542, %v5738
        %v5740 = vpop.f32.mrb[0].mxu0
        %v5741 = vpop.f32.mrb[0].mxu0
        %v5742 = vadd.f32 %v5542, %v5741
        %v5743 = vpop.f32.mrb[0].mxu0
        %5744 = vmatprep.mubr.bf16.mxu0 %v5492
        %5745 = vmatmul.mubr.bf16.gmra.mrb[0].mxu0 %v5491
        %v5746 = vpop.f32.mrb[0].mxu0
        %v5747 = vadd.f32 %v5542, %v5746
        %v5748 = vpop.f32.mrb[0].mxu0
        %v5749 = vpop.f32.mrb[0].mxu0
        %v5750 = vadd.f32 %v5542, %v5749
        %v5751 = vpop.f32.mrb[0].mxu0
        %5752 = vmatprep.mubr.bf16.mxu0 %v5494
        %5753 = vmatmul.mubr.bf16.gmra.mrb[0].mxu0 %v5493
        %v5754 = vpop.f32.mrb[0].mxu0
        %v5755 = vadd.f32 %v5542, %v5754
        %v5756 = vpop.f32.mrb[0].mxu0
        %v5757 = vpop.f32.mrb[0].mxu0
        %v5758 = vadd.f32 %v5542, %v5757
        %v5759 = vpop.f32.mrb[0].mxu0
        %5760 = vmatprep.mubr.bf16.mxu0 %v5496
        %5761 = vmatmul.mubr.bf16.gmra.mrb[0].mxu0 %v5495
        %v5762 = vpop.f32.mrb[0].mxu0
        %v5763 = vadd.f32 %v5542, %v5762
        %v5764 = vpop.f32.mrb[0].mxu0
        %v5765 = vpop.f32.mrb[0].mxu0
        %v5766 = vadd.f32 %v5542, %v5765
        %v5767 = vpop.f32.mrb[0].mxu0
        %5768 = vmatprep.mubr.bf16.mxu0 %v5498
        %5769 = vmatmul.mubr.bf16.gmra.mrb[0].mxu0 %v5497
        %v5770 = vpop.f32.mrb[0].mxu0
        %v5771 = vadd.f32 %v5542, %v5770
        %v5772 = vpop.f32.mrb[0].mxu0
        %v5773 = vpop.f32.mrb[0].mxu0
        %v5774 = vadd.f32 %v5542, %v5773
        %v5775 = vpop.f32.mrb[0].mxu0
        %5776 = vmatprep.mubr.bf16.mxu0 %v5500
        %5777 = vmatmul.mubr.bf16.gmra.mrb[0].mxu0 %v5499
        %v5778 = vpop.f32.mrb[0].mxu0
        %v5779 = vadd.f32 %v5542, %v5778
        %v5780 = vpop.f32.mrb[0].mxu0
        %v5781 = vpop.f32.mrb[0].mxu0
        %v5782 = vadd.f32 %v5542, %v5781
        %v5783 = vpop.f32.mrb[0].mxu0
        %5784 = vmatprep.mubr.bf16.mxu0 %v5502
        %5785 = vmatmul.mubr.bf16.gmra.mrb[0].mxu0 %v5501
        %v5786 = vpop.f32.mrb[0].mxu0
        %v5787 = vadd.f32 %v5542, %v5786
        %v5788 = vpop.f32.mrb[0].mxu0
        %v5789 = vpop.f32.mrb[0].mxu0
        %v5790 = vadd.f32 %v5542, %v5789
        %v5791 = vpop.f32.mrb[0].mxu0
        %5792 = vmatprep.mubr.bf16.mxu0 %v5504
        %5793 = vmatmul.mubr.bf16.gmra.mrb[0].mxu0 %v5503
        %v5794 = vpop.f32.mrb[0].mxu0
        %v5795 = vadd.f32 %v5542, %v5794
        %v5796 = vpop.f32.mrb[0].mxu0
        %v5797 = vpop.f32.mrb[0].mxu0
        %v5798 = vadd.f32 %v5542, %v5797
        %v5799 = vpop.f32.mrb[0].mxu0
        %5800 = vdwg.mxu0
        %v5801 = vadd.f32 %v5675, %v379
        %v5802 = vadd.f32 %v5678, %v380
        %v5803 = vadd.f32 %v5683, %v381
        %v5804 = vadd.f32 %v5686, %v382
        %v5805 = vadd.f32 %v5691, %v383
        %v5806 = vadd.f32 %v5694, %v384
        %v5807 = vadd.f32 %v5699, %v385
        %v5808 = vadd.f32 %v5702, %v386
        %v5809 = vadd.f32 %v5707, %v387
        %v5810 = vadd.f32 %v5710, %v388
        %v5811 = vadd.f32 %v5715, %v389
        %v5812 = vadd.f32 %v5718, %v390
        %v5813 = vadd.f32 %v5723, %v391
        %v5814 = vadd.f32 %v5726, %v392
        %v5815 = vadd.f32 %v5731, %v393
        %v5816 = vadd.f32 %v5734, %v394
        %v5817 = vadd.f32 %v5739, %v395
        %v5818 = vadd.f32 %v5742, %v396
        %v5819 = vadd.f32 %v5747, %v397
        %v5820 = vadd.f32 %v5750, %v398
        %v5821 = vadd.f32 %v5755, %v399
        %v5822 = vadd.f32 %v5758, %v400
        %v5823 = vadd.f32 %v5763, %v401
        %v5824 = vadd.f32 %v5766, %v402
        %v5825 = vadd.f32 %v5771, %v403
        %v5826 = vadd.f32 %v5774, %v404
        %v5827 = vadd.f32 %v5779, %v405
        %v5828 = vadd.f32 %v5782, %v406
        %v5829 = vadd.f32 %v5787, %v407
        %v5830 = vadd.f32 %v5790, %v408
        %v5831 = vadd.f32 %v5795, %v409
        %v5832 = vadd.f32 %v5798, %v410
        %5833 = vst [vmem:[%s377] sm:$0xff] %v5801
        %5834 = vst [vmem:[%s377 + $0x8] sm:$0xff] %v5802
        %5835 = vst [vmem:[%s377 + $0x10] sm:$0xff] %v5803
        %5836 = vst [vmem:[%s377 + $0x18] sm:$0xff] %v5804
        %5837 = vst [vmem:[%s377 + $0x20] sm:$0xff] %v5805
        %5838 = vst [vmem:[%s377 + $0x28] sm:$0xff] %v5806
        %5839 = vst [vmem:[%s377 + $0x30] sm:$0xff] %v5807
        %5840 = vst [vmem:[%s377 + $0x38] sm:$0xff] %v5808
        %5841 = vst [vmem:[%s377 + $0x40] sm:$0xff] %v5809
        %5842 = vst [vmem:[%s377 + $0x48] sm:$0xff] %v5810
        %5843 = vst [vmem:[%s377 + $0x50] sm:$0xff] %v5811
        %5844 = vst [vmem:[%s377 + $0x58] sm:$0xff] %v5812
        %5845 = vst [vmem:[%s377 + $0x60] sm:$0xff] %v5813
        %5846 = vst [vmem:[%s377 + $0x68] sm:$0xff] %v5814
        %5847 = vst [vmem:[%s377 + $0x70] sm:$0xff] %v5815
        %5848 = vst [vmem:[%s377 + $0x78] sm:$0xff] %v5816
        %5849 = vst [vmem:[%s377 + $0x80] sm:$0xff] %v5817
        %5850 = vst [vmem:[%s377 + $0x88] sm:$0xff] %v5818
        %5851 = vst [vmem:[%s377 + $0x90] sm:$0xff] %v5819
        %5852 = vst [vmem:[%s377 + $0x98] sm:$0xff] %v5820
        %5853 = vst [vmem:[%s377 + $0xa0] sm:$0xff] %v5821
        %5854 = vst [vmem:[%s377 + $0xa8] sm:$0xff] %v5822
        %5855 = vst [vmem:[%s377 + $0xb0] sm:$0xff] %v5823
        %5856 = vst [vmem:[%s377 + $0xb8] sm:$0xff] %v5824
        %5857 = vst [vmem:[%s377 + $0xc0] sm:$0xff] %v5825
        %5858 = vst [vmem:[%s377 + $0xc8] sm:$0xff] %v5826
        %5859 = vst [vmem:[%s377 + $0xd0] sm:$0xff] %v5827
        %5860 = vst [vmem:[%s377 + $0xd8] sm:$0xff] %v5828
        %5861 = vst [vmem:[%s377 + $0xe0] sm:$0xff] %v5829
        %5862 = vst [vmem:[%s377 + $0xe8] sm:$0xff] %v5830
        %5863 = vst [vmem:[%s377 + $0xf0] sm:$0xff] %v5831
        %5864 = vst [vmem:[%s377 + $0xf8] sm:$0xff] %v5832
        %s5865 = sand.u32 %s187, 1
        %s5866 = scalar_lea.sflag [#allocation5], %s5865
        %s5867 = sand.u32 %s187, 1
        %s5868 = smul.addr %s5867, 256
        %s5869 = scalar_lea.vmem [#allocation15], %s5868
        // Predicated region
        $region77: #{inverted_residual_forward.1} parent=47 // pred_check
          %p5870 = pneg %p197
        $region78: #{inverted_residual_forward.1} parent=47 // pred_check_branch
          %5872 = sbr.rel (%p5870) target = $region80
        $region79: #{inverted_residual_forward.1} parent=47 // pred_region
          %s5874 = ssub.s32 4096, 4096
          %5875 = vsyncadd %s5866, %s5874
          %s5876 = smul.addr %s27, 32
          %s5877 = smul.addr %s5876, 128
          %s5878 = scalar_lea.hbm %s7, %s5877
          %s5879 = sshll.u32 %s5869, 4
          %s5880 = int_to_ptr.vmem [resolvable:$true] %s5879
          %5885 = dma.vmem_to_hbm [thread:$0]  %s5880, 4096, %s5878, %s5866, 128, 128, 8
        $region80: #{inverted_residual_forward.1} parent=47 // pred_fallthru
          _
      $region48: #{inverted_residual_forward.1} parent=5 // pred_fallthru
        _
      %p5886 = scmp.le.s32.totalorder 2, %s22
      // Predicated region
      $region81: #{inverted_residual_forward.1} parent=5 // pred_check
        %p5887 = pneg %p5886
      $region82: #{inverted_residual_forward.1} parent=5 // pred_check_branch
        %5889 = sbr.rel (%p5887) target = $region84
      $region83: #{inverted_residual_forward.1} parent=5 // pred_region
        %s5890 = ssub.s32 %s22, 2
        // Predicated region
        $region85: #{inverted_residual_forward.1} parent=83 // pred_check
          %p5891 = pneg %p203
        $region86: #{inverted_residual_forward.1} parent=83 // pred_check_branch
          %5893 = sbr.rel (%p5891) target = $region88
        $region87: #{inverted_residual_forward.1} parent=83 // pred_region
          %s5894 = sand.u32 %s188, 1
          %s5895 = scalar_lea.sflag [#allocation5], %s5894
          %s5896 = sand.u32 %s188, 1
          %s5897 = smul.addr %s5896, 256
          %s5898 = scalar_lea.vmem [#allocation15], %s5897
          %5899 = dma.done %s5895, 4096
        $region88: #{inverted_residual_forward.1} parent=83 // pred_fallthru
          _
      $region84: #{inverted_residual_forward.1} parent=5 // pred_fallthru
        _
    $region6: #{inverted_residual_forward.1} parent=1 // loop_footer
      %s26 = sadd.s32 1, %s22
    $region7: #{inverted_residual_forward.1} parent=1 // loop_footer_branch
      %21 = sbr.rel target = $region3
    $region8: #{inverted_residual_forward.1} parent=1 // loop_exit
      _
    %5900 = vsyncpa [#allocation4], 1
    %s5901 = scalar_lea.sflag [#allocation4], 1
    %5902 = vsyncpa %s5901, 1
    %5903 = vsyncpa [#allocation7], 1
    %5904 = vsyncpa [#allocation10], 1
    %5905 = vsyncpa [#allocation13], 1
    %5906 = vsyncpa [#allocation5], 1
    %s5907 = scalar_lea.sflag [#allocation5], 1
    %5908 = vsyncpa %s5907, 1

</llo_original>
